<compile_context>
chip_gen: v5e
topology: v5e:2x2
jax: 0.10.0
libtpu: 0.0.40
codegen_flags: <defaults>
</compile_context>

<pallas_src>
import functools

import jax
import jax.numpy as jnp
from jax.experimental import pallas as pl
from jax.experimental.pallas import tpu as pltpu

LANE = 128
_VMEM_LIMIT = 48 * 1024 * 1024          # <= v7x physical 64 MiB, with headroom
_H_RESIDENT_BUDGET = 16 * 1024 * 1024   # hold full H in VMEM if 2x copy fits
_LIN_VMEM_BUDGET = 24 * 1024 * 1024     # working-set cap for the linear kernels


def _round_up(x, m):
    return ((x + m - 1) // m) * m


def _pick_tile(n_pad, *, min_blocks=1, candidates=(1024, 512, 256, 128)):
    for t in candidates:
        if n_pad % t == 0 and n_pad // t >= min_blocks:
            return t
    return 128


def _pick_linear_tile(n_pad, f_in_pad, f_out_pad, x_bytes, out_bytes,
                      budget=_LIN_VMEM_BUDGET):
    """Largest row tile whose double-buffered working set fits the budget."""
    for t in (1024, 512, 256, 128):
        if n_pad % t != 0:
            continue
        footprint = (2 * t * (f_in_pad * x_bytes + f_out_pad * out_bytes)
                     + f_in_pad * f_out_pad * 4 + f_out_pad * 4)
        if footprint <= budget:
            return t
    return 128


# ----------------------------------------------------------------------------
# Pallas kernels
# ----------------------------------------------------------------------------
def _linear_bias_kernel(x_ref, w_ref, b_ref, h_ref):
    """H = x @ W + b for one row tile (lane-dense output)."""
    h = jnp.dot(x_ref[...], w_ref[...], preferred_element_type=jnp.float32)
    h_ref[...] = (h + b_ref[...]).astype(h_ref.dtype)


def _agg_h_slab(h_ref, k, h_resident, tk):
    if h_resident:
        start = pl.multiple_of(k * tk, tk)
        return h_ref[pl.ds(start, tk), :]
    return h_ref[...]


def _aggregate_acc_kernel(adj_ref, h_ref, out_ref, acc_ref, *, h_resident, tk,
                          apply_relu):
    """out[i] = sum_k Adj[i,k] @ H[k] (+ReLU), f32 scratch, narrow output dtype."""
    k = pl.program_id(1)

    @pl.when(k == 0)
    def _():
        acc_ref[...] = jnp.zeros_like(acc_ref)

    acc_ref[...] += jnp.dot(adj_ref[...], _agg_h_slab(h_ref, k, h_resident, tk),
                            preferred_element_type=jnp.float32)

    @pl.when(k == pl.num_programs(1) - 1)
    def _():
        res = acc_ref[...]
        if apply_relu:
            res = jnp.maximum(res, 0.0)
        out_ref[...] = res.astype(out_ref.dtype)


def _aggregate_inplace_kernel(adj_ref, h_ref, out_ref, *, h_resident, tk):
    """f32 output block is k-resident in VMEM: accumulate directly, no scratch."""
    k = pl.program_id(1)

    @pl.when(k == 0)
    def _():
        out_ref[...] = jnp.zeros_like(out_ref)

    out_ref[...] += jnp.dot(adj_ref[...], _agg_h_slab(h_ref, k, h_resident, tk),
                            preferred_element_type=jnp.float32)


def _proj_head_kernel(x_ref, w1_ref, b1_ref, w2_ref, b2_ref, out_ref):
    """proj_head: Linear -> ReLU -> Linear, fused, row-tiled."""
    h = jnp.dot(x_ref[...], w1_ref[...], preferred_element_type=jnp.float32)
    h = jnp.maximum(h + b1_ref[...], 0.0)
    z = jnp.dot(h, w2_ref[...], preferred_element_type=jnp.float32)
    out_ref[...] = (z + b2_ref[...]).astype(out_ref.dtype)


# ----------------------------------------------------------------------------
# pallas_call wrappers
# ----------------------------------------------------------------------------
def linear_bias(x, w, b, *, tm, out_dtype=jnp.bfloat16):
    n, f_in = x.shape
    f_out = w.shape[1]
    return pl.pallas_call(
        _linear_bias_kernel,
        out_shape=jax.ShapeDtypeStruct((n, f_out), out_dtype),
        grid_spec=pltpu.PrefetchScalarGridSpec(
            num_scalar_prefetch=0,
            grid=(n // tm,),
            in_specs=[
                pl.BlockSpec((tm, f_in), lambda i: (i, 0)),
                pl.BlockSpec((f_in, f_out), lambda i: (0, 0)),
                pl.BlockSpec((1, f_out), lambda i: (0, 0)),
            ],
            out_specs=pl.BlockSpec((tm, f_out), lambda i: (i, 0)),
        ),
        compiler_params=pltpu.CompilerParams(
            dimension_semantics=("parallel",),
            vmem_limit_bytes=_VMEM_LIMIT,
        ),
        cost_estimate=pl.CostEstimate(
            flops=int(2 * n * f_in * f_out),
            transcendentals=0,
            bytes_accessed=int(n * f_in * x.dtype.itemsize
                               + f_in * f_out * w.dtype.itemsize
                               + n * f_out * jnp.dtype(out_dtype).itemsize),
        ),
    )(x, w, b)


def aggregate(adj, h, *, tm, tk, apply_relu, out_dtype, h_resident):
    """out = Adj @ H with k-reduction over Adj column tiles."""
    n = adj.shape[0]
    f = h.shape[1]
    grid = (n // tm, n // tk)

    if h_resident:
        # H stays fully resident in VMEM (constant block index -> fetched once).
        h_spec = pl.BlockSpec((n, f), lambda i, k: (0, 0))
        h_bytes = n * f * h.dtype.itemsize
    else:
        h_spec = pl.BlockSpec((tk, f), lambda i, k: (k, 0))
        h_bytes = grid[0] * n * f * h.dtype.itemsize

    use_scratch = apply_relu or (jnp.dtype(out_dtype) != jnp.dtype(jnp.float32))
    if use_scratch:
        kernel = functools.partial(_aggregate_acc_kernel, h_resident=h_resident,
                                   tk=tk, apply_relu=apply_relu)
        scratch = [pltpu.VMEM((tm, f), jnp.float32)]
    else:
        kernel = functools.partial(_aggregate_inplace_kernel,
                                   h_resident=h_resident, tk=tk)
        scratch = []

    return pl.pallas_call(
        kernel,
        out_shape=jax.ShapeDtypeStruct((n, f), out_dtype),
        grid_spec=pltpu.PrefetchScalarGridSpec(
            num_scalar_prefetch=0,
            grid=grid,
            in_specs=[
                pl.BlockSpec((tm, tk), lambda i, k: (i, k)),   # Adj tile (bf16)
                h_spec,                                        # H (resident / slab)
            ],
            out_specs=pl.BlockSpec((tm, f), lambda i, k: (i, 0)),
            scratch_shapes=scratch,
        ),
        compiler_params=pltpu.CompilerParams(
            dimension_semantics=("parallel", "arbitrary"),
            vmem_limit_bytes=_VMEM_LIMIT,
        ),
        cost_estimate=pl.CostEstimate(
            flops=int(2 * n * n * f),
            transcendentals=0,
            bytes_accessed=int(n * n * adj.dtype.itemsize + h_bytes
                               + n * f * jnp.dtype(out_dtype).itemsize),
        ),
    )(adj, h)


def proj_head(x, w1, b1, w2, b2, *, tm):
    n, f_in = x.shape
    hid = w1.shape[1]
    p = w2.shape[1]
    return pl.pallas_call(
        _proj_head_kernel,
        out_shape=jax.ShapeDtypeStruct((n, p), jnp.float32),
        grid_spec=pltpu.PrefetchScalarGridSpec(
            num_scalar_prefetch=0,
            grid=(n // tm,),
            in_specs=[
                pl.BlockSpec((tm, f_in), lambda i: (i, 0)),
                pl.BlockSpec((f_in, hid), lambda i: (0, 0)),
                pl.BlockSpec((1, hid), lambda i: (0, 0)),
                pl.BlockSpec((hid, p), lambda i: (0, 0)),
                pl.BlockSpec((1, p), lambda i: (0, 0)),
            ],
            out_specs=pl.BlockSpec((tm, p), lambda i: (i, 0)),
        ),
        compiler_params=pltpu.CompilerParams(
            dimension_semantics=("parallel",),
            vmem_limit_bytes=_VMEM_LIMIT,
        ),
    )(x, w1, b1, w2, b2)


# ----------------------------------------------------------------------------
# Parameters (PyTorch nn.Linear-style init), padding helpers
# ----------------------------------------------------------------------------
def init_params(key, nlayers, in_dim, hidden_dim, emb_dim, proj_dim):
    """U(-1/sqrt(fan_in), 1/sqrt(fan_in)); weights stored as (fan_in, fan_out)."""
    def linear(k, fan_in, fan_out):
        kw, kb = jax.random.split(k)
        bound = 1.0 / jnp.sqrt(jnp.float32(fan_in))
        w = jax.random.uniform(kw, (fan_in, fan_out), jnp.float32, -bound, bound)
        b = jax.random.uniform(kb, (fan_out,), jnp.float32, -bound, bound)
        return w, b

    dims = [in_dim] + [hidden_dim] * (nlayers - 1) + [emb_dim]
    keys = jax.random.split(key, nlayers + 2)
    gnn = [linear(keys[i], dims[i], dims[i + 1]) for i in range(nlayers)]
    p1 = linear(keys[nlayers], emb_dim, proj_dim)
    p2 = linear(keys[nlayers + 1], proj_dim, proj_dim)
    return gnn, (p1, p2)


def pad_params(params):
    """Zero-pad to lane-dense shapes; GNN weights in bf16, proj head in f32."""
    def pad_wb(w, b, w_dtype):
        fi, fo = w.shape
        fi_p, fo_p = _round_up(fi, LANE), _round_up(fo, LANE)
        w_p = (jnp.zeros((fi_p, fo_p), jnp.float32)
               .at[:fi, :fo].set(w).astype(w_dtype))
        b_p = jnp.zeros((1, fo_p), jnp.float32).at[0, :fo].set(b)
        return w_p, b_p

    gnn, ((w1, b1), (w2, b2)) = params
    gnn_p = [pad_wb(w, b, jnp.bfloat16) for (w, b) in gnn]     # bf16 MXU path
    return gnn_p, (pad_wb(w1, b1, jnp.float32), pad_wb(w2, b2, jnp.float32))


def prepare_adjacency(adj, n_pad):
    """One-time host-side pad + bf16 cast of the dense adjacency (done OUTSIDE
    the jitted forward so the steady-state path never re-pays this N^2 pass)."""
    n = adj.shape[0]
    return (jnp.zeros((n_pad, n_pad), jnp.bfloat16)
            .at[:n, :n].set(adj.astype(jnp.bfloat16)))


def prepare_features(x, n_pad):
    """One-time pad + bf16 cast of the node features."""
    n, f = x.shape
    f_pad = _round_up(f, LANE)
    return (jnp.zeros((n_pad, f_pad), jnp.bfloat16)
            .at[:n, :f].set(x.astype(jnp.bfloat16)))


# ----------------------------------------------------------------------------
# GraphEncoder forward (sparse=True path, eval mode)
# ----------------------------------------------------------------------------
def graph_encoder_forward(padded_params, x_p, adj_p):
    """Inputs are already padded (prepare_*); returns padded (z, emb)."""
    gnn_p, ((pw1, pb1), (pw2, pb2)) = padded_params
    n_pad = adj_p.shape[0]

    # >= 2 row blocks keeps both v7x TensorCores busy on the "parallel" axis;
    # large tiles keep the HBM-bound Adj read near the bandwidth roofline.
    tm_agg = _pick_tile(n_pad, min_blocks=2)
    tk_agg = _pick_tile(n_pad, min_blocks=1)

    nlayers = len(gnn_p)
    h = x_p
    for li, (w, b) in enumerate(gnn_p):
        is_last = li == nlayers - 1
        f_in, f_out = w.shape
        tm_lin = _pick_linear_tile(n_pad, f_in, f_out, x_bytes=2, out_bytes=2)

        # H = h @ W + b, computed once per layer (bias applied here only).
        hw = linear_bias(h, w, b, tm=tm_lin, out_dtype=jnp.bfloat16)

        # x = Adj @ H; ReLU fused at k == last for all but the final layer.
        # F.dropout(p, training=False) is identity in eval mode.
        h_resident = 2 * n_pad * f_out * hw.dtype.itemsize <= _H_RESIDENT_BUDGET
        h = aggregate(adj_p, hw, tm=tm_agg, tk=tk_agg,
                      apply_relu=not is_last,
                      out_dtype=jnp.float32 if is_last else jnp.bfloat16,
                      h_resident=h_resident)

    emb_p = h                                            # (n_pad, emb_pad) f32
    tm_proj = _pick_linear_tile(n_pad, pw1.shape[0], pw2.shape[1],
                                x_bytes=4, out_bytes=4)
    z_p = proj_head(emb_p, pw1, pb1, pw2, pb2, tm=tm_proj)
    return z_p, emb_p


# ----------------------------------------------------------------------------
# Pure-JAX reference (f32, unpadded) for sanity check
# ----------------------------------------------------------------------------
def reference_forward(params, x, adj):
    gnn, ((w1, b1), (w2, b2)) = params
    for (w, b) in gnn[:-1]:
        x = jnp.maximum(adj @ (x @ w + b), 0.0)
    w, b = gnn[-1]
    x = adj @ (x @ w + b)
    z = jnp.maximum(x @ w1 + b1, 0.0) @ w2 + b2
    return z, x


if __name__ == "__main__":
    # N=512 -> tm_agg=256, tk_agg=512: a 2x1 (parallel x arbitrary) grid with a
    # fully VMEM-resident H slab in the aggregation kernels.
    N = 512
    IN_DIM = 16
    HIDDEN_DIM = 32
    EMB_DIM = 32
    PROJ_DIM = 32
    NLAYERS = 2
    DROPOUT = 0.5     # unused in eval mode
    SPARSE = True     # this script implements the sparse (GCNConv_dgl) branch

    key = jax.random.PRNGKey(0)
    k_x, k_adj, k_params = jax.random.split(key, 3)

    x = jax.random.normal(k_x, (N, IN_DIM), jnp.float32)
    # Dense non-negative adjacency with self-loops, row-normalized (f32).
    a = jax.random.uniform(k_adj, (N, N), jnp.float32)
    a = (a > 0.8).astype(jnp.float32) + jnp.eye(N, dtype=jnp.float32)
    adj = a / jnp.sum(a, axis=1, keepdims=True)

    params = init_params(k_params, NLAYERS, IN_DIM, HIDDEN_DIM, EMB_DIM, PROJ_DIM)
    padded = pad_params(params)

    # One-time padding / bf16 casts hoisted out of the jitted forward.
    n_pad = _round_up(N, LANE)
    adj_p = prepare_adjacency(adj, n_pad)
    x_p = prepare_features(x, n_pad)

    fwd = jax.jit(graph_encoder_forward)

    z_p, emb_p = fwd(padded, x_p, adj_p)
    jax.block_until_ready((z_p, emb_p))
    z = z_p[:N, :PROJ_DIM]
    emb = emb_p[:N, :EMB_DIM]

    z_ref, emb_ref = reference_forward(params, x, adj)
    assert z.shape == (N, PROJ_DIM) and emb.shape == (N, EMB_DIM)
    # Adjacency / features / H streamed as bf16 (f32 accumulation) => relaxed
    # tolerance against the pure-f32 reference.
    assert jnp.allclose(emb, emb_ref, atol=5e-2, rtol=5e-2), \
        float(jnp.max(jnp.abs(emb - emb_ref)))
    assert jnp.allclose(z, z_ref, atol=5e-2, rtol=5e-2), \
        float(jnp.max(jnp.abs(z - z_ref)))

    print("KERNEL_OK")
</pallas_src>

<mosaic_0001>
module attributes {stable_mosaic.version = 11 : i64} {
  func.func @_linear_bias_kernel(%arg0: i32, %arg1: memref<512x128xbf16, #tpu.memory_space<vmem>>, %arg2: memref<128x128xbf16, #tpu.memory_space<vmem>>, %arg3: memref<1x128xf32, #tpu.memory_space<vmem>>, %arg4: memref<512x128xbf16, #tpu.memory_space<vmem>>) attributes {dimension_semantics = [#tpu.dimension_semantics<parallel>], iteration_bounds = array<i64: 1>, scalar_prefetch = 0 : i64, scratch_operands = 0 : i64, tpu.core_type = #tpu.core_type<tc>, window_params = [{transform_indices = @transform_0, window_bounds = array<i64: 512, 128>}, {pipeline_mode = #tpu.pipeline_mode<synchronous>, transform_indices = @transform_1, window_bounds = array<i64: 128, 128>}, {pipeline_mode = #tpu.pipeline_mode<synchronous>, transform_indices = @transform_2, window_bounds = array<i64: 1, 128>}, {transform_indices = @transform_3, window_bounds = array<i64: 512, 128>}]} {
    %c0 = arith.constant 0 : index
    %c0_0 = arith.constant 0 : index
    %0 = vector.load %arg1[%c0, %c0_0] : memref<512x128xbf16, #tpu.memory_space<vmem>>, vector<512x128xbf16>
    %c0_1 = arith.constant 0 : index
    %c0_2 = arith.constant 0 : index
    %1 = vector.load %arg2[%c0_1, %c0_2] : memref<128x128xbf16, #tpu.memory_space<vmem>>, vector<128x128xbf16>
    %cst = arith.constant dense<0.000000e+00> : vector<512x128xf32>
    %2 = tpu.matmul %0, %1, %cst {dimension_numbers = #tpu.dot_dimension_numbers<[1], [0], [0], [1], [0, 0, 1, 1], [], []>} : vector<512x128xbf16>, vector<128x128xbf16>, vector<512x128xf32> -> vector<512x128xf32>
    %c0_3 = arith.constant 0 : index
    %c0_4 = arith.constant 0 : index
    %3 = vector.load %arg3[%c0_3, %c0_4] : memref<1x128xf32, #tpu.memory_space<vmem>>, vector<1x128xf32>
    %4 = vector.broadcast %3 : vector<1x128xf32> to vector<512x128xf32>
    %5 = arith.addf %2, %4 : vector<512x128xf32>
    %6 = arith.truncf %5 : vector<512x128xf32> to vector<512x128xbf16>
    %c0_5 = arith.constant 0 : index
    %c0_6 = arith.constant 0 : index
    %7 = vector.load %arg4[%c0_5, %c0_6] : memref<512x128xbf16, #tpu.memory_space<vmem>>, vector<512x128xbf16>
    tpu.vector_store %arg4[%c0_5, %c0_6], %6 {strides = array<i32>} : memref<512x128xbf16, #tpu.memory_space<vmem>>, vector<512x128xbf16>,
    return
  }
  func.func @transform_0(%arg0: i32) -> (i32, i32) {
    %c0_i32 = arith.constant 0 : i32
    %c0_i32_0 = arith.constant 0 : i32
    return %arg0, %c0_i32 : i32, i32
  }
  func.func @transform_1(%arg0: i32) -> (i32, i32) {
    %c0_i32 = arith.constant 0 : i32
    %c0_i32_0 = arith.constant 0 : i32
    %c0_i32_1 = arith.constant 0 : i32
    return %c0_i32, %c0_i32_0 : i32, i32
  }
  func.func @transform_2(%arg0: i32) -> (i32, i32) {
    %c0_i32 = arith.constant 0 : i32
    %c0_i32_0 = arith.constant 0 : i32
    %c0_i32_1 = arith.constant 0 : i32
    return %c0_i32, %c0_i32_0 : i32, i32
  }
  func.func @transform_3(%arg0: i32) -> (i32, i32) {
    %c0_i32 = arith.constant 0 : i32
    %c0_i32_0 = arith.constant 0 : i32
    return %arg0, %c0_i32 : i32, i32
  }
}

module attributes {stable_mosaic.version = 11 : i64} {
  func.func @_aggregate_inplace_kernel(%arg0: i32, %arg1: i32, %arg2: memref<256x512xbf16, #tpu.memory_space<vmem>>, %arg3: memref<512x128xbf16, #tpu.memory_space<vmem>>, %arg4: memref<256x128xf32, #tpu.memory_space<vmem>>) attributes {dimension_semantics = [#tpu.dimension_semantics<parallel>, #tpu.dimension_semantics<arbitrary>], iteration_bounds = array<i64: 2, 1>, scalar_prefetch = 0 : i64, scratch_operands = 0 : i64, tpu.core_type = #tpu.core_type<tc>, window_params = [{transform_indices = @transform_0, window_bounds = array<i64: 256, 512>}, {pipeline_mode = #tpu.pipeline_mode<synchronous>, transform_indices = @transform_1, window_bounds = array<i64: 512, 128>}, {transform_indices = @transform_2, window_bounds = array<i64: 256, 128>}]} {
    %c0_i32 = arith.constant 0 : i32
    %0 = arith.cmpi eq, %arg1, %c0_i32 : i32
    %1 = arith.extui %0 : i1 to i32
    %c0_i32_0 = arith.constant 0 : i32
    %2 = arith.cmpi ne, %1, %c0_i32_0 : i32
    scf.if %2 {
      %cst_7 = arith.constant 0.000000e+00 : f32
      %12 = vector.broadcast %cst_7 : f32 to vector<256x128xf32>
      %c0_8 = arith.constant 0 : index
      %c0_9 = arith.constant 0 : index
      %13 = vector.load %arg4[%c0_8, %c0_9] : memref<256x128xf32, #tpu.memory_space<vmem>>, vector<256x128xf32>
      tpu.vector_store %arg4[%c0_8, %c0_9], %12 {strides = array<i32>} : memref<256x128xf32, #tpu.memory_space<vmem>>, vector<256x128xf32>,
    } else {
    }
    %c0 = arith.constant 0 : index
    %c0_1 = arith.constant 0 : index
    %3 = vector.load %arg4[%c0, %c0_1] : memref<256x128xf32, #tpu.memory_space<vmem>>, vector<256x128xf32>
    %c0_2 = arith.constant 0 : index
    %c0_3 = arith.constant 0 : index
    %4 = vector.load %arg2[%c0_2, %c0_3] : memref<256x512xbf16, #tpu.memory_space<vmem>>, vector<256x512xbf16>
    %c512_i32 = arith.constant 512 : i32
    %5 = arith.muli %arg1, %c512_i32 : i32
    %6 = tpu.assume_multiple %5, 512 : i32
    %7 = arith.index_cast %6 : i32 to index
    %c0_4 = arith.constant 0 : index
    %8 = vector.load %arg3[%7, %c0_4] : memref<512x128xbf16, #tpu.memory_space<vmem>>, vector<512x128xbf16>
    %cst = arith.constant dense<0.000000e+00> : vector<256x128xf32>
    %9 = tpu.matmul %4, %8, %cst {dimension_numbers = #tpu.dot_dimension_numbers<[1], [0], [0], [1], [0, 0, 1, 1], [], []>} : vector<256x512xbf16>, vector<512x128xbf16>, vector<256x128xf32> -> vector<256x128xf32>
    %10 = arith.addf %3, %9 : vector<256x128xf32>
    %c0_5 = arith.constant 0 : index
    %c0_6 = arith.constant 0 : index
    %11 = vector.load %arg4[%c0_5, %c0_6] : memref<256x128xf32, #tpu.memory_space<vmem>>, vector<256x128xf32>
    tpu.vector_store %arg4[%c0_5, %c0_6], %10 {strides = array<i32>} : memref<256x128xf32, #tpu.memory_space<vmem>>, vector<256x128xf32>,
    return
  }
  func.func @transform_0(%arg0: i32, %arg1: i32) -> (i32, i32) {
    %c0_i32 = arith.constant 0 : i32
    return %arg0, %arg1 : i32, i32
  }
  func.func @transform_1(%arg0: i32, %arg1: i32) -> (i32, i32) {
    %c0_i32 = arith.constant 0 : i32
    %c0_i32_0 = arith.constant 0 : i32
    %c0_i32_1 = arith.constant 0 : i32
    return %c0_i32, %c0_i32_0 : i32, i32
  }
  func.func @transform_2(%arg0: i32, %arg1: i32) -> (i32, i32) {
    %c0_i32 = arith.constant 0 : i32
    %c0_i32_0 = arith.constant 0 : i32
    return %arg0, %c0_i32 : i32, i32
  }
}

module attributes {stable_mosaic.version = 11 : i64} {
  func.func @_linear_bias_kernel(%arg0: i32, %arg1: memref<512x128xbf16, #tpu.memory_space<vmem>>, %arg2: memref<128x128xbf16, #tpu.memory_space<vmem>>, %arg3: memref<1x128xf32, #tpu.memory_space<vmem>>, %arg4: memref<512x128xbf16, #tpu.memory_space<vmem>>) attributes {dimension_semantics = [#tpu.dimension_semantics<parallel>], iteration_bounds = array<i64: 1>, scalar_prefetch = 0 : i64, scratch_operands = 0 : i64, tpu.core_type = #tpu.core_type<tc>, window_params = [{transform_indices = @transform_0, window_bounds = array<i64: 512, 128>}, {pipeline_mode = #tpu.pipeline_mode<synchronous>, transform_indices = @transform_1, window_bounds = array<i64: 128, 128>}, {pipeline_mode = #tpu.pipeline_mode<synchronous>, transform_indices = @transform_2, window_bounds = array<i64: 1, 128>}, {transform_indices = @transform_3, window_bounds = array<i64: 512, 128>}]} {
    %c0 = arith.constant 0 : index
    %c0_0 = arith.constant 0 : index
    %0 = vector.load %arg1[%c0, %c0_0] : memref<512x128xbf16, #tpu.memory_space<vmem>>, vector<512x128xbf16>
    %c0_1 = arith.constant 0 : index
    %c0_2 = arith.constant 0 : index
    %1 = vector.load %arg2[%c0_1, %c0_2] : memref<128x128xbf16, #tpu.memory_space<vmem>>, vector<128x128xbf16>
    %cst = arith.constant dense<0.000000e+00> : vector<512x128xf32>
    %2 = tpu.matmul %0, %1, %cst {dimension_numbers = #tpu.dot_dimension_numbers<[1], [0], [0], [1], [0, 0, 1, 1], [], []>} : vector<512x128xbf16>, vector<128x128xbf16>, vector<512x128xf32> -> vector<512x128xf32>
    %c0_3 = arith.constant 0 : index
    %c0_4 = arith.constant 0 : index
    %3 = vector.load %arg3[%c0_3, %c0_4] : memref<1x128xf32, #tpu.memory_space<vmem>>, vector<1x128xf32>
    %4 = vector.broadcast %3 : vector<1x128xf32> to vector<512x128xf32>
    %5 = arith.addf %2, %4 : vector<512x128xf32>
    %6 = arith.truncf %5 : vector<512x128xf32> to vector<512x128xbf16>
    %c0_5 = arith.constant 0 : index
    %c0_6 = arith.constant 0 : index
    %7 = vector.load %arg4[%c0_5, %c0_6] : memref<512x128xbf16, #tpu.memory_space<vmem>>, vector<512x128xbf16>
    tpu.vector_store %arg4[%c0_5, %c0_6], %6 {strides = array<i32>} : memref<512x128xbf16, #tpu.memory_space<vmem>>, vector<512x128xbf16>,
    return
  }
  func.func @transform_0(%arg0: i32) -> (i32, i32) {
    %c0_i32 = arith.constant 0 : i32
    %c0_i32_0 = arith.constant 0 : i32
    return %arg0, %c0_i32 : i32, i32
  }
  func.func @transform_1(%arg0: i32) -> (i32, i32) {
    %c0_i32 = arith.constant 0 : i32
    %c0_i32_0 = arith.constant 0 : i32
    %c0_i32_1 = arith.constant 0 : i32
    return %c0_i32, %c0_i32_0 : i32, i32
  }
  func.func @transform_2(%arg0: i32) -> (i32, i32) {
    %c0_i32 = arith.constant 0 : i32
    %c0_i32_0 = arith.constant 0 : i32
    %c0_i32_1 = arith.constant 0 : i32
    return %c0_i32, %c0_i32_0 : i32, i32
  }
  func.func @transform_3(%arg0: i32) -> (i32, i32) {
    %c0_i32 = arith.constant 0 : i32
    %c0_i32_0 = arith.constant 0 : i32
    return %arg0, %c0_i32 : i32, i32
  }
}

module attributes {stable_mosaic.version = 11 : i64} {
  func.func @_aggregate_acc_kernel(%arg0: i32, %arg1: i32, %arg2: memref<256x512xbf16, #tpu.memory_space<vmem>>, %arg3: memref<512x128xbf16, #tpu.memory_space<vmem>>, %arg4: memref<256x128xbf16, #tpu.memory_space<vmem>>, %arg5: memref<256x128xf32, #tpu.memory_space<vmem>>) attributes {dimension_semantics = [#tpu.dimension_semantics<parallel>, #tpu.dimension_semantics<arbitrary>], iteration_bounds = array<i64: 2, 1>, scalar_prefetch = 0 : i64, scratch_operands = 1 : i64, tpu.core_type = #tpu.core_type<tc>, window_params = [{transform_indices = @transform_0, window_bounds = array<i64: 256, 512>}, {pipeline_mode = #tpu.pipeline_mode<synchronous>, transform_indices = @transform_1, window_bounds = array<i64: 512, 128>}, {transform_indices = @transform_2, window_bounds = array<i64: 256, 128>}]} {
    %c0_i32 = arith.constant 0 : i32
    %0 = arith.cmpi eq, %arg1, %c0_i32 : i32
    %1 = arith.extui %0 : i1 to i32
    %c0_i32_0 = arith.constant 0 : i32
    %2 = arith.cmpi ne, %1, %c0_i32_0 : i32
    scf.if %2 {
      %cst_9 = arith.constant 0.000000e+00 : f32
      %15 = vector.broadcast %cst_9 : f32 to vector<256x128xf32>
      %c0_10 = arith.constant 0 : index
      %c0_11 = arith.constant 0 : index
      %16 = vector.load %arg5[%c0_10, %c0_11] : memref<256x128xf32, #tpu.memory_space<vmem>>, vector<256x128xf32>
      tpu.vector_store %arg5[%c0_10, %c0_11], %15 {strides = array<i32>} : memref<256x128xf32, #tpu.memory_space<vmem>>, vector<256x128xf32>,
    } else {
    }
    %c0 = arith.constant 0 : index
    %c0_1 = arith.constant 0 : index
    %3 = vector.load %arg5[%c0, %c0_1] : memref<256x128xf32, #tpu.memory_space<vmem>>, vector<256x128xf32>
    %c0_2 = arith.constant 0 : index
    %c0_3 = arith.constant 0 : index
    %4 = vector.load %arg2[%c0_2, %c0_3] : memref<256x512xbf16, #tpu.memory_space<vmem>>, vector<256x512xbf16>
    %c512_i32 = arith.constant 512 : i32
    %5 = arith.muli %arg1, %c512_i32 : i32
    %6 = tpu.assume_multiple %5, 512 : i32
    %7 = arith.index_cast %6 : i32 to index
    %c0_4 = arith.constant 0 : index
    %8 = vector.load %arg3[%7, %c0_4] : memref<512x128xbf16, #tpu.memory_space<vmem>>, vector<512x128xbf16>
    %cst = arith.constant dense<0.000000e+00> : vector<256x128xf32>
    %9 = tpu.matmul %4, %8, %cst {dimension_numbers = #tpu.dot_dimension_numbers<[1], [0], [0], [1], [0, 0, 1, 1], [], []>} : vector<256x512xbf16>, vector<512x128xbf16>, vector<256x128xf32> -> vector<256x128xf32>
    %10 = arith.addf %3, %9 : vector<256x128xf32>
    %c0_5 = arith.constant 0 : index
    %c0_6 = arith.constant 0 : index
    %11 = vector.load %arg5[%c0_5, %c0_6] : memref<256x128xf32, #tpu.memory_space<vmem>>, vector<256x128xf32>
    tpu.vector_store %arg5[%c0_5, %c0_6], %10 {strides = array<i32>} : memref<256x128xf32, #tpu.memory_space<vmem>>, vector<256x128xf32>,
    %c0_i32_7 = arith.constant 0 : i32
    %12 = arith.cmpi eq, %arg1, %c0_i32_7 : i32
    %13 = arith.extui %12 : i1 to i32
    %c0_i32_8 = arith.constant 0 : i32
    %14 = arith.cmpi ne, %13, %c0_i32_8 : i32
    scf.if %14 {
      %c0_9 = arith.constant 0 : index
      %c0_10 = arith.constant 0 : index
      %15 = vector.load %arg5[%c0_9, %c0_10] : memref<256x128xf32, #tpu.memory_space<vmem>>, vector<256x128xf32>
      %cst_11 = arith.constant 0.000000e+00 : f32
      %16 = vector.broadcast %cst_11 : f32 to vector<256x128xf32>
      %17 = arith.maximumf %15, %16 : vector<256x128xf32>
      %18 = arith.truncf %17 : vector<256x128xf32> to vector<256x128xbf16>
      %c0_12 = arith.constant 0 : index
      %c0_13 = arith.constant 0 : index
      %19 = vector.load %arg4[%c0_12, %c0_13] : memref<256x128xbf16, #tpu.memory_space<vmem>>, vector<256x128xbf16>
      tpu.vector_store %arg4[%c0_12, %c0_13], %18 {strides = array<i32>} : memref<256x128xbf16, #tpu.memory_space<vmem>>, vector<256x128xbf16>,
    } else {
    }
    return
  }
  func.func @transform_0(%arg0: i32, %arg1: i32) -> (i32, i32) {
    %c0_i32 = arith.constant 0 : i32
    return %arg0, %arg1 : i32, i32
  }
  func.func @transform_1(%arg0: i32, %arg1: i32) -> (i32, i32) {
    %c0_i32 = arith.constant 0 : i32
    %c0_i32_0 = arith.constant 0 : i32
    %c0_i32_1 = arith.constant 0 : i32
    return %c0_i32, %c0_i32_0 : i32, i32
  }
  func.func @transform_2(%arg0: i32, %arg1: i32) -> (i32, i32) {
    %c0_i32 = arith.constant 0 : i32
    %c0_i32_0 = arith.constant 0 : i32
    return %arg0, %c0_i32 : i32, i32
  }
}

module attributes {stable_mosaic.version = 11 : i64} {
  func.func @_proj_head_kernel(%arg0: i32, %arg1: memref<512x128xf32, #tpu.memory_space<vmem>>, %arg2: memref<128x128xf32, #tpu.memory_space<vmem>>, %arg3: memref<1x128xf32, #tpu.memory_space<vmem>>, %arg4: memref<128x128xf32, #tpu.memory_space<vmem>>, %arg5: memref<1x128xf32, #tpu.memory_space<vmem>>, %arg6: memref<512x128xf32, #tpu.memory_space<vmem>>) attributes {dimension_semantics = [#tpu.dimension_semantics<parallel>], iteration_bounds = array<i64: 1>, scalar_prefetch = 0 : i64, scratch_operands = 0 : i64, tpu.core_type = #tpu.core_type<tc>, window_params = [{transform_indices = @transform_0, window_bounds = array<i64: 512, 128>}, {pipeline_mode = #tpu.pipeline_mode<synchronous>, transform_indices = @transform_1, window_bounds = array<i64: 128, 128>}, {pipeline_mode = #tpu.pipeline_mode<synchronous>, transform_indices = @transform_2, window_bounds = array<i64: 1, 128>}, {pipeline_mode = #tpu.pipeline_mode<synchronous>, transform_indices = @transform_3, window_bounds = array<i64: 128, 128>}, {pipeline_mode = #tpu.pipeline_mode<synchronous>, transform_indices = @transform_4, window_bounds = array<i64: 1, 128>}, {transform_indices = @transform_5, window_bounds = array<i64: 512, 128>}]} {
    %c0 = arith.constant 0 : index
    %c0_0 = arith.constant 0 : index
    %0 = vector.load %arg1[%c0, %c0_0] : memref<512x128xf32, #tpu.memory_space<vmem>>, vector<512x128xf32>
    %c0_1 = arith.constant 0 : index
    %c0_2 = arith.constant 0 : index
    %1 = vector.load %arg2[%c0_1, %c0_2] : memref<128x128xf32, #tpu.memory_space<vmem>>, vector<128x128xf32>
    %cst = arith.constant dense<0.000000e+00> : vector<512x128xf32>
    %2 = tpu.matmul %0, %1, %cst {dimension_numbers = #tpu.dot_dimension_numbers<[1], [0], [0], [1], [0, 0, 1, 1], [], []>} : vector<512x128xf32>, vector<128x128xf32>, vector<512x128xf32> -> vector<512x128xf32>
    %c0_3 = arith.constant 0 : index
    %c0_4 = arith.constant 0 : index
    %3 = vector.load %arg3[%c0_3, %c0_4] : memref<1x128xf32, #tpu.memory_space<vmem>>, vector<1x128xf32>
    %4 = vector.broadcast %3 : vector<1x128xf32> to vector<512x128xf32>
    %5 = arith.addf %2, %4 : vector<512x128xf32>
    %cst_5 = arith.constant 0.000000e+00 : f32
    %6 = vector.broadcast %cst_5 : f32 to vector<512x128xf32>
    %7 = arith.maximumf %5, %6 : vector<512x128xf32>
    %c0_6 = arith.constant 0 : index
    %c0_7 = arith.constant 0 : index
    %8 = vector.load %arg4[%c0_6, %c0_7] : memref<128x128xf32, #tpu.memory_space<vmem>>, vector<128x128xf32>
    %cst_8 = arith.constant dense<0.000000e+00> : vector<512x128xf32>
    %9 = tpu.matmul %7, %8, %cst_8 {dimension_numbers = #tpu.dot_dimension_numbers<[1], [0], [0], [1], [0, 0, 1, 1], [], []>} : vector<512x128xf32>, vector<128x128xf32>, vector<512x128xf32> -> vector<512x128xf32>
    %c0_9 = arith.constant 0 : index
    %c0_10 = arith.constant 0 : index
    %10 = vector.load %arg5[%c0_9, %c0_10] : memref<1x128xf32, #tpu.memory_space<vmem>>, vector<1x128xf32>
    %11 = vector.broadcast %10 : vector<1x128xf32> to vector<512x128xf32>
    %12 = arith.addf %9, %11 : vector<512x128xf32>
    %c0_11 = arith.constant 0 : index
    %c0_12 = arith.constant 0 : index
    %13 = vector.load %arg6[%c0_11, %c0_12] : memref<512x128xf32, #tpu.memory_space<vmem>>, vector<512x128xf32>
    tpu.vector_store %arg6[%c0_11, %c0_12], %12 {strides = array<i32>} : memref<512x128xf32, #tpu.memory_space<vmem>>, vector<512x128xf32>,
    return
  }
  func.func @transform_0(%arg0: i32) -> (i32, i32) {
    %c0_i32 = arith.constant 0 : i32
    %c0_i32_0 = arith.constant 0 : i32
    return %arg0, %c0_i32 : i32, i32
  }
  func.func @transform_1(%arg0: i32) -> (i32, i32) {
    %c0_i32 = arith.constant 0 : i32
    %c0_i32_0 = arith.constant 0 : i32
    %c0_i32_1 = arith.constant 0 : i32
    return %c0_i32, %c0_i32_0 : i32, i32
  }
  func.func @transform_2(%arg0: i32) -> (i32, i32) {
    %c0_i32 = arith.constant 0 : i32
    %c0_i32_0 = arith.constant 0 : i32
    %c0_i32_1 = arith.constant 0 : i32
    return %c0_i32, %c0_i32_0 : i32, i32
  }
  func.func @transform_3(%arg0: i32) -> (i32, i32) {
    %c0_i32 = arith.constant 0 : i32
    %c0_i32_0 = arith.constant 0 : i32
    %c0_i32_1 = arith.constant 0 : i32
    return %c0_i32, %c0_i32_0 : i32, i32
  }
  func.func @transform_4(%arg0: i32) -> (i32, i32) {
    %c0_i32 = arith.constant 0 : i32
    %c0_i32_0 = arith.constant 0 : i32
    %c0_i32_1 = arith.constant 0 : i32
    return %c0_i32, %c0_i32_0 : i32, i32
  }
  func.func @transform_5(%arg0: i32) -> (i32, i32) {
    %c0_i32 = arith.constant 0 : i32
    %c0_i32_0 = arith.constant 0 : i32
    return %arg0, %c0_i32 : i32, i32
  }
}

</mosaic_0001>

<llo_original>
// kernel: graph_encoder_forward.5
$region0: #{graph_encoder_forward.5}
  #allocation0 [shape = 'u32[]', space=smem, size = 0x4, offset = 0x4, fixed_abs, tag = 'smem constant byte address 0x4 - core index']
  #allocation1 [shape = 'u32[72,128]{1,0:T(1,128)}', space=vmem, size = 0x9000, scoped, tag = 'internal scratch']
  %s0 = inlined_call_operand.hbm [shape: bf16[512,128], index: 0, kind: input, shape index: {}]
  %s1 = inlined_call_operand.hbm [shape: bf16[128,128], index: 1, kind: input, shape index: {}]
  %s2 = inlined_call_operand.hbm [shape: f32[1,128], index: 2, kind: input, shape index: {}]
  %s3 = inlined_call_operand.vmem [shape: bf16[512,128], index: 3, kind: output, shape index: {}]
  %s4 = sld [smem:[#allocation0]]
  $region34: #{graph_encoder_forward.5} parent=0
    _
  %s6 = ssub.s32 1, %s4
  %s7 = scalar_select 0, %s6, %s4
  $region1: #{graph_encoder_forward.5} parent=0
    #allocation2 [shape = 'u8[131072]{0}', space=vmem, size = 0x20000, scoped, tag = 'input window, operand 0, single buffered']
    #allocation3 [shape = 's32[1]{0}', space=sflag, size = 0x4, scoped, tag = 'scoped memory for graph_encoder_forward.5']
    #allocation4 [shape = 'u8[32768]{0}', space=vmem, size = 0x8000, scoped, tag = 'input window, operand 1, single buffered']
    #allocation5 [shape = 's32[1]{0}', space=sflag, size = 0x4, scoped, tag = 'scoped memory for graph_encoder_forward.5']
    #allocation6 [shape = 'u8[512]{0}', space=vmem, size = 0x400, scoped, tag = 'input window, operand 2, single buffered']
    %8 = vsyncpa [#allocation3], 0
    %9 = vsyncpa [#allocation5], 0
    // Predicated region
    $region2: #{graph_encoder_forward.5} parent=1 // pred_check
      _
    $region3: #{graph_encoder_forward.5} parent=1 // pred_check_branch
      %11 = sbr.rel (0) target = $region5
    $region4: #{graph_encoder_forward.5} parent=1 // pred_region
      %13 = vsyncadd [#allocation3], 0
      %s14 = sshll.u32 %s0, 4
      %s15 = int_to_ptr.hbm [resolvable:$true] %s14
      %s16 = sshll.u32 [#allocation2], 4
      %s17 = int_to_ptr.vmem [resolvable:$true] %s16
      %22 = dma.hbm_to_vmem [thread:$0]  %s15, 4096, %s17, [#allocation3], 64, 64, 4
    $region5: #{graph_encoder_forward.5} parent=1 // pred_fallthru
      _
    // Predicated region
    $region6: #{graph_encoder_forward.5} parent=1 // pred_check
      _
    $region7: #{graph_encoder_forward.5} parent=1 // pred_check_branch
      %24 = sbr.rel (0) target = $region9
    $region8: #{graph_encoder_forward.5} parent=1 // pred_region
      %26 = vsyncadd [#allocation5], 0
      %s27 = sshll.u32 %s1, 4
      %s28 = int_to_ptr.hbm [resolvable:$true] %s27
      %s29 = sshll.u32 [#allocation4], 4
      %s30 = int_to_ptr.vmem [resolvable:$true] %s29
      %35 = dma.hbm_to_vmem [thread:$0]  %s28, 1024, %s30, [#allocation5], 64, 64, 4
    $region9: #{graph_encoder_forward.5} parent=1 // pred_fallthru
      _
    // Predicated region
    $region10: #{graph_encoder_forward.5} parent=1 // pred_check
      _
    $region11: #{graph_encoder_forward.5} parent=1 // pred_check_branch
      %37 = sbr.rel (0) target = $region13
    $region12: #{graph_encoder_forward.5} parent=1 // pred_region
      %39 = vsyncadd [#allocation5], 0
      %s41 = sshll.u32 %s2, 4
      %s42 = int_to_ptr.hbm [resolvable:$true] %s41
      %s43 = sshll.u32 [#allocation6], 4
      %s44 = int_to_ptr.vmem [resolvable:$true] %s43
      %46 = dma.hbm_to_vmem [thread:$0]  %s42, 16, %s44, [#allocation5]
    $region13: #{graph_encoder_forward.5} parent=1 // pred_fallthru
      _
    // Predicated region
    $region14: #{graph_encoder_forward.5} parent=1 // pred_check
      _
    $region15: #{graph_encoder_forward.5} parent=1 // pred_check_branch
      %48 = sbr.rel (0) target = $region17
    $region16: #{graph_encoder_forward.5} parent=1 // pred_region
      %50 = dma.done [#allocation3], 4096
    $region17: #{graph_encoder_forward.5} parent=1 // pred_fallthru
      _
    // Predicated region
    $region18: #{graph_encoder_forward.5} parent=1 // pred_check
      _
    $region19: #{graph_encoder_forward.5} parent=1 // pred_check_branch
      %52 = sbr.rel (0) target = $region21
    $region20: #{graph_encoder_forward.5} parent=1 // pred_region
      %54 = dma.done [#allocation5], 1024
    $region21: #{graph_encoder_forward.5} parent=1 // pred_fallthru
      _
    // Predicated region
    $region22: #{graph_encoder_forward.5} parent=1 // pred_check
      _
    $region23: #{graph_encoder_forward.5} parent=1 // pred_check_branch
      %56 = sbr.rel (0) target = $region25
    $region24: #{graph_encoder_forward.5} parent=1 // pred_region
      %58 = dma.done [#allocation5], 16
    $region25: #{graph_encoder_forward.5} parent=1 // pred_fallthru
      _
    %v59 = vld [vmem:[#allocation2] sm:$0xf]
    %v60 = vld [vmem:[#allocation2 + $0x4] sm:$0xf]
    %v61 = vld [vmem:[#allocation2 + $0x8] sm:$0xf]
    %v62 = vld [vmem:[#allocation2 + $0xc] sm:$0xf]
    %v63 = vld [vmem:[#allocation2 + $0x10] sm:$0xf]
    %v64 = vld [vmem:[#allocation2 + $0x14] sm:$0xf]
    %v65 = vld [vmem:[#allocation2 + $0x18] sm:$0xf]
    %v66 = vld [vmem:[#allocation2 + $0x1c] sm:$0xf]
    %v67 = vld [vmem:[#allocation2 + $0x20] sm:$0xf]
    %v68 = vld [vmem:[#allocation2 + $0x24] sm:$0xf]
    %v69 = vld [vmem:[#allocation2 + $0x28] sm:$0xf]
    %v70 = vld [vmem:[#allocation2 + $0x2c] sm:$0xf]
    %v71 = vld [vmem:[#allocation2 + $0x30] sm:$0xf]
    %v72 = vld [vmem:[#allocation2 + $0x34] sm:$0xf]
    %v73 = vld [vmem:[#allocation2 + $0x38] sm:$0xf]
    %v74 = vld [vmem:[#allocation2 + $0x3c] sm:$0xf]
    %v75 = vld [vmem:[#allocation2 + $0x40] sm:$0xf]
    %v76 = vld [vmem:[#allocation2 + $0x44] sm:$0xf]
    %v77 = vld [vmem:[#allocation2 + $0x48] sm:$0xf]
    %v78 = vld [vmem:[#allocation2 + $0x4c] sm:$0xf]
    %v79 = vld [vmem:[#allocation2 + $0x50] sm:$0xf]
    %v80 = vld [vmem:[#allocation2 + $0x54] sm:$0xf]
    %v81 = vld [vmem:[#allocation2 + $0x58] sm:$0xf]
    %v82 = vld [vmem:[#allocation2 + $0x5c] sm:$0xf]
    %v83 = vld [vmem:[#allocation2 + $0x60] sm:$0xf]
    %v84 = vld [vmem:[#allocation2 + $0x64] sm:$0xf]
    %v85 = vld [vmem:[#allocation2 + $0x68] sm:$0xf]
    %v86 = vld [vmem:[#allocation2 + $0x6c] sm:$0xf]
    %v87 = vld [vmem:[#allocation2 + $0x70] sm:$0xf]
    %v88 = vld [vmem:[#allocation2 + $0x74] sm:$0xf]
    %v89 = vld [vmem:[#allocation2 + $0x78] sm:$0xf]
    %v90 = vld [vmem:[#allocation2 + $0x7c] sm:$0xf]
    %v91 = vld [vmem:[#allocation2 + $0x80] sm:$0xf]
    %v92 = vld [vmem:[#allocation2 + $0x84] sm:$0xf]
    %v93 = vld [vmem:[#allocation2 + $0x88] sm:$0xf]
    %v94 = vld [vmem:[#allocation2 + $0x8c] sm:$0xf]
    %v95 = vld [vmem:[#allocation2 + $0x90] sm:$0xf]
    %v96 = vld [vmem:[#allocation2 + $0x94] sm:$0xf]
    %v97 = vld [vmem:[#allocation2 + $0x98] sm:$0xf]
    %v98 = vld [vmem:[#allocation2 + $0x9c] sm:$0xf]
    %v99 = vld [vmem:[#allocation2 + $0xa0] sm:$0xf]
    %v100 = vld [vmem:[#allocation2 + $0xa4] sm:$0xf]
    %v101 = vld [vmem:[#allocation2 + $0xa8] sm:$0xf]
    %v102 = vld [vmem:[#allocation2 + $0xac] sm:$0xf]
    %v103 = vld [vmem:[#allocation2 + $0xb0] sm:$0xf]
    %v104 = vld [vmem:[#allocation2 + $0xb4] sm:$0xf]
    %v105 = vld [vmem:[#allocation2 + $0xb8] sm:$0xf]
    %v106 = vld [vmem:[#allocation2 + $0xbc] sm:$0xf]
    %v107 = vld [vmem:[#allocation2 + $0xc0] sm:$0xf]
    %v108 = vld [vmem:[#allocation2 + $0xc4] sm:$0xf]
    %v109 = vld [vmem:[#allocation2 + $0xc8] sm:$0xf]
    %v110 = vld [vmem:[#allocation2 + $0xcc] sm:$0xf]
    %v111 = vld [vmem:[#allocation2 + $0xd0] sm:$0xf]
    %v112 = vld [vmem:[#allocation2 + $0xd4] sm:$0xf]
    %v113 = vld [vmem:[#allocation2 + $0xd8] sm:$0xf]
    %v114 = vld [vmem:[#allocation2 + $0xdc] sm:$0xf]
    %v115 = vld [vmem:[#allocation2 + $0xe0] sm:$0xf]
    %v116 = vld [vmem:[#allocation2 + $0xe4] sm:$0xf]
    %v117 = vld [vmem:[#allocation2 + $0xe8] sm:$0xf]
    %v118 = vld [vmem:[#allocation2 + $0xec] sm:$0xf]
    %v119 = vld [vmem:[#allocation2 + $0xf0] sm:$0xf]
    %v120 = vld [vmem:[#allocation2 + $0xf4] sm:$0xf]
    %v121 = vld [vmem:[#allocation2 + $0xf8] sm:$0xf]
    %v122 = vld [vmem:[#allocation2 + $0xfc] sm:$0xf]
    %v123 = vld [vmem:[#allocation4] sm:$0xf]
    %v124 = vld [vmem:[#allocation4 + $0x4] sm:$0xf]
    %v125 = vld [vmem:[#allocation4 + $0x8] sm:$0xf]
    %v126 = vld [vmem:[#allocation4 + $0xc] sm:$0xf]
    %v127 = vld [vmem:[#allocation4 + $0x10] sm:$0xf]
    %v128 = vld [vmem:[#allocation4 + $0x14] sm:$0xf]
    %v129 = vld [vmem:[#allocation4 + $0x18] sm:$0xf]
    %v130 = vld [vmem:[#allocation4 + $0x1c] sm:$0xf]
    %v131 = vld [vmem:[#allocation4 + $0x20] sm:$0xf]
    %v132 = vld [vmem:[#allocation4 + $0x24] sm:$0xf]
    %v133 = vld [vmem:[#allocation4 + $0x28] sm:$0xf]
    %v134 = vld [vmem:[#allocation4 + $0x2c] sm:$0xf]
    %v135 = vld [vmem:[#allocation4 + $0x30] sm:$0xf]
    %v136 = vld [vmem:[#allocation4 + $0x34] sm:$0xf]
    %v137 = vld [vmem:[#allocation4 + $0x38] sm:$0xf]
    %v138 = vld [vmem:[#allocation4 + $0x3c] sm:$0xf]
    %v139 = vld [vmem:[#allocation6] sm:$0x1]
    %v141 = vperm.slane %v139, 0
    %v207 = vunpack.c.l.b16 %v59
    %v208 = vunpack.c.l.b16 %v60
    %v209 = vunpack.c.l.b16 %v61
    %v210 = vunpack.c.l.b16 %v62
    %v211 = vunpack.c.l.b16 %v63
    %v212 = vunpack.c.l.b16 %v64
    %v213 = vunpack.c.l.b16 %v65
    %v214 = vunpack.c.l.b16 %v66
    %v215 = vunpack.c.l.b16 %v67
    %v216 = vunpack.c.l.b16 %v68
    %v217 = vunpack.c.l.b16 %v69
    %v218 = vunpack.c.l.b16 %v70
    %v219 = vunpack.c.l.b16 %v71
    %v220 = vunpack.c.l.b16 %v72
    %v221 = vunpack.c.l.b16 %v73
    %v222 = vunpack.c.l.b16 %v74
    %v223 = vunpack.c.l.b16 %v75
    %v224 = vunpack.c.l.b16 %v76
    %v225 = vunpack.c.l.b16 %v77
    %v226 = vunpack.c.l.b16 %v78
    %v227 = vunpack.c.l.b16 %v79
    %v228 = vunpack.c.l.b16 %v80
    %v229 = vunpack.c.l.b16 %v81
    %v230 = vunpack.c.l.b16 %v82
    %v231 = vunpack.c.l.b16 %v83
    %v232 = vunpack.c.l.b16 %v84
    %v233 = vunpack.c.l.b16 %v85
    %v234 = vunpack.c.l.b16 %v86
    %v235 = vunpack.c.l.b16 %v87
    %v236 = vunpack.c.l.b16 %v88
    %v237 = vunpack.c.l.b16 %v89
    %v238 = vunpack.c.l.b16 %v90
    %v239 = vunpack.c.l.b16 %v91
    %v240 = vunpack.c.l.b16 %v92
    %v241 = vunpack.c.l.b16 %v93
    %v242 = vunpack.c.l.b16 %v94
    %v243 = vunpack.c.l.b16 %v95
    %v244 = vunpack.c.l.b16 %v96
    %v245 = vunpack.c.l.b16 %v97
    %v246 = vunpack.c.l.b16 %v98
    %v247 = vunpack.c.l.b16 %v99
    %v248 = vunpack.c.l.b16 %v100
    %v249 = vunpack.c.l.b16 %v101
    %v250 = vunpack.c.l.b16 %v102
    %v251 = vunpack.c.l.b16 %v103
    %v252 = vunpack.c.l.b16 %v104
    %v253 = vunpack.c.l.b16 %v105
    %v254 = vunpack.c.l.b16 %v106
    %v255 = vunpack.c.l.b16 %v107
    %v256 = vunpack.c.l.b16 %v108
    %v257 = vunpack.c.l.b16 %v109
    %v258 = vunpack.c.l.b16 %v110
    %v259 = vunpack.c.l.b16 %v111
    %v260 = vunpack.c.l.b16 %v112
    %v261 = vunpack.c.l.b16 %v113
    %v262 = vunpack.c.l.b16 %v114
    %v263 = vunpack.c.l.b16 %v115
    %v264 = vunpack.c.l.b16 %v116
    %v265 = vunpack.c.l.b16 %v117
    %v266 = vunpack.c.l.b16 %v118
    %v267 = vunpack.c.l.b16 %v119
    %v268 = vunpack.c.l.b16 %v120
    %v269 = vunpack.c.l.b16 %v121
    %v270 = vunpack.c.l.b16 %v122
    %v271 = vpack.c.b16 %v208, %v207
    %v272 = vpack.c.b16 %v210, %v209
    %v273 = vpack.c.b16 %v212, %v211
    %v274 = vpack.c.b16 %v214, %v213
    %v275 = vpack.c.b16 %v216, %v215
    %v276 = vpack.c.b16 %v218, %v217
    %v277 = vpack.c.b16 %v220, %v219
    %v278 = vpack.c.b16 %v222, %v221
    %v279 = vpack.c.b16 %v224, %v223
    %v280 = vpack.c.b16 %v226, %v225
    %v281 = vpack.c.b16 %v228, %v227
    %v282 = vpack.c.b16 %v230, %v229
    %v283 = vpack.c.b16 %v232, %v231
    %v284 = vpack.c.b16 %v234, %v233
    %v285 = vpack.c.b16 %v236, %v235
    %v286 = vpack.c.b16 %v238, %v237
    %v287 = vpack.c.b16 %v240, %v239
    %v288 = vpack.c.b16 %v242, %v241
    %v289 = vpack.c.b16 %v244, %v243
    %v290 = vpack.c.b16 %v246, %v245
    %v291 = vpack.c.b16 %v248, %v247
    %v292 = vpack.c.b16 %v250, %v249
    %v293 = vpack.c.b16 %v252, %v251
    %v294 = vpack.c.b16 %v254, %v253
    %v295 = vpack.c.b16 %v256, %v255
    %v296 = vpack.c.b16 %v258, %v257
    %v297 = vpack.c.b16 %v260, %v259
    %v298 = vpack.c.b16 %v262, %v261
    %v299 = vpack.c.b16 %v264, %v263
    %v300 = vpack.c.b16 %v266, %v265
    %v301 = vpack.c.b16 %v268, %v267
    %v302 = vpack.c.b16 %v270, %v269
    %v351 = vunpack.c.l.b16 %v123
    %v352 = vunpack.c.l.b16 %v124
    %v353 = vunpack.c.l.b16 %v125
    %v354 = vunpack.c.l.b16 %v126
    %v355 = vunpack.c.l.b16 %v127
    %v356 = vunpack.c.l.b16 %v128
    %v357 = vunpack.c.l.b16 %v129
    %v358 = vunpack.c.l.b16 %v130
    %v359 = vunpack.c.l.b16 %v131
    %v360 = vunpack.c.l.b16 %v132
    %v361 = vunpack.c.l.b16 %v133
    %v362 = vunpack.c.l.b16 %v134
    %v363 = vunpack.c.l.b16 %v135
    %v364 = vunpack.c.l.b16 %v136
    %v365 = vunpack.c.l.b16 %v137
    %v366 = vunpack.c.l.b16 %v138
    %v367 = vpack.c.b16 %v352, %v351
    %v368 = vpack.c.b16 %v354, %v353
    %v369 = vpack.c.b16 %v356, %v355
    %v370 = vpack.c.b16 %v358, %v357
    %v371 = vpack.c.b16 %v360, %v359
    %v372 = vpack.c.b16 %v362, %v361
    %v373 = vpack.c.b16 %v364, %v363
    %v374 = vpack.c.b16 %v366, %v365
    %383 = vmatpush.bf16.msra.mxu0 %v374
    %384 = vmatpush.bf16.msra.mxu0 %v373
    %385 = vmatpush.bf16.msra.mxu0 %v372
    %386 = vmatpush.bf16.msra.mxu0 %v371
    %387 = vmatpush.bf16.msra.mxu0 %v370
    %388 = vmatpush.bf16.msra.mxu0 %v369
    %389 = vmatpush.bf16.msra.mxu0 %v368
    %390 = vmatpush.bf16.msra.mxu0 %v367
    %391 = vmatmul.bf16.gmra.mxu0 %v271
    %v392 = vpop.f32.mrf.mxu0
    %v393 = vadd.f32 %v141, %v392
    %v394 = vpop.f32.mrf.mxu0
    %v395 = vadd.f32 %v141, %v394
    %396 = vmatmul.bf16.gmra.mxu0 %v272
    %v397 = vpop.f32.mrf.mxu0
    %v398 = vadd.f32 %v141, %v397
    %v399 = vpop.f32.mrf.mxu0
    %v400 = vadd.f32 %v141, %v399
    %401 = vmatmul.bf16.gmra.mxu0 %v273
    %v402 = vpop.f32.mrf.mxu0
    %v403 = vadd.f32 %v141, %v402
    %v404 = vpop.f32.mrf.mxu0
    %v405 = vadd.f32 %v141, %v404
    %406 = vmatmul.bf16.gmra.mxu0 %v274
    %v407 = vpop.f32.mrf.mxu0
    %v408 = vadd.f32 %v141, %v407
    %v409 = vpop.f32.mrf.mxu0
    %v410 = vadd.f32 %v141, %v409
    %411 = vmatmul.bf16.gmra.mxu0 %v275
    %v412 = vpop.f32.mrf.mxu0
    %v413 = vadd.f32 %v141, %v412
    %v414 = vpop.f32.mrf.mxu0
    %v415 = vadd.f32 %v141, %v414
    %416 = vmatmul.bf16.gmra.mxu0 %v276
    %v417 = vpop.f32.mrf.mxu0
    %v418 = vadd.f32 %v141, %v417
    %v419 = vpop.f32.mrf.mxu0
    %v420 = vadd.f32 %v141, %v419
    %421 = vmatmul.bf16.gmra.mxu0 %v277
    %v422 = vpop.f32.mrf.mxu0
    %v423 = vadd.f32 %v141, %v422
    %v424 = vpop.f32.mrf.mxu0
    %v425 = vadd.f32 %v141, %v424
    %426 = vmatmul.bf16.gmra.mxu0 %v278
    %v427 = vpop.f32.mrf.mxu0
    %v428 = vadd.f32 %v141, %v427
    %v429 = vpop.f32.mrf.mxu0
    %v430 = vadd.f32 %v141, %v429
    %431 = vmatmul.bf16.gmra.mxu0 %v279
    %v432 = vpop.f32.mrf.mxu0
    %v433 = vadd.f32 %v141, %v432
    %v434 = vpop.f32.mrf.mxu0
    %v435 = vadd.f32 %v141, %v434
    %436 = vmatmul.bf16.gmra.mxu0 %v280
    %v437 = vpop.f32.mrf.mxu0
    %v438 = vadd.f32 %v141, %v437
    %v439 = vpop.f32.mrf.mxu0
    %v440 = vadd.f32 %v141, %v439
    %441 = vmatmul.bf16.gmra.mxu0 %v281
    %v442 = vpop.f32.mrf.mxu0
    %v443 = vadd.f32 %v141, %v442
    %v444 = vpop.f32.mrf.mxu0
    %v445 = vadd.f32 %v141, %v444
    %446 = vmatmul.bf16.gmra.mxu0 %v282
    %v447 = vpop.f32.mrf.mxu0
    %v448 = vadd.f32 %v141, %v447
    %v449 = vpop.f32.mrf.mxu0
    %v450 = vadd.f32 %v141, %v449
    %451 = vmatmul.bf16.gmra.mxu0 %v283
    %v452 = vpop.f32.mrf.mxu0
    %v453 = vadd.f32 %v141, %v452
    %v454 = vpop.f32.mrf.mxu0
    %v455 = vadd.f32 %v141, %v454
    %456 = vmatmul.bf16.gmra.mxu0 %v284
    %v457 = vpop.f32.mrf.mxu0
    %v458 = vadd.f32 %v141, %v457
    %v459 = vpop.f32.mrf.mxu0
    %v460 = vadd.f32 %v141, %v459
    %461 = vmatmul.bf16.gmra.mxu0 %v285
    %v462 = vpop.f32.mrf.mxu0
    %v463 = vadd.f32 %v141, %v462
    %v464 = vpop.f32.mrf.mxu0
    %v465 = vadd.f32 %v141, %v464
    %466 = vmatmul.bf16.gmra.mxu0 %v286
    %v467 = vpop.f32.mrf.mxu0
    %v468 = vadd.f32 %v141, %v467
    %v469 = vpop.f32.mrf.mxu0
    %v470 = vadd.f32 %v141, %v469
    %471 = vmatmul.bf16.gmra.mxu0 %v287
    %v472 = vpop.f32.mrf.mxu0
    %v473 = vadd.f32 %v141, %v472
    %v474 = vpop.f32.mrf.mxu0
    %v475 = vadd.f32 %v141, %v474
    %476 = vmatmul.bf16.gmra.mxu0 %v288
    %v477 = vpop.f32.mrf.mxu0
    %v478 = vadd.f32 %v141, %v477
    %v479 = vpop.f32.mrf.mxu0
    %v480 = vadd.f32 %v141, %v479
    %481 = vmatmul.bf16.gmra.mxu0 %v289
    %v482 = vpop.f32.mrf.mxu0
    %v483 = vadd.f32 %v141, %v482
    %v484 = vpop.f32.mrf.mxu0
    %v485 = vadd.f32 %v141, %v484
    %486 = vmatmul.bf16.gmra.mxu0 %v290
    %v487 = vpop.f32.mrf.mxu0
    %v488 = vadd.f32 %v141, %v487
    %v489 = vpop.f32.mrf.mxu0
    %v490 = vadd.f32 %v141, %v489
    %491 = vmatmul.bf16.gmra.mxu0 %v291
    %v492 = vpop.f32.mrf.mxu0
    %v493 = vadd.f32 %v141, %v492
    %v494 = vpop.f32.mrf.mxu0
    %v495 = vadd.f32 %v141, %v494
    %496 = vmatmul.bf16.gmra.mxu0 %v292
    %v497 = vpop.f32.mrf.mxu0
    %v498 = vadd.f32 %v141, %v497
    %v499 = vpop.f32.mrf.mxu0
    %v500 = vadd.f32 %v141, %v499
    %501 = vmatmul.bf16.gmra.mxu0 %v293
    %v502 = vpop.f32.mrf.mxu0
    %v503 = vadd.f32 %v141, %v502
    %v504 = vpop.f32.mrf.mxu0
    %v505 = vadd.f32 %v141, %v504
    %506 = vmatmul.bf16.gmra.mxu0 %v294
    %v507 = vpop.f32.mrf.mxu0
    %v508 = vadd.f32 %v141, %v507
    %v509 = vpop.f32.mrf.mxu0
    %v510 = vadd.f32 %v141, %v509
    %511 = vmatmul.bf16.gmra.mxu0 %v295
    %v512 = vpop.f32.mrf.mxu0
    %v513 = vadd.f32 %v141, %v512
    %v514 = vpop.f32.mrf.mxu0
    %v515 = vadd.f32 %v141, %v514
    %516 = vmatmul.bf16.gmra.mxu0 %v296
    %v517 = vpop.f32.mrf.mxu0
    %v518 = vadd.f32 %v141, %v517
    %v519 = vpop.f32.mrf.mxu0
    %v520 = vadd.f32 %v141, %v519
    %521 = vmatmul.bf16.gmra.mxu0 %v297
    %v522 = vpop.f32.mrf.mxu0
    %v523 = vadd.f32 %v141, %v522
    %v524 = vpop.f32.mrf.mxu0
    %v525 = vadd.f32 %v141, %v524
    %526 = vmatmul.bf16.gmra.mxu0 %v298
    %v527 = vpop.f32.mrf.mxu0
    %v528 = vadd.f32 %v141, %v527
    %v529 = vpop.f32.mrf.mxu0
    %v530 = vadd.f32 %v141, %v529
    %531 = vmatmul.bf16.gmra.mxu0 %v299
    %v532 = vpop.f32.mrf.mxu0
    %v533 = vadd.f32 %v141, %v532
    %v534 = vpop.f32.mrf.mxu0
    %v535 = vadd.f32 %v141, %v534
    %536 = vmatmul.bf16.gmra.mxu0 %v300
    %v537 = vpop.f32.mrf.mxu0
    %v538 = vadd.f32 %v141, %v537
    %v539 = vpop.f32.mrf.mxu0
    %v540 = vadd.f32 %v141, %v539
    %541 = vmatmul.bf16.gmra.mxu0 %v301
    %v542 = vpop.f32.mrf.mxu0
    %v543 = vadd.f32 %v141, %v542
    %v544 = vpop.f32.mrf.mxu0
    %v545 = vadd.f32 %v141, %v544
    %546 = vmatmul.bf16.gmra.mxu0 %v302
    %v547 = vpop.f32.mrf.mxu0
    %v548 = vadd.f32 %v141, %v547
    %v549 = vpop.f32.mrf.mxu0
    %v550 = vadd.f32 %v141, %v549
    %551 = vdwg.mxu0
    %v552 = vpack.c.bf16 %v393, %v393
    %v553 = vpack.c.bf16 %v395, %v395
    %v554 = vpack.c.bf16 %v398, %v398
    %v555 = vpack.c.bf16 %v400, %v400
    %v556 = vpack.c.bf16 %v403, %v403
    %v557 = vpack.c.bf16 %v405, %v405
    %v558 = vpack.c.bf16 %v408, %v408
    %v559 = vpack.c.bf16 %v410, %v410
    %v560 = vpack.c.bf16 %v413, %v413
    %v561 = vpack.c.bf16 %v415, %v415
    %v562 = vpack.c.bf16 %v418, %v418
    %v563 = vpack.c.bf16 %v420, %v420
    %v564 = vpack.c.bf16 %v423, %v423
    %v565 = vpack.c.bf16 %v425, %v425
    %v566 = vpack.c.bf16 %v428, %v428
    %v567 = vpack.c.bf16 %v430, %v430
    %v568 = vpack.c.bf16 %v433, %v433
    %v569 = vpack.c.bf16 %v435, %v435
    %v570 = vpack.c.bf16 %v438, %v438
    %v571 = vpack.c.bf16 %v440, %v440
    %v572 = vpack.c.bf16 %v443, %v443
    %v573 = vpack.c.bf16 %v445, %v445
    %v574 = vpack.c.bf16 %v448, %v448
    %v575 = vpack.c.bf16 %v450, %v450
    %v576 = vpack.c.bf16 %v453, %v453
    %v577 = vpack.c.bf16 %v455, %v455
    %v578 = vpack.c.bf16 %v458, %v458
    %v579 = vpack.c.bf16 %v460, %v460
    %v580 = vpack.c.bf16 %v463, %v463
    %v581 = vpack.c.bf16 %v465, %v465
    %v582 = vpack.c.bf16 %v468, %v468
    %v583 = vpack.c.bf16 %v470, %v470
    %v584 = vpack.c.bf16 %v473, %v473
    %v585 = vpack.c.bf16 %v475, %v475
    %v586 = vpack.c.bf16 %v478, %v478
    %v587 = vpack.c.bf16 %v480, %v480
    %v588 = vpack.c.bf16 %v483, %v483
    %v589 = vpack.c.bf16 %v485, %v485
    %v590 = vpack.c.bf16 %v488, %v488
    %v591 = vpack.c.bf16 %v490, %v490
    %v592 = vpack.c.bf16 %v493, %v493
    %v593 = vpack.c.bf16 %v495, %v495
    %v594 = vpack.c.bf16 %v498, %v498
    %v595 = vpack.c.bf16 %v500, %v500
    %v596 = vpack.c.bf16 %v503, %v503
    %v597 = vpack.c.bf16 %v505, %v505
    %v598 = vpack.c.bf16 %v508, %v508
    %v599 = vpack.c.bf16 %v510, %v510
    %v600 = vpack.c.bf16 %v513, %v513
    %v601 = vpack.c.bf16 %v515, %v515
    %v602 = vpack.c.bf16 %v518, %v518
    %v603 = vpack.c.bf16 %v520, %v520
    %v604 = vpack.c.bf16 %v523, %v523
    %v605 = vpack.c.bf16 %v525, %v525
    %v606 = vpack.c.bf16 %v528, %v528
    %v607 = vpack.c.bf16 %v530, %v530
    %v608 = vpack.c.bf16 %v533, %v533
    %v609 = vpack.c.bf16 %v535, %v535
    %v610 = vpack.c.bf16 %v538, %v538
    %v611 = vpack.c.bf16 %v540, %v540
    %v612 = vpack.c.bf16 %v543, %v543
    %v613 = vpack.c.bf16 %v545, %v545
    %v614 = vpack.c.bf16 %v548, %v548
    %v615 = vpack.c.bf16 %v550, %v550
    %616 = vst [vmem:[%s3] sm:$0xf] %v552
    %617 = vst [vmem:[%s3 + $0x4] sm:$0xf] %v553
    %618 = vst [vmem:[%s3 + $0x8] sm:$0xf] %v554
    %619 = vst [vmem:[%s3 + $0xc] sm:$0xf] %v555
    %620 = vst [vmem:[%s3 + $0x10] sm:$0xf] %v556
    %621 = vst [vmem:[%s3 + $0x14] sm:$0xf] %v557
    %622 = vst [vmem:[%s3 + $0x18] sm:$0xf] %v558
    %623 = vst [vmem:[%s3 + $0x1c] sm:$0xf] %v559
    %624 = vst [vmem:[%s3 + $0x20] sm:$0xf] %v560
    %625 = vst [vmem:[%s3 + $0x24] sm:$0xf] %v561
    %626 = vst [vmem:[%s3 + $0x28] sm:$0xf] %v562
    %627 = vst [vmem:[%s3 + $0x2c] sm:$0xf] %v563
    %628 = vst [vmem:[%s3 + $0x30] sm:$0xf] %v564
    %629 = vst [vmem:[%s3 + $0x34] sm:$0xf] %v565
    %630 = vst [vmem:[%s3 + $0x38] sm:$0xf] %v566
    %631 = vst [vmem:[%s3 + $0x3c] sm:$0xf] %v567
    %632 = vst [vmem:[%s3 + $0x40] sm:$0xf] %v568
    %633 = vst [vmem:[%s3 + $0x44] sm:$0xf] %v569
    %634 = vst [vmem:[%s3 + $0x48] sm:$0xf] %v570
    %635 = vst [vmem:[%s3 + $0x4c] sm:$0xf] %v571
    %636 = vst [vmem:[%s3 + $0x50] sm:$0xf] %v572
    %637 = vst [vmem:[%s3 + $0x54] sm:$0xf] %v573
    %638 = vst [vmem:[%s3 + $0x58] sm:$0xf] %v574
    %639 = vst [vmem:[%s3 + $0x5c] sm:$0xf] %v575
    %640 = vst [vmem:[%s3 + $0x60] sm:$0xf] %v576
    %641 = vst [vmem:[%s3 + $0x64] sm:$0xf] %v577
    %642 = vst [vmem:[%s3 + $0x68] sm:$0xf] %v578
    %643 = vst [vmem:[%s3 + $0x6c] sm:$0xf] %v579
    %644 = vst [vmem:[%s3 + $0x70] sm:$0xf] %v580
    %645 = vst [vmem:[%s3 + $0x74] sm:$0xf] %v581
    %646 = vst [vmem:[%s3 + $0x78] sm:$0xf] %v582
    %647 = vst [vmem:[%s3 + $0x7c] sm:$0xf] %v583
    %648 = vst [vmem:[%s3 + $0x80] sm:$0xf] %v584
    %649 = vst [vmem:[%s3 + $0x84] sm:$0xf] %v585
    %650 = vst [vmem:[%s3 + $0x88] sm:$0xf] %v586
    %651 = vst [vmem:[%s3 + $0x8c] sm:$0xf] %v587
    %652 = vst [vmem:[%s3 + $0x90] sm:$0xf] %v588
    %653 = vst [vmem:[%s3 + $0x94] sm:$0xf] %v589
    %654 = vst [vmem:[%s3 + $0x98] sm:$0xf] %v590
    %655 = vst [vmem:[%s3 + $0x9c] sm:$0xf] %v591
    %656 = vst [vmem:[%s3 + $0xa0] sm:$0xf] %v592
    %657 = vst [vmem:[%s3 + $0xa4] sm:$0xf] %v593
    %658 = vst [vmem:[%s3 + $0xa8] sm:$0xf] %v594
    %659 = vst [vmem:[%s3 + $0xac] sm:$0xf] %v595
    %660 = vst [vmem:[%s3 + $0xb0] sm:$0xf] %v596
    %661 = vst [vmem:[%s3 + $0xb4] sm:$0xf] %v597
    %662 = vst [vmem:[%s3 + $0xb8] sm:$0xf] %v598
    %663 = vst [vmem:[%s3 + $0xbc] sm:$0xf] %v599
    %664 = vst [vmem:[%s3 + $0xc0] sm:$0xf] %v600
    %665 = vst [vmem:[%s3 + $0xc4] sm:$0xf] %v601
    %666 = vst [vmem:[%s3 + $0xc8] sm:$0xf] %v602
    %667 = vst [vmem:[%s3 + $0xcc] sm:$0xf] %v603
    %668 = vst [vmem:[%s3 + $0xd0] sm:$0xf] %v604
    %669 = vst [vmem:[%s3 + $0xd4] sm:$0xf] %v605
    %670 = vst [vmem:[%s3 + $0xd8] sm:$0xf] %v606
    %671 = vst [vmem:[%s3 + $0xdc] sm:$0xf] %v607
    %672 = vst [vmem:[%s3 + $0xe0] sm:$0xf] %v608
    %673 = vst [vmem:[%s3 + $0xe4] sm:$0xf] %v609
    %674 = vst [vmem:[%s3 + $0xe8] sm:$0xf] %v610
    %675 = vst [vmem:[%s3 + $0xec] sm:$0xf] %v611
    %676 = vst [vmem:[%s3 + $0xf0] sm:$0xf] %v612
    %677 = vst [vmem:[%s3 + $0xf4] sm:$0xf] %v613
    %678 = vst [vmem:[%s3 + $0xf8] sm:$0xf] %v614
    %679 = vst [vmem:[%s3 + $0xfc] sm:$0xf] %v615
    // Predicated region
    $region26: #{graph_encoder_forward.5} parent=1 // pred_check
      _
    $region27: #{graph_encoder_forward.5} parent=1 // pred_check_branch
      %681 = sbr.rel (0) target = $region29
    $region28: #{graph_encoder_forward.5} parent=1 // pred_region
      _
    $region29: #{graph_encoder_forward.5} parent=1 // pred_fallthru
      _
    // Predicated region
    $region30: #{graph_encoder_forward.5} parent=1 // pred_check
      _
    $region31: #{graph_encoder_forward.5} parent=1 // pred_check_branch
      %683 = sbr.rel (0) target = $region33
    $region32: #{graph_encoder_forward.5} parent=1 // pred_region
      _
    $region33: #{graph_encoder_forward.5} parent=1 // pred_fallthru
      _
    %684 = vsyncpa [#allocation3], 1
    %685 = vsyncpa [#allocation5], 1

// kernel: graph_encoder_forward.7
$region0: #{graph_encoder_forward.7}
  #allocation0 [shape = 'u32[]', space=smem, size = 0x4, offset = 0x4, fixed_abs, tag = 'smem constant byte address 0x4 - core index']
  #allocation1 [shape = 'u32[72,128]{1,0:T(1,128)}', space=vmem, size = 0x9000, scoped, tag = 'internal scratch']
  %s0 = inlined_call_operand.vmem [shape: bf16[512,128], index: 0, kind: input, shape index: {}]
  %s1 = inlined_call_operand.vmem [shape: bf16[128,128], index: 1, kind: input, shape index: {}]
  %s2 = inlined_call_operand.vmem [shape: f32[1,128], index: 2, kind: input, shape index: {}]
  %s3 = inlined_call_operand.vmem [shape: bf16[512,128], index: 3, kind: output, shape index: {}]
  %s4 = sld [smem:[#allocation0]]
  $region22: #{graph_encoder_forward.7} parent=0
    _
  %s6 = ssub.s32 1, %s4
  %s7 = scalar_select 0, %s6, %s4
  // Predicated region
  $region2: #{graph_encoder_forward.7} parent=0 // pred_check
    _
  $region3: #{graph_encoder_forward.7} parent=0 // pred_check_branch
    %9 = sbr.rel (0) target = $region5
  $region4: #{graph_encoder_forward.7} parent=0 // pred_region
    _
  $region5: #{graph_encoder_forward.7} parent=0 // pred_fallthru
    _
  // Predicated region
  $region6: #{graph_encoder_forward.7} parent=0 // pred_check
    _
  $region7: #{graph_encoder_forward.7} parent=0 // pred_check_branch
    %11 = sbr.rel (0) target = $region9
  $region8: #{graph_encoder_forward.7} parent=0 // pred_region
    _
  $region9: #{graph_encoder_forward.7} parent=0 // pred_fallthru
    _
  // Predicated region
  $region10: #{graph_encoder_forward.7} parent=0 // pred_check
    _
  $region11: #{graph_encoder_forward.7} parent=0 // pred_check_branch
    %13 = sbr.rel (0) target = $region13
  $region12: #{graph_encoder_forward.7} parent=0 // pred_region
    _
  $region13: #{graph_encoder_forward.7} parent=0 // pred_fallthru
    _
  %v14 = vld [vmem:[%s0] sm:$0xf]
  %v15 = vld [vmem:[%s0 + $0x4] sm:$0xf]
  %v16 = vld [vmem:[%s0 + $0x8] sm:$0xf]
  %v17 = vld [vmem:[%s0 + $0xc] sm:$0xf]
  %v18 = vld [vmem:[%s0 + $0x10] sm:$0xf]
  %v19 = vld [vmem:[%s0 + $0x14] sm:$0xf]
  %v20 = vld [vmem:[%s0 + $0x18] sm:$0xf]
  %v21 = vld [vmem:[%s0 + $0x1c] sm:$0xf]
  %v22 = vld [vmem:[%s0 + $0x20] sm:$0xf]
  %v23 = vld [vmem:[%s0 + $0x24] sm:$0xf]
  %v24 = vld [vmem:[%s0 + $0x28] sm:$0xf]
  %v25 = vld [vmem:[%s0 + $0x2c] sm:$0xf]
  %v26 = vld [vmem:[%s0 + $0x30] sm:$0xf]
  %v27 = vld [vmem:[%s0 + $0x34] sm:$0xf]
  %v28 = vld [vmem:[%s0 + $0x38] sm:$0xf]
  %v29 = vld [vmem:[%s0 + $0x3c] sm:$0xf]
  %v30 = vld [vmem:[%s0 + $0x40] sm:$0xf]
  %v31 = vld [vmem:[%s0 + $0x44] sm:$0xf]
  %v32 = vld [vmem:[%s0 + $0x48] sm:$0xf]
  %v33 = vld [vmem:[%s0 + $0x4c] sm:$0xf]
  %v34 = vld [vmem:[%s0 + $0x50] sm:$0xf]
  %v35 = vld [vmem:[%s0 + $0x54] sm:$0xf]
  %v36 = vld [vmem:[%s0 + $0x58] sm:$0xf]
  %v37 = vld [vmem:[%s0 + $0x5c] sm:$0xf]
  %v38 = vld [vmem:[%s0 + $0x60] sm:$0xf]
  %v39 = vld [vmem:[%s0 + $0x64] sm:$0xf]
  %v40 = vld [vmem:[%s0 + $0x68] sm:$0xf]
  %v41 = vld [vmem:[%s0 + $0x6c] sm:$0xf]
  %v42 = vld [vmem:[%s0 + $0x70] sm:$0xf]
  %v43 = vld [vmem:[%s0 + $0x74] sm:$0xf]
  %v44 = vld [vmem:[%s0 + $0x78] sm:$0xf]
  %v45 = vld [vmem:[%s0 + $0x7c] sm:$0xf]
  %v46 = vld [vmem:[%s0 + $0x80] sm:$0xf]
  %v47 = vld [vmem:[%s0 + $0x84] sm:$0xf]
  %v48 = vld [vmem:[%s0 + $0x88] sm:$0xf]
  %v49 = vld [vmem:[%s0 + $0x8c] sm:$0xf]
  %v50 = vld [vmem:[%s0 + $0x90] sm:$0xf]
  %v51 = vld [vmem:[%s0 + $0x94] sm:$0xf]
  %v52 = vld [vmem:[%s0 + $0x98] sm:$0xf]
  %v53 = vld [vmem:[%s0 + $0x9c] sm:$0xf]
  %v54 = vld [vmem:[%s0 + $0xa0] sm:$0xf]
  %v55 = vld [vmem:[%s0 + $0xa4] sm:$0xf]
  %v56 = vld [vmem:[%s0 + $0xa8] sm:$0xf]
  %v57 = vld [vmem:[%s0 + $0xac] sm:$0xf]
  %v58 = vld [vmem:[%s0 + $0xb0] sm:$0xf]
  %v59 = vld [vmem:[%s0 + $0xb4] sm:$0xf]
  %v60 = vld [vmem:[%s0 + $0xb8] sm:$0xf]
  %v61 = vld [vmem:[%s0 + $0xbc] sm:$0xf]
  %v62 = vld [vmem:[%s0 + $0xc0] sm:$0xf]
  %v63 = vld [vmem:[%s0 + $0xc4] sm:$0xf]
  %v64 = vld [vmem:[%s0 + $0xc8] sm:$0xf]
  %v65 = vld [vmem:[%s0 + $0xcc] sm:$0xf]
  %v66 = vld [vmem:[%s0 + $0xd0] sm:$0xf]
  %v67 = vld [vmem:[%s0 + $0xd4] sm:$0xf]
  %v68 = vld [vmem:[%s0 + $0xd8] sm:$0xf]
  %v69 = vld [vmem:[%s0 + $0xdc] sm:$0xf]
  %v70 = vld [vmem:[%s0 + $0xe0] sm:$0xf]
  %v71 = vld [vmem:[%s0 + $0xe4] sm:$0xf]
  %v72 = vld [vmem:[%s0 + $0xe8] sm:$0xf]
  %v73 = vld [vmem:[%s0 + $0xec] sm:$0xf]
  %v74 = vld [vmem:[%s0 + $0xf0] sm:$0xf]
  %v75 = vld [vmem:[%s0 + $0xf4] sm:$0xf]
  %v76 = vld [vmem:[%s0 + $0xf8] sm:$0xf]
  %v77 = vld [vmem:[%s0 + $0xfc] sm:$0xf]
  %v78 = vld [vmem:[%s1] sm:$0xf]
  %v79 = vld [vmem:[%s1 + $0x4] sm:$0xf]
  %v80 = vld [vmem:[%s1 + $0x8] sm:$0xf]
  %v81 = vld [vmem:[%s1 + $0xc] sm:$0xf]
  %v82 = vld [vmem:[%s1 + $0x10] sm:$0xf]
  %v83 = vld [vmem:[%s1 + $0x14] sm:$0xf]
  %v84 = vld [vmem:[%s1 + $0x18] sm:$0xf]
  %v85 = vld [vmem:[%s1 + $0x1c] sm:$0xf]
  %v86 = vld [vmem:[%s1 + $0x20] sm:$0xf]
  %v87 = vld [vmem:[%s1 + $0x24] sm:$0xf]
  %v88 = vld [vmem:[%s1 + $0x28] sm:$0xf]
  %v89 = vld [vmem:[%s1 + $0x2c] sm:$0xf]
  %v90 = vld [vmem:[%s1 + $0x30] sm:$0xf]
  %v91 = vld [vmem:[%s1 + $0x34] sm:$0xf]
  %v92 = vld [vmem:[%s1 + $0x38] sm:$0xf]
  %v93 = vld [vmem:[%s1 + $0x3c] sm:$0xf]
  %v94 = vld [vmem:[%s2] sm:$0x1]
  %v96 = vperm.slane %v94, 0
  %v162 = vunpack.c.l.b16 %v14
  %v163 = vunpack.c.l.b16 %v15
  %v164 = vunpack.c.l.b16 %v16
  %v165 = vunpack.c.l.b16 %v17
  %v166 = vunpack.c.l.b16 %v18
  %v167 = vunpack.c.l.b16 %v19
  %v168 = vunpack.c.l.b16 %v20
  %v169 = vunpack.c.l.b16 %v21
  %v170 = vunpack.c.l.b16 %v22
  %v171 = vunpack.c.l.b16 %v23
  %v172 = vunpack.c.l.b16 %v24
  %v173 = vunpack.c.l.b16 %v25
  %v174 = vunpack.c.l.b16 %v26
  %v175 = vunpack.c.l.b16 %v27
  %v176 = vunpack.c.l.b16 %v28
  %v177 = vunpack.c.l.b16 %v29
  %v178 = vunpack.c.l.b16 %v30
  %v179 = vunpack.c.l.b16 %v31
  %v180 = vunpack.c.l.b16 %v32
  %v181 = vunpack.c.l.b16 %v33
  %v182 = vunpack.c.l.b16 %v34
  %v183 = vunpack.c.l.b16 %v35
  %v184 = vunpack.c.l.b16 %v36
  %v185 = vunpack.c.l.b16 %v37
  %v186 = vunpack.c.l.b16 %v38
  %v187 = vunpack.c.l.b16 %v39
  %v188 = vunpack.c.l.b16 %v40
  %v189 = vunpack.c.l.b16 %v41
  %v190 = vunpack.c.l.b16 %v42
  %v191 = vunpack.c.l.b16 %v43
  %v192 = vunpack.c.l.b16 %v44
  %v193 = vunpack.c.l.b16 %v45
  %v194 = vunpack.c.l.b16 %v46
  %v195 = vunpack.c.l.b16 %v47
  %v196 = vunpack.c.l.b16 %v48
  %v197 = vunpack.c.l.b16 %v49
  %v198 = vunpack.c.l.b16 %v50
  %v199 = vunpack.c.l.b16 %v51
  %v200 = vunpack.c.l.b16 %v52
  %v201 = vunpack.c.l.b16 %v53
  %v202 = vunpack.c.l.b16 %v54
  %v203 = vunpack.c.l.b16 %v55
  %v204 = vunpack.c.l.b16 %v56
  %v205 = vunpack.c.l.b16 %v57
  %v206 = vunpack.c.l.b16 %v58
  %v207 = vunpack.c.l.b16 %v59
  %v208 = vunpack.c.l.b16 %v60
  %v209 = vunpack.c.l.b16 %v61
  %v210 = vunpack.c.l.b16 %v62
  %v211 = vunpack.c.l.b16 %v63
  %v212 = vunpack.c.l.b16 %v64
  %v213 = vunpack.c.l.b16 %v65
  %v214 = vunpack.c.l.b16 %v66
  %v215 = vunpack.c.l.b16 %v67
  %v216 = vunpack.c.l.b16 %v68
  %v217 = vunpack.c.l.b16 %v69
  %v218 = vunpack.c.l.b16 %v70
  %v219 = vunpack.c.l.b16 %v71
  %v220 = vunpack.c.l.b16 %v72
  %v221 = vunpack.c.l.b16 %v73
  %v222 = vunpack.c.l.b16 %v74
  %v223 = vunpack.c.l.b16 %v75
  %v224 = vunpack.c.l.b16 %v76
  %v225 = vunpack.c.l.b16 %v77
  %v226 = vpack.c.b16 %v163, %v162
  %v227 = vpack.c.b16 %v165, %v164
  %v228 = vpack.c.b16 %v167, %v166
  %v229 = vpack.c.b16 %v169, %v168
  %v230 = vpack.c.b16 %v171, %v170
  %v231 = vpack.c.b16 %v173, %v172
  %v232 = vpack.c.b16 %v175, %v174
  %v233 = vpack.c.b16 %v177, %v176
  %v234 = vpack.c.b16 %v179, %v178
  %v235 = vpack.c.b16 %v181, %v180
  %v236 = vpack.c.b16 %v183, %v182
  %v237 = vpack.c.b16 %v185, %v184
  %v238 = vpack.c.b16 %v187, %v186
  %v239 = vpack.c.b16 %v189, %v188
  %v240 = vpack.c.b16 %v191, %v190
  %v241 = vpack.c.b16 %v193, %v192
  %v242 = vpack.c.b16 %v195, %v194
  %v243 = vpack.c.b16 %v197, %v196
  %v244 = vpack.c.b16 %v199, %v198
  %v245 = vpack.c.b16 %v201, %v200
  %v246 = vpack.c.b16 %v203, %v202
  %v247 = vpack.c.b16 %v205, %v204
  %v248 = vpack.c.b16 %v207, %v206
  %v249 = vpack.c.b16 %v209, %v208
  %v250 = vpack.c.b16 %v211, %v210
  %v251 = vpack.c.b16 %v213, %v212
  %v252 = vpack.c.b16 %v215, %v214
  %v253 = vpack.c.b16 %v217, %v216
  %v254 = vpack.c.b16 %v219, %v218
  %v255 = vpack.c.b16 %v221, %v220
  %v256 = vpack.c.b16 %v223, %v222
  %v257 = vpack.c.b16 %v225, %v224
  %v306 = vunpack.c.l.b16 %v78
  %v307 = vunpack.c.l.b16 %v79
  %v308 = vunpack.c.l.b16 %v80
  %v309 = vunpack.c.l.b16 %v81
  %v310 = vunpack.c.l.b16 %v82
  %v311 = vunpack.c.l.b16 %v83
  %v312 = vunpack.c.l.b16 %v84
  %v313 = vunpack.c.l.b16 %v85
  %v314 = vunpack.c.l.b16 %v86
  %v315 = vunpack.c.l.b16 %v87
  %v316 = vunpack.c.l.b16 %v88
  %v317 = vunpack.c.l.b16 %v89
  %v318 = vunpack.c.l.b16 %v90
  %v319 = vunpack.c.l.b16 %v91
  %v320 = vunpack.c.l.b16 %v92
  %v321 = vunpack.c.l.b16 %v93
  %v322 = vpack.c.b16 %v307, %v306
  %v323 = vpack.c.b16 %v309, %v308
  %v324 = vpack.c.b16 %v311, %v310
  %v325 = vpack.c.b16 %v313, %v312
  %v326 = vpack.c.b16 %v315, %v314
  %v327 = vpack.c.b16 %v317, %v316
  %v328 = vpack.c.b16 %v319, %v318
  %v329 = vpack.c.b16 %v321, %v320
  %338 = vmatpush.bf16.msra.mxu0 %v329
  %339 = vmatpush.bf16.msra.mxu0 %v328
  %340 = vmatpush.bf16.msra.mxu0 %v327
  %341 = vmatpush.bf16.msra.mxu0 %v326
  %342 = vmatpush.bf16.msra.mxu0 %v325
  %343 = vmatpush.bf16.msra.mxu0 %v324
  %344 = vmatpush.bf16.msra.mxu0 %v323
  %345 = vmatpush.bf16.msra.mxu0 %v322
  %346 = vmatmul.bf16.gmra.mxu0 %v226
  %v347 = vpop.f32.mrf.mxu0
  %v348 = vadd.f32 %v96, %v347
  %v349 = vpop.f32.mrf.mxu0
  %v350 = vadd.f32 %v96, %v349
  %351 = vmatmul.bf16.gmra.mxu0 %v227
  %v352 = vpop.f32.mrf.mxu0
  %v353 = vadd.f32 %v96, %v352
  %v354 = vpop.f32.mrf.mxu0
  %v355 = vadd.f32 %v96, %v354
  %356 = vmatmul.bf16.gmra.mxu0 %v228
  %v357 = vpop.f32.mrf.mxu0
  %v358 = vadd.f32 %v96, %v357
  %v359 = vpop.f32.mrf.mxu0
  %v360 = vadd.f32 %v96, %v359
  %361 = vmatmul.bf16.gmra.mxu0 %v229
  %v362 = vpop.f32.mrf.mxu0
  %v363 = vadd.f32 %v96, %v362
  %v364 = vpop.f32.mrf.mxu0
  %v365 = vadd.f32 %v96, %v364
  %366 = vmatmul.bf16.gmra.mxu0 %v230
  %v367 = vpop.f32.mrf.mxu0
  %v368 = vadd.f32 %v96, %v367
  %v369 = vpop.f32.mrf.mxu0
  %v370 = vadd.f32 %v96, %v369
  %371 = vmatmul.bf16.gmra.mxu0 %v231
  %v372 = vpop.f32.mrf.mxu0
  %v373 = vadd.f32 %v96, %v372
  %v374 = vpop.f32.mrf.mxu0
  %v375 = vadd.f32 %v96, %v374
  %376 = vmatmul.bf16.gmra.mxu0 %v232
  %v377 = vpop.f32.mrf.mxu0
  %v378 = vadd.f32 %v96, %v377
  %v379 = vpop.f32.mrf.mxu0
  %v380 = vadd.f32 %v96, %v379
  %381 = vmatmul.bf16.gmra.mxu0 %v233
  %v382 = vpop.f32.mrf.mxu0
  %v383 = vadd.f32 %v96, %v382
  %v384 = vpop.f32.mrf.mxu0
  %v385 = vadd.f32 %v96, %v384
  %386 = vmatmul.bf16.gmra.mxu0 %v234
  %v387 = vpop.f32.mrf.mxu0
  %v388 = vadd.f32 %v96, %v387
  %v389 = vpop.f32.mrf.mxu0
  %v390 = vadd.f32 %v96, %v389
  %391 = vmatmul.bf16.gmra.mxu0 %v235
  %v392 = vpop.f32.mrf.mxu0
  %v393 = vadd.f32 %v96, %v392
  %v394 = vpop.f32.mrf.mxu0
  %v395 = vadd.f32 %v96, %v394
  %396 = vmatmul.bf16.gmra.mxu0 %v236
  %v397 = vpop.f32.mrf.mxu0
  %v398 = vadd.f32 %v96, %v397
  %v399 = vpop.f32.mrf.mxu0
  %v400 = vadd.f32 %v96, %v399
  %401 = vmatmul.bf16.gmra.mxu0 %v237
  %v402 = vpop.f32.mrf.mxu0
  %v403 = vadd.f32 %v96, %v402
  %v404 = vpop.f32.mrf.mxu0
  %v405 = vadd.f32 %v96, %v404
  %406 = vmatmul.bf16.gmra.mxu0 %v238
  %v407 = vpop.f32.mrf.mxu0
  %v408 = vadd.f32 %v96, %v407
  %v409 = vpop.f32.mrf.mxu0
  %v410 = vadd.f32 %v96, %v409
  %411 = vmatmul.bf16.gmra.mxu0 %v239
  %v412 = vpop.f32.mrf.mxu0
  %v413 = vadd.f32 %v96, %v412
  %v414 = vpop.f32.mrf.mxu0
  %v415 = vadd.f32 %v96, %v414
  %416 = vmatmul.bf16.gmra.mxu0 %v240
  %v417 = vpop.f32.mrf.mxu0
  %v418 = vadd.f32 %v96, %v417
  %v419 = vpop.f32.mrf.mxu0
  %v420 = vadd.f32 %v96, %v419
  %421 = vmatmul.bf16.gmra.mxu0 %v241
  %v422 = vpop.f32.mrf.mxu0
  %v423 = vadd.f32 %v96, %v422
  %v424 = vpop.f32.mrf.mxu0
  %v425 = vadd.f32 %v96, %v424
  %426 = vmatmul.bf16.gmra.mxu0 %v242
  %v427 = vpop.f32.mrf.mxu0
  %v428 = vadd.f32 %v96, %v427
  %v429 = vpop.f32.mrf.mxu0
  %v430 = vadd.f32 %v96, %v429
  %431 = vmatmul.bf16.gmra.mxu0 %v243
  %v432 = vpop.f32.mrf.mxu0
  %v433 = vadd.f32 %v96, %v432
  %v434 = vpop.f32.mrf.mxu0
  %v435 = vadd.f32 %v96, %v434
  %436 = vmatmul.bf16.gmra.mxu0 %v244
  %v437 = vpop.f32.mrf.mxu0
  %v438 = vadd.f32 %v96, %v437
  %v439 = vpop.f32.mrf.mxu0
  %v440 = vadd.f32 %v96, %v439
  %441 = vmatmul.bf16.gmra.mxu0 %v245
  %v442 = vpop.f32.mrf.mxu0
  %v443 = vadd.f32 %v96, %v442
  %v444 = vpop.f32.mrf.mxu0
  %v445 = vadd.f32 %v96, %v444
  %446 = vmatmul.bf16.gmra.mxu0 %v246
  %v447 = vpop.f32.mrf.mxu0
  %v448 = vadd.f32 %v96, %v447
  %v449 = vpop.f32.mrf.mxu0
  %v450 = vadd.f32 %v96, %v449
  %451 = vmatmul.bf16.gmra.mxu0 %v247
  %v452 = vpop.f32.mrf.mxu0
  %v453 = vadd.f32 %v96, %v452
  %v454 = vpop.f32.mrf.mxu0
  %v455 = vadd.f32 %v96, %v454
  %456 = vmatmul.bf16.gmra.mxu0 %v248
  %v457 = vpop.f32.mrf.mxu0
  %v458 = vadd.f32 %v96, %v457
  %v459 = vpop.f32.mrf.mxu0
  %v460 = vadd.f32 %v96, %v459
  %461 = vmatmul.bf16.gmra.mxu0 %v249
  %v462 = vpop.f32.mrf.mxu0
  %v463 = vadd.f32 %v96, %v462
  %v464 = vpop.f32.mrf.mxu0
  %v465 = vadd.f32 %v96, %v464
  %466 = vmatmul.bf16.gmra.mxu0 %v250
  %v467 = vpop.f32.mrf.mxu0
  %v468 = vadd.f32 %v96, %v467
  %v469 = vpop.f32.mrf.mxu0
  %v470 = vadd.f32 %v96, %v469
  %471 = vmatmul.bf16.gmra.mxu0 %v251
  %v472 = vpop.f32.mrf.mxu0
  %v473 = vadd.f32 %v96, %v472
  %v474 = vpop.f32.mrf.mxu0
  %v475 = vadd.f32 %v96, %v474
  %476 = vmatmul.bf16.gmra.mxu0 %v252
  %v477 = vpop.f32.mrf.mxu0
  %v478 = vadd.f32 %v96, %v477
  %v479 = vpop.f32.mrf.mxu0
  %v480 = vadd.f32 %v96, %v479
  %481 = vmatmul.bf16.gmra.mxu0 %v253
  %v482 = vpop.f32.mrf.mxu0
  %v483 = vadd.f32 %v96, %v482
  %v484 = vpop.f32.mrf.mxu0
  %v485 = vadd.f32 %v96, %v484
  %486 = vmatmul.bf16.gmra.mxu0 %v254
  %v487 = vpop.f32.mrf.mxu0
  %v488 = vadd.f32 %v96, %v487
  %v489 = vpop.f32.mrf.mxu0
  %v490 = vadd.f32 %v96, %v489
  %491 = vmatmul.bf16.gmra.mxu0 %v255
  %v492 = vpop.f32.mrf.mxu0
  %v493 = vadd.f32 %v96, %v492
  %v494 = vpop.f32.mrf.mxu0
  %v495 = vadd.f32 %v96, %v494
  %496 = vmatmul.bf16.gmra.mxu0 %v256
  %v497 = vpop.f32.mrf.mxu0
  %v498 = vadd.f32 %v96, %v497
  %v499 = vpop.f32.mrf.mxu0
  %v500 = vadd.f32 %v96, %v499
  %501 = vmatmul.bf16.gmra.mxu0 %v257
  %v502 = vpop.f32.mrf.mxu0
  %v503 = vadd.f32 %v96, %v502
  %v504 = vpop.f32.mrf.mxu0
  %v505 = vadd.f32 %v96, %v504
  %506 = vdwg.mxu0
  %v507 = vpack.c.bf16 %v348, %v348
  %v508 = vpack.c.bf16 %v350, %v350
  %v509 = vpack.c.bf16 %v353, %v353
  %v510 = vpack.c.bf16 %v355, %v355
  %v511 = vpack.c.bf16 %v358, %v358
  %v512 = vpack.c.bf16 %v360, %v360
  %v513 = vpack.c.bf16 %v363, %v363
  %v514 = vpack.c.bf16 %v365, %v365
  %v515 = vpack.c.bf16 %v368, %v368
  %v516 = vpack.c.bf16 %v370, %v370
  %v517 = vpack.c.bf16 %v373, %v373
  %v518 = vpack.c.bf16 %v375, %v375
  %v519 = vpack.c.bf16 %v378, %v378
  %v520 = vpack.c.bf16 %v380, %v380
  %v521 = vpack.c.bf16 %v383, %v383
  %v522 = vpack.c.bf16 %v385, %v385
  %v523 = vpack.c.bf16 %v388, %v388
  %v524 = vpack.c.bf16 %v390, %v390
  %v525 = vpack.c.bf16 %v393, %v393
  %v526 = vpack.c.bf16 %v395, %v395
  %v527 = vpack.c.bf16 %v398, %v398
  %v528 = vpack.c.bf16 %v400, %v400
  %v529 = vpack.c.bf16 %v403, %v403
  %v530 = vpack.c.bf16 %v405, %v405
  %v531 = vpack.c.bf16 %v408, %v408
  %v532 = vpack.c.bf16 %v410, %v410
  %v533 = vpack.c.bf16 %v413, %v413
  %v534 = vpack.c.bf16 %v415, %v415
  %v535 = vpack.c.bf16 %v418, %v418
  %v536 = vpack.c.bf16 %v420, %v420
  %v537 = vpack.c.bf16 %v423, %v423
  %v538 = vpack.c.bf16 %v425, %v425
  %v539 = vpack.c.bf16 %v428, %v428
  %v540 = vpack.c.bf16 %v430, %v430
  %v541 = vpack.c.bf16 %v433, %v433
  %v542 = vpack.c.bf16 %v435, %v435
  %v543 = vpack.c.bf16 %v438, %v438
  %v544 = vpack.c.bf16 %v440, %v440
  %v545 = vpack.c.bf16 %v443, %v443
  %v546 = vpack.c.bf16 %v445, %v445
  %v547 = vpack.c.bf16 %v448, %v448
  %v548 = vpack.c.bf16 %v450, %v450
  %v549 = vpack.c.bf16 %v453, %v453
  %v550 = vpack.c.bf16 %v455, %v455
  %v551 = vpack.c.bf16 %v458, %v458
  %v552 = vpack.c.bf16 %v460, %v460
  %v553 = vpack.c.bf16 %v463, %v463
  %v554 = vpack.c.bf16 %v465, %v465
  %v555 = vpack.c.bf16 %v468, %v468
  %v556 = vpack.c.bf16 %v470, %v470
  %v557 = vpack.c.bf16 %v473, %v473
  %v558 = vpack.c.bf16 %v475, %v475
  %v559 = vpack.c.bf16 %v478, %v478
  %v560 = vpack.c.bf16 %v480, %v480
  %v561 = vpack.c.bf16 %v483, %v483
  %v562 = vpack.c.bf16 %v485, %v485
  %v563 = vpack.c.bf16 %v488, %v488
  %v564 = vpack.c.bf16 %v490, %v490
  %v565 = vpack.c.bf16 %v493, %v493
  %v566 = vpack.c.bf16 %v495, %v495
  %v567 = vpack.c.bf16 %v498, %v498
  %v568 = vpack.c.bf16 %v500, %v500
  %v569 = vpack.c.bf16 %v503, %v503
  %v570 = vpack.c.bf16 %v505, %v505
  %571 = vst [vmem:[%s3] sm:$0xf] %v507
  %572 = vst [vmem:[%s3 + $0x4] sm:$0xf] %v508
  %573 = vst [vmem:[%s3 + $0x8] sm:$0xf] %v509
  %574 = vst [vmem:[%s3 + $0xc] sm:$0xf] %v510
  %575 = vst [vmem:[%s3 + $0x10] sm:$0xf] %v511
  %576 = vst [vmem:[%s3 + $0x14] sm:$0xf] %v512
  %577 = vst [vmem:[%s3 + $0x18] sm:$0xf] %v513
  %578 = vst [vmem:[%s3 + $0x1c] sm:$0xf] %v514
  %579 = vst [vmem:[%s3 + $0x20] sm:$0xf] %v515
  %580 = vst [vmem:[%s3 + $0x24] sm:$0xf] %v516
  %581 = vst [vmem:[%s3 + $0x28] sm:$0xf] %v517
  %582 = vst [vmem:[%s3 + $0x2c] sm:$0xf] %v518
  %583 = vst [vmem:[%s3 + $0x30] sm:$0xf] %v519
  %584 = vst [vmem:[%s3 + $0x34] sm:$0xf] %v520
  %585 = vst [vmem:[%s3 + $0x38] sm:$0xf] %v521
  %586 = vst [vmem:[%s3 + $0x3c] sm:$0xf] %v522
  %587 = vst [vmem:[%s3 + $0x40] sm:$0xf] %v523
  %588 = vst [vmem:[%s3 + $0x44] sm:$0xf] %v524
  %589 = vst [vmem:[%s3 + $0x48] sm:$0xf] %v525
  %590 = vst [vmem:[%s3 + $0x4c] sm:$0xf] %v526
  %591 = vst [vmem:[%s3 + $0x50] sm:$0xf] %v527
  %592 = vst [vmem:[%s3 + $0x54] sm:$0xf] %v528
  %593 = vst [vmem:[%s3 + $0x58] sm:$0xf] %v529
  %594 = vst [vmem:[%s3 + $0x5c] sm:$0xf] %v530
  %595 = vst [vmem:[%s3 + $0x60] sm:$0xf] %v531
  %596 = vst [vmem:[%s3 + $0x64] sm:$0xf] %v532
  %597 = vst [vmem:[%s3 + $0x68] sm:$0xf] %v533
  %598 = vst [vmem:[%s3 + $0x6c] sm:$0xf] %v534
  %599 = vst [vmem:[%s3 + $0x70] sm:$0xf] %v535
  %600 = vst [vmem:[%s3 + $0x74] sm:$0xf] %v536
  %601 = vst [vmem:[%s3 + $0x78] sm:$0xf] %v537
  %602 = vst [vmem:[%s3 + $0x7c] sm:$0xf] %v538
  %603 = vst [vmem:[%s3 + $0x80] sm:$0xf] %v539
  %604 = vst [vmem:[%s3 + $0x84] sm:$0xf] %v540
  %605 = vst [vmem:[%s3 + $0x88] sm:$0xf] %v541
  %606 = vst [vmem:[%s3 + $0x8c] sm:$0xf] %v542
  %607 = vst [vmem:[%s3 + $0x90] sm:$0xf] %v543
  %608 = vst [vmem:[%s3 + $0x94] sm:$0xf] %v544
  %609 = vst [vmem:[%s3 + $0x98] sm:$0xf] %v545
  %610 = vst [vmem:[%s3 + $0x9c] sm:$0xf] %v546
  %611 = vst [vmem:[%s3 + $0xa0] sm:$0xf] %v547
  %612 = vst [vmem:[%s3 + $0xa4] sm:$0xf] %v548
  %613 = vst [vmem:[%s3 + $0xa8] sm:$0xf] %v549
  %614 = vst [vmem:[%s3 + $0xac] sm:$0xf] %v550
  %615 = vst [vmem:[%s3 + $0xb0] sm:$0xf] %v551
  %616 = vst [vmem:[%s3 + $0xb4] sm:$0xf] %v552
  %617 = vst [vmem:[%s3 + $0xb8] sm:$0xf] %v553
  %618 = vst [vmem:[%s3 + $0xbc] sm:$0xf] %v554
  %619 = vst [vmem:[%s3 + $0xc0] sm:$0xf] %v555
  %620 = vst [vmem:[%s3 + $0xc4] sm:$0xf] %v556
  %621 = vst [vmem:[%s3 + $0xc8] sm:$0xf] %v557
  %622 = vst [vmem:[%s3 + $0xcc] sm:$0xf] %v558
  %623 = vst [vmem:[%s3 + $0xd0] sm:$0xf] %v559
  %624 = vst [vmem:[%s3 + $0xd4] sm:$0xf] %v560
  %625 = vst [vmem:[%s3 + $0xd8] sm:$0xf] %v561
  %626 = vst [vmem:[%s3 + $0xdc] sm:$0xf] %v562
  %627 = vst [vmem:[%s3 + $0xe0] sm:$0xf] %v563
  %628 = vst [vmem:[%s3 + $0xe4] sm:$0xf] %v564
  %629 = vst [vmem:[%s3 + $0xe8] sm:$0xf] %v565
  %630 = vst [vmem:[%s3 + $0xec] sm:$0xf] %v566
  %631 = vst [vmem:[%s3 + $0xf0] sm:$0xf] %v567
  %632 = vst [vmem:[%s3 + $0xf4] sm:$0xf] %v568
  %633 = vst [vmem:[%s3 + $0xf8] sm:$0xf] %v569
  %634 = vst [vmem:[%s3 + $0xfc] sm:$0xf] %v570
  // Predicated region
  $region14: #{graph_encoder_forward.7} parent=0 // pred_check
    _
  $region15: #{graph_encoder_forward.7} parent=0 // pred_check_branch
    %636 = sbr.rel (0) target = $region17
  $region16: #{graph_encoder_forward.7} parent=0 // pred_region
    _
  $region17: #{graph_encoder_forward.7} parent=0 // pred_fallthru
    _
  // Predicated region
  $region18: #{graph_encoder_forward.7} parent=0 // pred_check
    _
  $region19: #{graph_encoder_forward.7} parent=0 // pred_check_branch
    %638 = sbr.rel (0) target = $region21
  $region20: #{graph_encoder_forward.7} parent=0 // pred_region
    _
  $region21: #{graph_encoder_forward.7} parent=0 // pred_fallthru
    _

// kernel: graph_encoder_forward.8
$region0: #{graph_encoder_forward.8}
  #allocation0 [shape = 'u32[]', space=smem, size = 0x4, offset = 0x4, fixed_abs, tag = 'smem constant byte address 0x4 - core index']
  #allocation1 [shape = 'u32[72,128]{1,0:T(1,128)}', space=vmem, size = 0x9000, scoped, tag = 'internal scratch']
  %s0 = inlined_call_operand.vmem [shape: bf16[512,512], index: 0, kind: input, shape index: {}]
  %s1 = inlined_call_operand.vmem [shape: bf16[512,128], index: 1, kind: input, shape index: {}]
  %s2 = inlined_call_operand.vmem [shape: f32[512,128], index: 2, kind: output, shape index: {}]
  %s3 = sld [smem:[#allocation0]]
  $region45: #{graph_encoder_forward.8} parent=0
    _
  %s5 = ssub.s32 1, %s3
  %s6 = scalar_select 0, %s5, %s3
  loop: start=0, step=1, limit=4
  $region2: #{graph_encoder_forward.8} parent=0 // loop_pre_header
    _
  $region3: #{graph_encoder_forward.8} parent=0 // loop_header
    %s8 = sphi 0, %s12
    %p9 = scmp.ge.s32.totalorder %s8, 4
    %s15 = sphi 0, %s27
    %s16 = sphi 0, %s23
    %s17 = sphi 0, %s15
    %s18 = sphi 0, %s16
    %s19 = sphi 0, %s17
    %s20 = sphi 0, %s18
    %s32 = sphi 0, %s34
    %s35 = sphi 0, %s32
    %s36 = sphi 0, %s35
    %s52 = sphi 0, %s36
    %s56 = sphi 0, %s56
    %s58 = sphi 0, %s56
    %s59 = sphi 0, %s58
    %s73 = sphi 0, %s59
    %s79 = sphi 0, %s81
    %s82 = sphi 0, %s79
    %s83 = sphi 0, %s82
    %s99 = sphi 0, %s83
  $region4: #{graph_encoder_forward.8} parent=0 // loop_header_branch
    %11 = sbr.rel (%p9) target = $region8
  $region5: #{graph_encoder_forward.8} parent=0 // loop_body
    %s13 = ssub.s32 %s8, 1
    %s14 = ssub.s32 %s8, 2
    %s21 = sadd.s32 1, %s16
    %p22 = scmp.ge.s32.totalorder %s21, 1
    %s23 = scalar_select %p22, 0, %s21
    %s24 = sadd.s32 1, %s15
    %s25 = scalar_select %p22, %s24, %s15
    %p26 = scmp.ge.s32.totalorder %s25, 2
    %s27 = scalar_select %p26, 0, %s25
    %s28 = ssub.s32 %s15, %s27
    %s29 = ssub.s32 %s16, %s23
    %s30 = sor.u32 %s28, %s29
    %p31 = scmp.eq.s32.totalorder %s30, 0
    %s33 = sadd.s32 %s32, 1
    %s34 = scalar_select %p31, %s32, %s33
    %p37 = pneg %p31
    %p38 = scmp.eq.s32.totalorder %s8, 1
    %p39 = por %p37, %p38
    %p40 = scmp.ne.s32.totalorder %s32, %s35
    %p41 = scmp.eq.s32.totalorder %s8, 0
    %p42 = por %p40, %p41
    %p43 = scmp.ne.s32.totalorder %s32, %s35
    %p44 = scmp.eq.s32.totalorder %s13, 1
    %p45 = por %p43, %p44
    %p46 = scmp.ne.s32.totalorder %s35, %s36
    %p47 = scmp.eq.s32.totalorder %s13, 0
    %p48 = por %p46, %p47
    %p49 = scmp.ne.s32.totalorder %s35, %s36
    %p50 = scmp.eq.s32.totalorder %s14, 1
    %p51 = por %p49, %p50
    %p53 = scmp.ne.s32.totalorder %s36, %s52
    %p54 = scmp.eq.s32.totalorder %s14, 0
    %p55 = por %p53, %p54
    %s57 = sadd.s32 %s56, 1
    %p60 = scmp.eq.s32.totalorder %s8, 1
    %p61 = scmp.ne.s32.totalorder %s56, %s58
    %p62 = scmp.eq.s32.totalorder %s8, 0
    %p63 = por %p61, %p62
    %p64 = scmp.ne.s32.totalorder %s56, %s58
    %p65 = scmp.eq.s32.totalorder %s13, 1
    %p66 = por %p64, %p65
    %p67 = scmp.ne.s32.totalorder %s58, %s59
    %p68 = scmp.eq.s32.totalorder %s13, 0
    %p69 = por %p67, %p68
    %p70 = scmp.ne.s32.totalorder %s58, %s59
    %p71 = scmp.eq.s32.totalorder %s14, 1
    %p72 = por %p70, %p71
    %p74 = scmp.ne.s32.totalorder %s59, %s73
    %p75 = scmp.eq.s32.totalorder %s14, 0
    %p76 = por %p74, %p75
    %s77 = ssub.s32 %s15, %s27
    %p78 = scmp.eq.s32.totalorder %s77, 0
    %s80 = sadd.s32 %s79, 1
    %s81 = scalar_select %p78, %s79, %s80
    %p84 = pneg %p78
    %p85 = scmp.eq.s32.totalorder %s8, 1
    %p86 = por %p84, %p85
    %p87 = scmp.ne.s32.totalorder %s79, %s82
    %p88 = scmp.eq.s32.totalorder %s8, 0
    %p89 = por %p87, %p88
    %p90 = scmp.ne.s32.totalorder %s79, %s82
    %p91 = scmp.eq.s32.totalorder %s13, 1
    %p92 = por %p90, %p91
    %p93 = scmp.ne.s32.totalorder %s82, %s83
    %p94 = scmp.eq.s32.totalorder %s13, 0
    %p95 = por %p93, %p94
    %p96 = scmp.ne.s32.totalorder %s82, %s83
    %p97 = scmp.eq.s32.totalorder %s14, 1
    %p98 = por %p96, %p97
    %p100 = scmp.ne.s32.totalorder %s83, %s99
    %p101 = scmp.eq.s32.totalorder %s14, 0
    %p102 = por %p100, %p101
    %p103 = scmp.le.s32.totalorder 1, %s8
    %p104 = scmp.lt.s32.totalorder %s8, 3
    %p105 = pnand %p103, %p104
    %p106 = pneg %p105
    // Predicated region
    $region9: #{graph_encoder_forward.8} parent=5 // pred_check
      _
    $region10: #{graph_encoder_forward.8} parent=5 // pred_check_branch
      %108 = sbr.rel (%p105) target = $region12
    $region11: #{graph_encoder_forward.8} parent=5 // pred_region
      %s109 = ssub.s32 %s8, 1
      // Predicated region
      $region13: #{graph_encoder_forward.8} parent=11 // pred_check
        %p110 = pneg %p69
      $region14: #{graph_encoder_forward.8} parent=11 // pred_check_branch
        %112 = sbr.rel (%p110) target = $region16
      $region15: #{graph_encoder_forward.8} parent=11 // pred_region
        _
      $region16: #{graph_encoder_forward.8} parent=11 // pred_fallthru
        _
    $region12: #{graph_encoder_forward.8} parent=5 // pred_fallthru
      _
    %p113 = scmp.lt.s32.totalorder %s8, 2
    // Predicated region
    $region17: #{graph_encoder_forward.8} parent=5 // pred_check
      %p114 = pneg %p113
    $region18: #{graph_encoder_forward.8} parent=5 // pred_check_branch
      %116 = sbr.rel (%p114) target = $region20
    $region19: #{graph_encoder_forward.8} parent=5 // pred_region
      // Predicated region
      $region21: #{graph_encoder_forward.8} parent=19 // pred_check
        %p117 = pneg %p42
      $region22: #{graph_encoder_forward.8} parent=19 // pred_check_branch
        %119 = sbr.rel (%p117) target = $region24
      $region23: #{graph_encoder_forward.8} parent=19 // pred_region
        %s120 = smul.u32 32, %s15
        %s121 = smul.u32 4, %s16
        %p122 = scmp.lt.s32.totalorder %s120, 63
        %s123 = scalar_select %p122, %s120, 63
        %p124 = scmp.lt.s32.totalorder %s121, 3
        %s125 = scalar_select %p124, %s121, 3
        %s126 = smul.addr %s123, 4
        %s127 = sadd.s32 %s125, %s126
        %s128 = smul.addr %s127, 4
        %s129 = scalar_lea.vmem %s0, %s128
        %s130 = smul.u32 32, %s15
        %s131 = smul.u32 4, %s16
      $region24: #{graph_encoder_forward.8} parent=19 // pred_fallthru
        _
    $region20: #{graph_encoder_forward.8} parent=5 // pred_fallthru
      _
    %p132 = scmp.le.s32.totalorder 1, %s8
    %p133 = scmp.lt.s32.totalorder %s8, 3
    %p134 = pnand %p132, %p133
    %p135 = pneg %p134
    // Predicated region
    $region25: #{graph_encoder_forward.8} parent=5 // pred_check
      _
    $region26: #{graph_encoder_forward.8} parent=5 // pred_check_branch
      %137 = sbr.rel (%p134) target = $region28
    $region27: #{graph_encoder_forward.8} parent=5 // pred_region
      %s138 = ssub.s32 %s8, 1
      %s139 = smul.u32 32, %s17
      %s140 = smul.u32 4, %s18
      %p141 = scmp.lt.s32.totalorder %s139, 63
      %s142 = scalar_select %p141, %s139, 63
      %p143 = scmp.lt.s32.totalorder %s140, 3
      %s144 = scalar_select %p143, %s140, 3
      %s145 = smul.addr %s142, 4
      %s146 = sadd.s32 %s144, %s145
      %s147 = smul.addr %s146, 4
      %s148 = scalar_lea.vmem %s0, %s147
      %p149 = pneg %p48
      %p150 = pneg %p45
      %p151 = pneg %p69
      %p152 = pneg %p66
      %p153 = pneg %p95
      %p154 = pneg %p92
      %s155 = smul.u32 32, %s17
      %p156 = scmp.lt.s32.totalorder %s155, 63
      %s157 = scalar_select %p156, %s155, 63
      %s158 = smul.addr %s157, 8
      %s159 = scalar_lea.vmem %s2, %s158
      %s160 = smul.u32 32, %s17
      %s161 = smul.u32 4, %s18
      %p162 = scmp.lt.s32.totalorder %s160, 63
      %s163 = scalar_select %p162, %s160, 63
      %p164 = scmp.lt.s32.totalorder %s161, 3
      %s165 = scalar_select %p164, %s161, 3
      %s166 = smul.addr %s163, 4
      %s167 = sadd.s32 %s165, %s166
      %s168 = smul.addr %s167, 4
      %s169 = scalar_lea.vmem %s0, %s168
      %s170 = smul.u32 32, %s17
      %s171 = smul.u32 4, %s18
      %s172 = smul.u32 32, %s17
      %p173 = scmp.lt.s32.totalorder %s172, 63
      %s174 = scalar_select %p173, %s172, 63
      %s175 = smul.addr %s174, 8
      %s176 = scalar_lea.vmem %s2, %s175
      %s177 = smul.u32 32, %s17
      %p178 = scmp.eq.s32.totalorder %s18, 0
      // Predicated region
      $region29: #{graph_encoder_forward.8} parent=27 // pred_check
        %p179 = pneg %p178
      $region30: #{graph_encoder_forward.8} parent=27 // pred_check_branch
        %181 = sbr.rel (%p179) target = $region32
      $region31: #{graph_encoder_forward.8} parent=27 // pred_region
        %182 = vst [vmem:[%s176] sm:$0xff] 0.0
        %183 = vst [vmem:[%s176 + $0x8] sm:$0xff] 0.0
        %184 = vst [vmem:[%s176 + $0x10] sm:$0xff] 0.0
        %185 = vst [vmem:[%s176 + $0x18] sm:$0xff] 0.0
        %186 = vst [vmem:[%s176 + $0x20] sm:$0xff] 0.0
        %187 = vst [vmem:[%s176 + $0x28] sm:$0xff] 0.0
        %188 = vst [vmem:[%s176 + $0x30] sm:$0xff] 0.0
        %189 = vst [vmem:[%s176 + $0x38] sm:$0xff] 0.0
        %190 = vst [vmem:[%s176 + $0x40] sm:$0xff] 0.0
        %191 = vst [vmem:[%s176 + $0x48] sm:$0xff] 0.0
        %192 = vst [vmem:[%s176 + $0x50] sm:$0xff] 0.0
        %193 = vst [vmem:[%s176 + $0x58] sm:$0xff] 0.0
        %194 = vst [vmem:[%s176 + $0x60] sm:$0xff] 0.0
        %195 = vst [vmem:[%s176 + $0x68] sm:$0xff] 0.0
        %196 = vst [vmem:[%s176 + $0x70] sm:$0xff] 0.0
        %197 = vst [vmem:[%s176 + $0x78] sm:$0xff] 0.0
        %198 = vst [vmem:[%s176 + $0x80] sm:$0xff] 0.0
        %199 = vst [vmem:[%s176 + $0x88] sm:$0xff] 0.0
        %200 = vst [vmem:[%s176 + $0x90] sm:$0xff] 0.0
        %201 = vst [vmem:[%s176 + $0x98] sm:$0xff] 0.0
        %202 = vst [vmem:[%s176 + $0xa0] sm:$0xff] 0.0
        %203 = vst [vmem:[%s176 + $0xa8] sm:$0xff] 0.0
        %204 = vst [vmem:[%s176 + $0xb0] sm:$0xff] 0.0
        %205 = vst [vmem:[%s176 + $0xb8] sm:$0xff] 0.0
        %206 = vst [vmem:[%s176 + $0xc0] sm:$0xff] 0.0
        %207 = vst [vmem:[%s176 + $0xc8] sm:$0xff] 0.0
        %208 = vst [vmem:[%s176 + $0xd0] sm:$0xff] 0.0
        %209 = vst [vmem:[%s176 + $0xd8] sm:$0xff] 0.0
        %210 = vst [vmem:[%s176 + $0xe0] sm:$0xff] 0.0
        %211 = vst [vmem:[%s176 + $0xe8] sm:$0xff] 0.0
        %212 = vst [vmem:[%s176 + $0xf0] sm:$0xff] 0.0
        %213 = vst [vmem:[%s176 + $0xf8] sm:$0xff] 0.0
      $region32: #{graph_encoder_forward.8} parent=27 // pred_fallthru
        _
      %v214 = vld [vmem:[%s176] sm:$0xff]
      %v215 = vld [vmem:[%s176 + $0x8] sm:$0xff]
      %v216 = vld [vmem:[%s176 + $0x10] sm:$0xff]
      %v217 = vld [vmem:[%s176 + $0x18] sm:$0xff]
      %v218 = vld [vmem:[%s176 + $0x20] sm:$0xff]
      %v219 = vld [vmem:[%s176 + $0x28] sm:$0xff]
      %v220 = vld [vmem:[%s176 + $0x30] sm:$0xff]
      %v221 = vld [vmem:[%s176 + $0x38] sm:$0xff]
      %v222 = vld [vmem:[%s176 + $0x40] sm:$0xff]
      %v223 = vld [vmem:[%s176 + $0x48] sm:$0xff]
      %v224 = vld [vmem:[%s176 + $0x50] sm:$0xff]
      %v225 = vld [vmem:[%s176 + $0x58] sm:$0xff]
      %v226 = vld [vmem:[%s176 + $0x60] sm:$0xff]
      %v227 = vld [vmem:[%s176 + $0x68] sm:$0xff]
      %v228 = vld [vmem:[%s176 + $0x70] sm:$0xff]
      %v229 = vld [vmem:[%s176 + $0x78] sm:$0xff]
      %v230 = vld [vmem:[%s176 + $0x80] sm:$0xff]
      %v231 = vld [vmem:[%s176 + $0x88] sm:$0xff]
      %v232 = vld [vmem:[%s176 + $0x90] sm:$0xff]
      %v233 = vld [vmem:[%s176 + $0x98] sm:$0xff]
      %v234 = vld [vmem:[%s176 + $0xa0] sm:$0xff]
      %v235 = vld [vmem:[%s176 + $0xa8] sm:$0xff]
      %v236 = vld [vmem:[%s176 + $0xb0] sm:$0xff]
      %v237 = vld [vmem:[%s176 + $0xb8] sm:$0xff]
      %v238 = vld [vmem:[%s176 + $0xc0] sm:$0xff]
      %v239 = vld [vmem:[%s176 + $0xc8] sm:$0xff]
      %v240 = vld [vmem:[%s176 + $0xd0] sm:$0xff]
      %v241 = vld [vmem:[%s176 + $0xd8] sm:$0xff]
      %v242 = vld [vmem:[%s176 + $0xe0] sm:$0xff]
      %v243 = vld [vmem:[%s176 + $0xe8] sm:$0xff]
      %v244 = vld [vmem:[%s176 + $0xf0] sm:$0xff]
      %v245 = vld [vmem:[%s176 + $0xf8] sm:$0xff]
      %v246 = vld [vmem:[%s169] sm:$0xff]
      %v247 = vld [vmem:[%s169 + $0x8] sm:$0xff]
      %v248 = vld [vmem:[%s169 + $0x10] sm:$0xff]
      %v249 = vld [vmem:[%s169 + $0x18] sm:$0xff]
      %v250 = vld [vmem:[%s169 + $0x20] sm:$0xff]
      %v251 = vld [vmem:[%s169 + $0x28] sm:$0xff]
      %v252 = vld [vmem:[%s169 + $0x30] sm:$0xff]
      %v253 = vld [vmem:[%s169 + $0x38] sm:$0xff]
      %v254 = vld [vmem:[%s169 + $0x40] sm:$0xff]
      %v255 = vld [vmem:[%s169 + $0x48] sm:$0xff]
      %v256 = vld [vmem:[%s169 + $0x50] sm:$0xff]
      %v257 = vld [vmem:[%s169 + $0x58] sm:$0xff]
      %v258 = vld [vmem:[%s169 + $0x60] sm:$0xff]
      %v259 = vld [vmem:[%s169 + $0x68] sm:$0xff]
      %v260 = vld [vmem:[%s169 + $0x70] sm:$0xff]
      %v261 = vld [vmem:[%s169 + $0x78] sm:$0xff]
      %v262 = vld [vmem:[%s169 + $0x80] sm:$0xff]
      %v263 = vld [vmem:[%s169 + $0x88] sm:$0xff]
      %v264 = vld [vmem:[%s169 + $0x90] sm:$0xff]
      %v265 = vld [vmem:[%s169 + $0x98] sm:$0xff]
      %v266 = vld [vmem:[%s169 + $0xa0] sm:$0xff]
      %v267 = vld [vmem:[%s169 + $0xa8] sm:$0xff]
      %v268 = vld [vmem:[%s169 + $0xb0] sm:$0xff]
      %v269 = vld [vmem:[%s169 + $0xb8] sm:$0xff]
      %v270 = vld [vmem:[%s169 + $0xc0] sm:$0xff]
      %v271 = vld [vmem:[%s169 + $0xc8] sm:$0xff]
      %v272 = vld [vmem:[%s169 + $0xd0] sm:$0xff]
      %v273 = vld [vmem:[%s169 + $0xd8] sm:$0xff]
      %v274 = vld [vmem:[%s169 + $0xe0] sm:$0xff]
      %v275 = vld [vmem:[%s169 + $0xe8] sm:$0xff]
      %v276 = vld [vmem:[%s169 + $0xf0] sm:$0xff]
      %v277 = vld [vmem:[%s169 + $0xf8] sm:$0xff]
      %v278 = vld [vmem:[%s169 + $0x100] sm:$0xff]
      %v279 = vld [vmem:[%s169 + $0x108] sm:$0xff]
      %v280 = vld [vmem:[%s169 + $0x110] sm:$0xff]
      %v281 = vld [vmem:[%s169 + $0x118] sm:$0xff]
      %v282 = vld [vmem:[%s169 + $0x120] sm:$0xff]
      %v283 = vld [vmem:[%s169 + $0x128] sm:$0xff]
      %v284 = vld [vmem:[%s169 + $0x130] sm:$0xff]
      %v285 = vld [vmem:[%s169 + $0x138] sm:$0xff]
      %v286 = vld [vmem:[%s169 + $0x140] sm:$0xff]
      %v287 = vld [vmem:[%s169 + $0x148] sm:$0xff]
      %v288 = vld [vmem:[%s169 + $0x150] sm:$0xff]
      %v289 = vld [vmem:[%s169 + $0x158] sm:$0xff]
      %v290 = vld [vmem:[%s169 + $0x160] sm:$0xff]
      %v291 = vld [vmem:[%s169 + $0x168] sm:$0xff]
      %v292 = vld [vmem:[%s169 + $0x170] sm:$0xff]
      %v293 = vld [vmem:[%s169 + $0x178] sm:$0xff]
      %v294 = vld [vmem:[%s169 + $0x180] sm:$0xff]
      %v295 = vld [vmem:[%s169 + $0x188] sm:$0xff]
      %v296 = vld [vmem:[%s169 + $0x190] sm:$0xff]
      %v297 = vld [vmem:[%s169 + $0x198] sm:$0xff]
      %v298 = vld [vmem:[%s169 + $0x1a0] sm:$0xff]
      %v299 = vld [vmem:[%s169 + $0x1a8] sm:$0xff]
      %v300 = vld [vmem:[%s169 + $0x1b0] sm:$0xff]
      %v301 = vld [vmem:[%s169 + $0x1b8] sm:$0xff]
      %v302 = vld [vmem:[%s169 + $0x1c0] sm:$0xff]
      %v303 = vld [vmem:[%s169 + $0x1c8] sm:$0xff]
      %v304 = vld [vmem:[%s169 + $0x1d0] sm:$0xff]
      %v305 = vld [vmem:[%s169 + $0x1d8] sm:$0xff]
      %v306 = vld [vmem:[%s169 + $0x1e0] sm:$0xff]
      %v307 = vld [vmem:[%s169 + $0x1e8] sm:$0xff]
      %v308 = vld [vmem:[%s169 + $0x1f0] sm:$0xff]
      %v309 = vld [vmem:[%s169 + $0x1f8] sm:$0xff]
      %s310 = smul.u32 %s18, 512
      %s311 = sshra.s32 %s310, 3
      %s312 = sand.u32 %s310, 7
      %s313 = smul.addr %s311, 4
      %s314 = scalar_lea.vmem %s1, %s313
      %v315 = vld [vmem:[%s314] sm:$0xf]
      %v316 = vld [vmem:[%s314 + $0x4] sm:$0xf]
      %v317 = vld [vmem:[%s314 + $0x8] sm:$0xf]
      %v318 = vld [vmem:[%s314 + $0xc] sm:$0xf]
      %v319 = vld [vmem:[%s314 + $0x10] sm:$0xf]
      %v320 = vld [vmem:[%s314 + $0x14] sm:$0xf]
      %v321 = vld [vmem:[%s314 + $0x18] sm:$0xf]
      %v322 = vld [vmem:[%s314 + $0x1c] sm:$0xf]
      %v323 = vld [vmem:[%s314 + $0x20] sm:$0xf]
      %v324 = vld [vmem:[%s314 + $0x24] sm:$0xf]
      %v325 = vld [vmem:[%s314 + $0x28] sm:$0xf]
      %v326 = vld [vmem:[%s314 + $0x2c] sm:$0xf]
      %v327 = vld [vmem:[%s314 + $0x30] sm:$0xf]
      %v328 = vld [vmem:[%s314 + $0x34] sm:$0xf]
      %v329 = vld [vmem:[%s314 + $0x38] sm:$0xf]
      %v330 = vld [vmem:[%s314 + $0x3c] sm:$0xf]
      %v331 = vld [vmem:[%s314 + $0x40] sm:$0xf]
      %v332 = vld [vmem:[%s314 + $0x44] sm:$0xf]
      %v333 = vld [vmem:[%s314 + $0x48] sm:$0xf]
      %v334 = vld [vmem:[%s314 + $0x4c] sm:$0xf]
      %v335 = vld [vmem:[%s314 + $0x50] sm:$0xf]
      %v336 = vld [vmem:[%s314 + $0x54] sm:$0xf]
      %v337 = vld [vmem:[%s314 + $0x58] sm:$0xf]
      %v338 = vld [vmem:[%s314 + $0x5c] sm:$0xf]
      %v339 = vld [vmem:[%s314 + $0x60] sm:$0xf]
      %v340 = vld [vmem:[%s314 + $0x64] sm:$0xf]
      %v341 = vld [vmem:[%s314 + $0x68] sm:$0xf]
      %v342 = vld [vmem:[%s314 + $0x6c] sm:$0xf]
      %v343 = vld [vmem:[%s314 + $0x70] sm:$0xf]
      %v344 = vld [vmem:[%s314 + $0x74] sm:$0xf]
      %v345 = vld [vmem:[%s314 + $0x78] sm:$0xf]
      %v346 = vld [vmem:[%s314 + $0x7c] sm:$0xf]
      %v347 = vld [vmem:[%s314 + $0x80] sm:$0xf]
      %v348 = vld [vmem:[%s314 + $0x84] sm:$0xf]
      %v349 = vld [vmem:[%s314 + $0x88] sm:$0xf]
      %v350 = vld [vmem:[%s314 + $0x8c] sm:$0xf]
      %v351 = vld [vmem:[%s314 + $0x90] sm:$0xf]
      %v352 = vld [vmem:[%s314 + $0x94] sm:$0xf]
      %v353 = vld [vmem:[%s314 + $0x98] sm:$0xf]
      %v354 = vld [vmem:[%s314 + $0x9c] sm:$0xf]
      %v355 = vld [vmem:[%s314 + $0xa0] sm:$0xf]
      %v356 = vld [vmem:[%s314 + $0xa4] sm:$0xf]
      %v357 = vld [vmem:[%s314 + $0xa8] sm:$0xf]
      %v358 = vld [vmem:[%s314 + $0xac] sm:$0xf]
      %v359 = vld [vmem:[%s314 + $0xb0] sm:$0xf]
      %v360 = vld [vmem:[%s314 + $0xb4] sm:$0xf]
      %v361 = vld [vmem:[%s314 + $0xb8] sm:$0xf]
      %v362 = vld [vmem:[%s314 + $0xbc] sm:$0xf]
      %v363 = vld [vmem:[%s314 + $0xc0] sm:$0xf]
      %v364 = vld [vmem:[%s314 + $0xc4] sm:$0xf]
      %v365 = vld [vmem:[%s314 + $0xc8] sm:$0xf]
      %v366 = vld [vmem:[%s314 + $0xcc] sm:$0xf]
      %v367 = vld [vmem:[%s314 + $0xd0] sm:$0xf]
      %v368 = vld [vmem:[%s314 + $0xd4] sm:$0xf]
      %v369 = vld [vmem:[%s314 + $0xd8] sm:$0xf]
      %v370 = vld [vmem:[%s314 + $0xdc] sm:$0xf]
      %v371 = vld [vmem:[%s314 + $0xe0] sm:$0xf]
      %v372 = vld [vmem:[%s314 + $0xe4] sm:$0xf]
      %v373 = vld [vmem:[%s314 + $0xe8] sm:$0xf]
      %v374 = vld [vmem:[%s314 + $0xec] sm:$0xf]
      %v375 = vld [vmem:[%s314 + $0xf0] sm:$0xf]
      %v376 = vld [vmem:[%s314 + $0xf4] sm:$0xf]
      %v377 = vld [vmem:[%s314 + $0xf8] sm:$0xf]
      %v378 = vld [vmem:[%s314 + $0xfc] sm:$0xf]
      %v443 = vunpack.c.l.b16 %v246
      %v444 = vunpack.c.h.b16 %v246
      %v445 = vunpack.c.l.b16 %v247
      %v446 = vunpack.c.h.b16 %v247
      %v447 = vunpack.c.l.b16 %v248
      %v448 = vunpack.c.h.b16 %v248
      %v449 = vunpack.c.l.b16 %v249
      %v450 = vunpack.c.h.b16 %v249
      %v451 = vunpack.c.l.b16 %v250
      %v452 = vunpack.c.h.b16 %v250
      %v453 = vunpack.c.l.b16 %v251
      %v454 = vunpack.c.h.b16 %v251
      %v455 = vunpack.c.l.b16 %v252
      %v456 = vunpack.c.h.b16 %v252
      %v457 = vunpack.c.l.b16 %v253
      %v458 = vunpack.c.h.b16 %v253
      %v459 = vunpack.c.l.b16 %v254
      %v460 = vunpack.c.h.b16 %v254
      %v461 = vunpack.c.l.b16 %v255
      %v462 = vunpack.c.h.b16 %v255
      %v463 = vunpack.c.l.b16 %v256
      %v464 = vunpack.c.h.b16 %v256
      %v465 = vunpack.c.l.b16 %v257
      %v466 = vunpack.c.h.b16 %v257
      %v467 = vunpack.c.l.b16 %v258
      %v468 = vunpack.c.h.b16 %v258
      %v469 = vunpack.c.l.b16 %v259
      %v470 = vunpack.c.h.b16 %v259
      %v471 = vunpack.c.l.b16 %v260
      %v472 = vunpack.c.h.b16 %v260
      %v473 = vunpack.c.l.b16 %v261
      %v474 = vunpack.c.h.b16 %v261
      %v475 = vunpack.c.l.b16 %v262
      %v476 = vunpack.c.h.b16 %v262
      %v477 = vunpack.c.l.b16 %v263
      %v478 = vunpack.c.h.b16 %v263
      %v479 = vunpack.c.l.b16 %v264
      %v480 = vunpack.c.h.b16 %v264
      %v481 = vunpack.c.l.b16 %v265
      %v482 = vunpack.c.h.b16 %v265
      %v483 = vunpack.c.l.b16 %v266
      %v484 = vunpack.c.h.b16 %v266
      %v485 = vunpack.c.l.b16 %v267
      %v486 = vunpack.c.h.b16 %v267
      %v487 = vunpack.c.l.b16 %v268
      %v488 = vunpack.c.h.b16 %v268
      %v489 = vunpack.c.l.b16 %v269
      %v490 = vunpack.c.h.b16 %v269
      %v491 = vunpack.c.l.b16 %v270
      %v492 = vunpack.c.h.b16 %v270
      %v493 = vunpack.c.l.b16 %v271
      %v494 = vunpack.c.h.b16 %v271
      %v495 = vunpack.c.l.b16 %v272
      %v496 = vunpack.c.h.b16 %v272
      %v497 = vunpack.c.l.b16 %v273
      %v498 = vunpack.c.h.b16 %v273
      %v499 = vunpack.c.l.b16 %v274
      %v500 = vunpack.c.h.b16 %v274
      %v501 = vunpack.c.l.b16 %v275
      %v502 = vunpack.c.h.b16 %v275
      %v503 = vunpack.c.l.b16 %v276
      %v504 = vunpack.c.h.b16 %v276
      %v505 = vunpack.c.l.b16 %v277
      %v506 = vunpack.c.h.b16 %v277
      %v507 = vunpack.c.l.b16 %v278
      %v508 = vunpack.c.h.b16 %v278
      %v509 = vunpack.c.l.b16 %v279
      %v510 = vunpack.c.h.b16 %v279
      %v511 = vunpack.c.l.b16 %v280
      %v512 = vunpack.c.h.b16 %v280
      %v513 = vunpack.c.l.b16 %v281
      %v514 = vunpack.c.h.b16 %v281
      %v515 = vunpack.c.l.b16 %v282
      %v516 = vunpack.c.h.b16 %v282
      %v517 = vunpack.c.l.b16 %v283
      %v518 = vunpack.c.h.b16 %v283
      %v519 = vunpack.c.l.b16 %v284
      %v520 = vunpack.c.h.b16 %v284
      %v521 = vunpack.c.l.b16 %v285
      %v522 = vunpack.c.h.b16 %v285
      %v523 = vunpack.c.l.b16 %v286
      %v524 = vunpack.c.h.b16 %v286
      %v525 = vunpack.c.l.b16 %v287
      %v526 = vunpack.c.h.b16 %v287
      %v527 = vunpack.c.l.b16 %v288
      %v528 = vunpack.c.h.b16 %v288
      %v529 = vunpack.c.l.b16 %v289
      %v530 = vunpack.c.h.b16 %v289
      %v531 = vunpack.c.l.b16 %v290
      %v532 = vunpack.c.h.b16 %v290
      %v533 = vunpack.c.l.b16 %v291
      %v534 = vunpack.c.h.b16 %v291
      %v535 = vunpack.c.l.b16 %v292
      %v536 = vunpack.c.h.b16 %v292
      %v537 = vunpack.c.l.b16 %v293
      %v538 = vunpack.c.h.b16 %v293
      %v539 = vunpack.c.l.b16 %v294
      %v540 = vunpack.c.h.b16 %v294
      %v541 = vunpack.c.l.b16 %v295
      %v542 = vunpack.c.h.b16 %v295
      %v543 = vunpack.c.l.b16 %v296
      %v544 = vunpack.c.h.b16 %v296
      %v545 = vunpack.c.l.b16 %v297
      %v546 = vunpack.c.h.b16 %v297
      %v547 = vunpack.c.l.b16 %v298
      %v548 = vunpack.c.h.b16 %v298
      %v549 = vunpack.c.l.b16 %v299
      %v550 = vunpack.c.h.b16 %v299
      %v551 = vunpack.c.l.b16 %v300
      %v552 = vunpack.c.h.b16 %v300
      %v553 = vunpack.c.l.b16 %v301
      %v554 = vunpack.c.h.b16 %v301
      %v555 = vunpack.c.l.b16 %v302
      %v556 = vunpack.c.h.b16 %v302
      %v557 = vunpack.c.l.b16 %v303
      %v558 = vunpack.c.h.b16 %v303
      %v559 = vunpack.c.l.b16 %v304
      %v560 = vunpack.c.h.b16 %v304
      %v561 = vunpack.c.l.b16 %v305
      %v562 = vunpack.c.h.b16 %v305
      %v563 = vunpack.c.l.b16 %v306
      %v564 = vunpack.c.h.b16 %v306
      %v565 = vunpack.c.l.b16 %v307
      %v566 = vunpack.c.h.b16 %v307
      %v567 = vunpack.c.l.b16 %v308
      %v568 = vunpack.c.h.b16 %v308
      %v569 = vunpack.c.l.b16 %v309
      %v570 = vunpack.c.h.b16 %v309
      %v571 = vpack.c.b16 %v447, %v443
      %v572 = vpack.c.b16 %v448, %v444
      %v573 = vpack.c.b16 %v449, %v445
      %v574 = vpack.c.b16 %v450, %v446
      %v575 = vpack.c.b16 %v455, %v451
      %v576 = vpack.c.b16 %v456, %v452
      %v577 = vpack.c.b16 %v457, %v453
      %v578 = vpack.c.b16 %v458, %v454
      %v579 = vpack.c.b16 %v463, %v459
      %v580 = vpack.c.b16 %v464, %v460
      %v581 = vpack.c.b16 %v465, %v461
      %v582 = vpack.c.b16 %v466, %v462
      %v583 = vpack.c.b16 %v471, %v467
      %v584 = vpack.c.b16 %v472, %v468
      %v585 = vpack.c.b16 %v473, %v469
      %v586 = vpack.c.b16 %v474, %v470
      %v587 = vpack.c.b16 %v479, %v475
      %v588 = vpack.c.b16 %v480, %v476
      %v589 = vpack.c.b16 %v481, %v477
      %v590 = vpack.c.b16 %v482, %v478
      %v591 = vpack.c.b16 %v487, %v483
      %v592 = vpack.c.b16 %v488, %v484
      %v593 = vpack.c.b16 %v489, %v485
      %v594 = vpack.c.b16 %v490, %v486
      %v595 = vpack.c.b16 %v495, %v491
      %v596 = vpack.c.b16 %v496, %v492
      %v597 = vpack.c.b16 %v497, %v493
      %v598 = vpack.c.b16 %v498, %v494
      %v599 = vpack.c.b16 %v503, %v499
      %v600 = vpack.c.b16 %v504, %v500
      %v601 = vpack.c.b16 %v505, %v501
      %v602 = vpack.c.b16 %v506, %v502
      %v603 = vpack.c.b16 %v511, %v507
      %v604 = vpack.c.b16 %v512, %v508
      %v605 = vpack.c.b16 %v513, %v509
      %v606 = vpack.c.b16 %v514, %v510
      %v607 = vpack.c.b16 %v519, %v515
      %v608 = vpack.c.b16 %v520, %v516
      %v609 = vpack.c.b16 %v521, %v517
      %v610 = vpack.c.b16 %v522, %v518
      %v611 = vpack.c.b16 %v527, %v523
      %v612 = vpack.c.b16 %v528, %v524
      %v613 = vpack.c.b16 %v529, %v525
      %v614 = vpack.c.b16 %v530, %v526
      %v615 = vpack.c.b16 %v535, %v531
      %v616 = vpack.c.b16 %v536, %v532
      %v617 = vpack.c.b16 %v537, %v533
      %v618 = vpack.c.b16 %v538, %v534
      %v619 = vpack.c.b16 %v543, %v539
      %v620 = vpack.c.b16 %v544, %v540
      %v621 = vpack.c.b16 %v545, %v541
      %v622 = vpack.c.b16 %v546, %v542
      %v623 = vpack.c.b16 %v551, %v547
      %v624 = vpack.c.b16 %v552, %v548
      %v625 = vpack.c.b16 %v553, %v549
      %v626 = vpack.c.b16 %v554, %v550
      %v627 = vpack.c.b16 %v559, %v555
      %v628 = vpack.c.b16 %v560, %v556
      %v629 = vpack.c.b16 %v561, %v557
      %v630 = vpack.c.b16 %v562, %v558
      %v631 = vpack.c.b16 %v567, %v563
      %v632 = vpack.c.b16 %v568, %v564
      %v633 = vpack.c.b16 %v569, %v565
      %v634 = vpack.c.b16 %v570, %v566
      %v763 = vunpack.c.l.b16 %v315
      %v764 = vunpack.c.l.b16 %v316
      %v765 = vunpack.c.l.b16 %v317
      %v766 = vunpack.c.l.b16 %v318
      %v767 = vunpack.c.l.b16 %v319
      %v768 = vunpack.c.l.b16 %v320
      %v769 = vunpack.c.l.b16 %v321
      %v770 = vunpack.c.l.b16 %v322
      %v771 = vunpack.c.l.b16 %v323
      %v772 = vunpack.c.l.b16 %v324
      %v773 = vunpack.c.l.b16 %v325
      %v774 = vunpack.c.l.b16 %v326
      %v775 = vunpack.c.l.b16 %v327
      %v776 = vunpack.c.l.b16 %v328
      %v777 = vunpack.c.l.b16 %v329
      %v778 = vunpack.c.l.b16 %v330
      %v779 = vunpack.c.l.b16 %v331
      %v780 = vunpack.c.l.b16 %v332
      %v781 = vunpack.c.l.b16 %v333
      %v782 = vunpack.c.l.b16 %v334
      %v783 = vunpack.c.l.b16 %v335
      %v784 = vunpack.c.l.b16 %v336
      %v785 = vunpack.c.l.b16 %v337
      %v786 = vunpack.c.l.b16 %v338
      %v787 = vunpack.c.l.b16 %v339
      %v788 = vunpack.c.l.b16 %v340
      %v789 = vunpack.c.l.b16 %v341
      %v790 = vunpack.c.l.b16 %v342
      %v791 = vunpack.c.l.b16 %v343
      %v792 = vunpack.c.l.b16 %v344
      %v793 = vunpack.c.l.b16 %v345
      %v794 = vunpack.c.l.b16 %v346
      %v795 = vunpack.c.l.b16 %v347
      %v796 = vunpack.c.l.b16 %v348
      %v797 = vunpack.c.l.b16 %v349
      %v798 = vunpack.c.l.b16 %v350
      %v799 = vunpack.c.l.b16 %v351
      %v800 = vunpack.c.l.b16 %v352
      %v801 = vunpack.c.l.b16 %v353
      %v802 = vunpack.c.l.b16 %v354
      %v803 = vunpack.c.l.b16 %v355
      %v804 = vunpack.c.l.b16 %v356
      %v805 = vunpack.c.l.b16 %v357
      %v806 = vunpack.c.l.b16 %v358
      %v807 = vunpack.c.l.b16 %v359
      %v808 = vunpack.c.l.b16 %v360
      %v809 = vunpack.c.l.b16 %v361
      %v810 = vunpack.c.l.b16 %v362
      %v811 = vunpack.c.l.b16 %v363
      %v812 = vunpack.c.l.b16 %v364
      %v813 = vunpack.c.l.b16 %v365
      %v814 = vunpack.c.l.b16 %v366
      %v815 = vunpack.c.l.b16 %v367
      %v816 = vunpack.c.l.b16 %v368
      %v817 = vunpack.c.l.b16 %v369
      %v818 = vunpack.c.l.b16 %v370
      %v819 = vunpack.c.l.b16 %v371
      %v820 = vunpack.c.l.b16 %v372
      %v821 = vunpack.c.l.b16 %v373
      %v822 = vunpack.c.l.b16 %v374
      %v823 = vunpack.c.l.b16 %v375
      %v824 = vunpack.c.l.b16 %v376
      %v825 = vunpack.c.l.b16 %v377
      %v826 = vunpack.c.l.b16 %v378
      %v827 = vpack.c.b16 %v764, %v763
      %v828 = vpack.c.b16 %v766, %v765
      %v829 = vpack.c.b16 %v768, %v767
      %v830 = vpack.c.b16 %v770, %v769
      %v831 = vpack.c.b16 %v772, %v771
      %v832 = vpack.c.b16 %v774, %v773
      %v833 = vpack.c.b16 %v776, %v775
      %v834 = vpack.c.b16 %v778, %v777
      %v835 = vpack.c.b16 %v780, %v779
      %v836 = vpack.c.b16 %v782, %v781
      %v837 = vpack.c.b16 %v784, %v783
      %v838 = vpack.c.b16 %v786, %v785
      %v839 = vpack.c.b16 %v788, %v787
      %v840 = vpack.c.b16 %v790, %v789
      %v841 = vpack.c.b16 %v792, %v791
      %v842 = vpack.c.b16 %v794, %v793
      %v843 = vpack.c.b16 %v796, %v795
      %v844 = vpack.c.b16 %v798, %v797
      %v845 = vpack.c.b16 %v800, %v799
      %v846 = vpack.c.b16 %v802, %v801
      %v847 = vpack.c.b16 %v804, %v803
      %v848 = vpack.c.b16 %v806, %v805
      %v849 = vpack.c.b16 %v808, %v807
      %v850 = vpack.c.b16 %v810, %v809
      %v851 = vpack.c.b16 %v812, %v811
      %v852 = vpack.c.b16 %v814, %v813
      %v853 = vpack.c.b16 %v816, %v815
      %v854 = vpack.c.b16 %v818, %v817
      %v855 = vpack.c.b16 %v820, %v819
      %v856 = vpack.c.b16 %v822, %v821
      %v857 = vpack.c.b16 %v824, %v823
      %v858 = vpack.c.b16 %v826, %v825
      %891 = vmatpush.bf16.msra.mxu0 %v834
      %892 = vmatpush.bf16.msra.mxu0 %v833
      %893 = vmatpush.bf16.msra.mxu0 %v832
      %894 = vmatpush.bf16.msra.mxu0 %v831
      %895 = vmatpush.bf16.msra.mxu0 %v830
      %896 = vmatpush.bf16.msra.mxu0 %v829
      %897 = vmatpush.bf16.msra.mxu0 %v828
      %898 = vmatpush.bf16.msra.mxu0 %v827
      %899 = vmatmul.bf16.gmra.mxu0 %v571
      %v900 = vpop.f32.mrf.mxu0
      %v901 = vadd.f32 0.0, %v900
      %v902 = vpop.f32.mrf.mxu0
      %v903 = vadd.f32 0.0, %v902
      %904 = vmatmul.bf16.gmra.mxu0 %v575
      %v905 = vpop.f32.mrf.mxu0
      %v906 = vadd.f32 0.0, %v905
      %v907 = vpop.f32.mrf.mxu0
      %v908 = vadd.f32 0.0, %v907
      %909 = vmatmul.bf16.gmra.mxu0 %v579
      %v910 = vpop.f32.mrf.mxu0
      %v911 = vadd.f32 0.0, %v910
      %v912 = vpop.f32.mrf.mxu0
      %v913 = vadd.f32 0.0, %v912
      %914 = vmatmul.bf16.gmra.mxu0 %v583
      %v915 = vpop.f32.mrf.mxu0
      %v916 = vadd.f32 0.0, %v915
      %v917 = vpop.f32.mrf.mxu0
      %v918 = vadd.f32 0.0, %v917
      %919 = vmatmul.bf16.gmra.mxu0 %v587
      %v920 = vpop.f32.mrf.mxu0
      %v921 = vadd.f32 0.0, %v920
      %v922 = vpop.f32.mrf.mxu0
      %v923 = vadd.f32 0.0, %v922
      %924 = vmatmul.bf16.gmra.mxu0 %v591
      %v925 = vpop.f32.mrf.mxu0
      %v926 = vadd.f32 0.0, %v925
      %v927 = vpop.f32.mrf.mxu0
      %v928 = vadd.f32 0.0, %v927
      %929 = vmatmul.bf16.gmra.mxu0 %v595
      %v930 = vpop.f32.mrf.mxu0
      %v931 = vadd.f32 0.0, %v930
      %v932 = vpop.f32.mrf.mxu0
      %v933 = vadd.f32 0.0, %v932
      %934 = vmatmul.bf16.gmra.mxu0 %v599
      %v935 = vpop.f32.mrf.mxu0
      %v936 = vadd.f32 0.0, %v935
      %v937 = vpop.f32.mrf.mxu0
      %v938 = vadd.f32 0.0, %v937
      %939 = vmatmul.bf16.gmra.mxu0 %v603
      %v940 = vpop.f32.mrf.mxu0
      %v941 = vadd.f32 0.0, %v940
      %v942 = vpop.f32.mrf.mxu0
      %v943 = vadd.f32 0.0, %v942
      %944 = vmatmul.bf16.gmra.mxu0 %v607
      %v945 = vpop.f32.mrf.mxu0
      %v946 = vadd.f32 0.0, %v945
      %v947 = vpop.f32.mrf.mxu0
      %v948 = vadd.f32 0.0, %v947
      %949 = vmatmul.bf16.gmra.mxu0 %v611
      %v950 = vpop.f32.mrf.mxu0
      %v951 = vadd.f32 0.0, %v950
      %v952 = vpop.f32.mrf.mxu0
      %v953 = vadd.f32 0.0, %v952
      %954 = vmatmul.bf16.gmra.mxu0 %v615
      %v955 = vpop.f32.mrf.mxu0
      %v956 = vadd.f32 0.0, %v955
      %v957 = vpop.f32.mrf.mxu0
      %v958 = vadd.f32 0.0, %v957
      %959 = vmatmul.bf16.gmra.mxu0 %v619
      %v960 = vpop.f32.mrf.mxu0
      %v961 = vadd.f32 0.0, %v960
      %v962 = vpop.f32.mrf.mxu0
      %v963 = vadd.f32 0.0, %v962
      %964 = vmatmul.bf16.gmra.mxu0 %v623
      %v965 = vpop.f32.mrf.mxu0
      %v966 = vadd.f32 0.0, %v965
      %v967 = vpop.f32.mrf.mxu0
      %v968 = vadd.f32 0.0, %v967
      %969 = vmatmul.bf16.gmra.mxu0 %v627
      %v970 = vpop.f32.mrf.mxu0
      %v971 = vadd.f32 0.0, %v970
      %v972 = vpop.f32.mrf.mxu0
      %v973 = vadd.f32 0.0, %v972
      %974 = vmatmul.bf16.gmra.mxu0 %v631
      %v975 = vpop.f32.mrf.mxu0
      %v976 = vadd.f32 0.0, %v975
      %v977 = vpop.f32.mrf.mxu0
      %v978 = vadd.f32 0.0, %v977
      %979 = vdwg.mxu0
      %980 = vmatpush.bf16.msra.mxu0 %v842
      %981 = vmatpush.bf16.msra.mxu0 %v841
      %982 = vmatpush.bf16.msra.mxu0 %v840
      %983 = vmatpush.bf16.msra.mxu0 %v839
      %984 = vmatpush.bf16.msra.mxu0 %v838
      %985 = vmatpush.bf16.msra.mxu0 %v837
      %986 = vmatpush.bf16.msra.mxu0 %v836
      %987 = vmatpush.bf16.msra.mxu0 %v835
      %988 = vmatmul.bf16.gmra.mxu0 %v572
      %v989 = vpop.f32.mrf.mxu0
      %v990 = vadd.f32 %v901, %v989
      %v991 = vpop.f32.mrf.mxu0
      %v992 = vadd.f32 %v903, %v991
      %993 = vmatmul.bf16.gmra.mxu0 %v576
      %v994 = vpop.f32.mrf.mxu0
      %v995 = vadd.f32 %v906, %v994
      %v996 = vpop.f32.mrf.mxu0
      %v997 = vadd.f32 %v908, %v996
      %998 = vmatmul.bf16.gmra.mxu0 %v580
      %v999 = vpop.f32.mrf.mxu0
      %v1000 = vadd.f32 %v911, %v999
      %v1001 = vpop.f32.mrf.mxu0
      %v1002 = vadd.f32 %v913, %v1001
      %1003 = vmatmul.bf16.gmra.mxu0 %v584
      %v1004 = vpop.f32.mrf.mxu0
      %v1005 = vadd.f32 %v916, %v1004
      %v1006 = vpop.f32.mrf.mxu0
      %v1007 = vadd.f32 %v918, %v1006
      %1008 = vmatmul.bf16.gmra.mxu0 %v588
      %v1009 = vpop.f32.mrf.mxu0
      %v1010 = vadd.f32 %v921, %v1009
      %v1011 = vpop.f32.mrf.mxu0
      %v1012 = vadd.f32 %v923, %v1011
      %1013 = vmatmul.bf16.gmra.mxu0 %v592
      %v1014 = vpop.f32.mrf.mxu0
      %v1015 = vadd.f32 %v926, %v1014
      %v1016 = vpop.f32.mrf.mxu0
      %v1017 = vadd.f32 %v928, %v1016
      %1018 = vmatmul.bf16.gmra.mxu0 %v596
      %v1019 = vpop.f32.mrf.mxu0
      %v1020 = vadd.f32 %v931, %v1019
      %v1021 = vpop.f32.mrf.mxu0
      %v1022 = vadd.f32 %v933, %v1021
      %1023 = vmatmul.bf16.gmra.mxu0 %v600
      %v1024 = vpop.f32.mrf.mxu0
      %v1025 = vadd.f32 %v936, %v1024
      %v1026 = vpop.f32.mrf.mxu0
      %v1027 = vadd.f32 %v938, %v1026
      %1028 = vmatmul.bf16.gmra.mxu0 %v604
      %v1029 = vpop.f32.mrf.mxu0
      %v1030 = vadd.f32 %v941, %v1029
      %v1031 = vpop.f32.mrf.mxu0
      %v1032 = vadd.f32 %v943, %v1031
      %1033 = vmatmul.bf16.gmra.mxu0 %v608
      %v1034 = vpop.f32.mrf.mxu0
      %v1035 = vadd.f32 %v946, %v1034
      %v1036 = vpop.f32.mrf.mxu0
      %v1037 = vadd.f32 %v948, %v1036
      %1038 = vmatmul.bf16.gmra.mxu0 %v612
      %v1039 = vpop.f32.mrf.mxu0
      %v1040 = vadd.f32 %v951, %v1039
      %v1041 = vpop.f32.mrf.mxu0
      %v1042 = vadd.f32 %v953, %v1041
      %1043 = vmatmul.bf16.gmra.mxu0 %v616
      %v1044 = vpop.f32.mrf.mxu0
      %v1045 = vadd.f32 %v956, %v1044
      %v1046 = vpop.f32.mrf.mxu0
      %v1047 = vadd.f32 %v958, %v1046
      %1048 = vmatmul.bf16.gmra.mxu0 %v620
      %v1049 = vpop.f32.mrf.mxu0
      %v1050 = vadd.f32 %v961, %v1049
      %v1051 = vpop.f32.mrf.mxu0
      %v1052 = vadd.f32 %v963, %v1051
      %1053 = vmatmul.bf16.gmra.mxu0 %v624
      %v1054 = vpop.f32.mrf.mxu0
      %v1055 = vadd.f32 %v966, %v1054
      %v1056 = vpop.f32.mrf.mxu0
      %v1057 = vadd.f32 %v968, %v1056
      %1058 = vmatmul.bf16.gmra.mxu0 %v628
      %v1059 = vpop.f32.mrf.mxu0
      %v1060 = vadd.f32 %v971, %v1059
      %v1061 = vpop.f32.mrf.mxu0
      %v1062 = vadd.f32 %v973, %v1061
      %1063 = vmatmul.bf16.gmra.mxu0 %v632
      %v1064 = vpop.f32.mrf.mxu0
      %v1065 = vadd.f32 %v976, %v1064
      %v1066 = vpop.f32.mrf.mxu0
      %v1067 = vadd.f32 %v978, %v1066
      %1068 = vdwg.mxu0
      %1069 = vmatpush.bf16.msra.mxu0 %v850
      %1070 = vmatpush.bf16.msra.mxu0 %v849
      %1071 = vmatpush.bf16.msra.mxu0 %v848
      %1072 = vmatpush.bf16.msra.mxu0 %v847
      %1073 = vmatpush.bf16.msra.mxu0 %v846
      %1074 = vmatpush.bf16.msra.mxu0 %v845
      %1075 = vmatpush.bf16.msra.mxu0 %v844
      %1076 = vmatpush.bf16.msra.mxu0 %v843
      %1077 = vmatmul.bf16.gmra.mxu0 %v573
      %v1078 = vpop.f32.mrf.mxu0
      %v1079 = vadd.f32 %v990, %v1078
      %v1080 = vpop.f32.mrf.mxu0
      %v1081 = vadd.f32 %v992, %v1080
      %1082 = vmatmul.bf16.gmra.mxu0 %v577
      %v1083 = vpop.f32.mrf.mxu0
      %v1084 = vadd.f32 %v995, %v1083
      %v1085 = vpop.f32.mrf.mxu0
      %v1086 = vadd.f32 %v997, %v1085
      %1087 = vmatmul.bf16.gmra.mxu0 %v581
      %v1088 = vpop.f32.mrf.mxu0
      %v1089 = vadd.f32 %v1000, %v1088
      %v1090 = vpop.f32.mrf.mxu0
      %v1091 = vadd.f32 %v1002, %v1090
      %1092 = vmatmul.bf16.gmra.mxu0 %v585
      %v1093 = vpop.f32.mrf.mxu0
      %v1094 = vadd.f32 %v1005, %v1093
      %v1095 = vpop.f32.mrf.mxu0
      %v1096 = vadd.f32 %v1007, %v1095
      %1097 = vmatmul.bf16.gmra.mxu0 %v589
      %v1098 = vpop.f32.mrf.mxu0
      %v1099 = vadd.f32 %v1010, %v1098
      %v1100 = vpop.f32.mrf.mxu0
      %v1101 = vadd.f32 %v1012, %v1100
      %1102 = vmatmul.bf16.gmra.mxu0 %v593
      %v1103 = vpop.f32.mrf.mxu0
      %v1104 = vadd.f32 %v1015, %v1103
      %v1105 = vpop.f32.mrf.mxu0
      %v1106 = vadd.f32 %v1017, %v1105
      %1107 = vmatmul.bf16.gmra.mxu0 %v597
      %v1108 = vpop.f32.mrf.mxu0
      %v1109 = vadd.f32 %v1020, %v1108
      %v1110 = vpop.f32.mrf.mxu0
      %v1111 = vadd.f32 %v1022, %v1110
      %1112 = vmatmul.bf16.gmra.mxu0 %v601
      %v1113 = vpop.f32.mrf.mxu0
      %v1114 = vadd.f32 %v1025, %v1113
      %v1115 = vpop.f32.mrf.mxu0
      %v1116 = vadd.f32 %v1027, %v1115
      %1117 = vmatmul.bf16.gmra.mxu0 %v605
      %v1118 = vpop.f32.mrf.mxu0
      %v1119 = vadd.f32 %v1030, %v1118
      %v1120 = vpop.f32.mrf.mxu0
      %v1121 = vadd.f32 %v1032, %v1120
      %1122 = vmatmul.bf16.gmra.mxu0 %v609
      %v1123 = vpop.f32.mrf.mxu0
      %v1124 = vadd.f32 %v1035, %v1123
      %v1125 = vpop.f32.mrf.mxu0
      %v1126 = vadd.f32 %v1037, %v1125
      %1127 = vmatmul.bf16.gmra.mxu0 %v613
      %v1128 = vpop.f32.mrf.mxu0
      %v1129 = vadd.f32 %v1040, %v1128
      %v1130 = vpop.f32.mrf.mxu0
      %v1131 = vadd.f32 %v1042, %v1130
      %1132 = vmatmul.bf16.gmra.mxu0 %v617
      %v1133 = vpop.f32.mrf.mxu0
      %v1134 = vadd.f32 %v1045, %v1133
      %v1135 = vpop.f32.mrf.mxu0
      %v1136 = vadd.f32 %v1047, %v1135
      %1137 = vmatmul.bf16.gmra.mxu0 %v621
      %v1138 = vpop.f32.mrf.mxu0
      %v1139 = vadd.f32 %v1050, %v1138
      %v1140 = vpop.f32.mrf.mxu0
      %v1141 = vadd.f32 %v1052, %v1140
      %1142 = vmatmul.bf16.gmra.mxu0 %v625
      %v1143 = vpop.f32.mrf.mxu0
      %v1144 = vadd.f32 %v1055, %v1143
      %v1145 = vpop.f32.mrf.mxu0
      %v1146 = vadd.f32 %v1057, %v1145
      %1147 = vmatmul.bf16.gmra.mxu0 %v629
      %v1148 = vpop.f32.mrf.mxu0
      %v1149 = vadd.f32 %v1060, %v1148
      %v1150 = vpop.f32.mrf.mxu0
      %v1151 = vadd.f32 %v1062, %v1150
      %1152 = vmatmul.bf16.gmra.mxu0 %v633
      %v1153 = vpop.f32.mrf.mxu0
      %v1154 = vadd.f32 %v1065, %v1153
      %v1155 = vpop.f32.mrf.mxu0
      %v1156 = vadd.f32 %v1067, %v1155
      %1157 = vdwg.mxu0
      %1158 = vmatpush.bf16.msra.mxu0 %v858
      %1159 = vmatpush.bf16.msra.mxu0 %v857
      %1160 = vmatpush.bf16.msra.mxu0 %v856
      %1161 = vmatpush.bf16.msra.mxu0 %v855
      %1162 = vmatpush.bf16.msra.mxu0 %v854
      %1163 = vmatpush.bf16.msra.mxu0 %v853
      %1164 = vmatpush.bf16.msra.mxu0 %v852
      %1165 = vmatpush.bf16.msra.mxu0 %v851
      %1166 = vmatmul.bf16.gmra.mxu0 %v574
      %v1167 = vpop.f32.mrf.mxu0
      %v1168 = vadd.f32 %v1079, %v1167
      %v1169 = vpop.f32.mrf.mxu0
      %v1170 = vadd.f32 %v1081, %v1169
      %1171 = vmatmul.bf16.gmra.mxu0 %v578
      %v1172 = vpop.f32.mrf.mxu0
      %v1173 = vadd.f32 %v1084, %v1172
      %v1174 = vpop.f32.mrf.mxu0
      %v1175 = vadd.f32 %v1086, %v1174
      %1176 = vmatmul.bf16.gmra.mxu0 %v582
      %v1177 = vpop.f32.mrf.mxu0
      %v1178 = vadd.f32 %v1089, %v1177
      %v1179 = vpop.f32.mrf.mxu0
      %v1180 = vadd.f32 %v1091, %v1179
      %1181 = vmatmul.bf16.gmra.mxu0 %v586
      %v1182 = vpop.f32.mrf.mxu0
      %v1183 = vadd.f32 %v1094, %v1182
      %v1184 = vpop.f32.mrf.mxu0
      %v1185 = vadd.f32 %v1096, %v1184
      %1186 = vmatmul.bf16.gmra.mxu0 %v590
      %v1187 = vpop.f32.mrf.mxu0
      %v1188 = vadd.f32 %v1099, %v1187
      %v1189 = vpop.f32.mrf.mxu0
      %v1190 = vadd.f32 %v1101, %v1189
      %1191 = vmatmul.bf16.gmra.mxu0 %v594
      %v1192 = vpop.f32.mrf.mxu0
      %v1193 = vadd.f32 %v1104, %v1192
      %v1194 = vpop.f32.mrf.mxu0
      %v1195 = vadd.f32 %v1106, %v1194
      %1196 = vmatmul.bf16.gmra.mxu0 %v598
      %v1197 = vpop.f32.mrf.mxu0
      %v1198 = vadd.f32 %v1109, %v1197
      %v1199 = vpop.f32.mrf.mxu0
      %v1200 = vadd.f32 %v1111, %v1199
      %1201 = vmatmul.bf16.gmra.mxu0 %v602
      %v1202 = vpop.f32.mrf.mxu0
      %v1203 = vadd.f32 %v1114, %v1202
      %v1204 = vpop.f32.mrf.mxu0
      %v1205 = vadd.f32 %v1116, %v1204
      %1206 = vmatmul.bf16.gmra.mxu0 %v606
      %v1207 = vpop.f32.mrf.mxu0
      %v1208 = vadd.f32 %v1119, %v1207
      %v1209 = vpop.f32.mrf.mxu0
      %v1210 = vadd.f32 %v1121, %v1209
      %1211 = vmatmul.bf16.gmra.mxu0 %v610
      %v1212 = vpop.f32.mrf.mxu0
      %v1213 = vadd.f32 %v1124, %v1212
      %v1214 = vpop.f32.mrf.mxu0
      %v1215 = vadd.f32 %v1126, %v1214
      %1216 = vmatmul.bf16.gmra.mxu0 %v614
      %v1217 = vpop.f32.mrf.mxu0
      %v1218 = vadd.f32 %v1129, %v1217
      %v1219 = vpop.f32.mrf.mxu0
      %v1220 = vadd.f32 %v1131, %v1219
      %1221 = vmatmul.bf16.gmra.mxu0 %v618
      %v1222 = vpop.f32.mrf.mxu0
      %v1223 = vadd.f32 %v1134, %v1222
      %v1224 = vpop.f32.mrf.mxu0
      %v1225 = vadd.f32 %v1136, %v1224
      %1226 = vmatmul.bf16.gmra.mxu0 %v622
      %v1227 = vpop.f32.mrf.mxu0
      %v1228 = vadd.f32 %v1139, %v1227
      %v1229 = vpop.f32.mrf.mxu0
      %v1230 = vadd.f32 %v1141, %v1229
      %1231 = vmatmul.bf16.gmra.mxu0 %v626
      %v1232 = vpop.f32.mrf.mxu0
      %v1233 = vadd.f32 %v1144, %v1232
      %v1234 = vpop.f32.mrf.mxu0
      %v1235 = vadd.f32 %v1146, %v1234
      %1236 = vmatmul.bf16.gmra.mxu0 %v630
      %v1237 = vpop.f32.mrf.mxu0
      %v1238 = vadd.f32 %v1149, %v1237
      %v1239 = vpop.f32.mrf.mxu0
      %v1240 = vadd.f32 %v1151, %v1239
      %1241 = vmatmul.bf16.gmra.mxu0 %v634
      %v1242 = vpop.f32.mrf.mxu0
      %v1243 = vadd.f32 %v1154, %v1242
      %v1244 = vpop.f32.mrf.mxu0
      %v1245 = vadd.f32 %v1156, %v1244
      %1246 = vdwg.mxu0
      %v1247 = vadd.f32 %v214, %v1168
      %v1248 = vadd.f32 %v215, %v1170
      %v1249 = vadd.f32 %v216, %v1173
      %v1250 = vadd.f32 %v217, %v1175
      %v1251 = vadd.f32 %v218, %v1178
      %v1252 = vadd.f32 %v219, %v1180
      %v1253 = vadd.f32 %v220, %v1183
      %v1254 = vadd.f32 %v221, %v1185
      %v1255 = vadd.f32 %v222, %v1188
      %v1256 = vadd.f32 %v223, %v1190
      %v1257 = vadd.f32 %v224, %v1193
      %v1258 = vadd.f32 %v225, %v1195
      %v1259 = vadd.f32 %v226, %v1198
      %v1260 = vadd.f32 %v227, %v1200
      %v1261 = vadd.f32 %v228, %v1203
      %v1262 = vadd.f32 %v229, %v1205
      %v1263 = vadd.f32 %v230, %v1208
      %v1264 = vadd.f32 %v231, %v1210
      %v1265 = vadd.f32 %v232, %v1213
      %v1266 = vadd.f32 %v233, %v1215
      %v1267 = vadd.f32 %v234, %v1218
      %v1268 = vadd.f32 %v235, %v1220
      %v1269 = vadd.f32 %v236, %v1223
      %v1270 = vadd.f32 %v237, %v1225
      %v1271 = vadd.f32 %v238, %v1228
      %v1272 = vadd.f32 %v239, %v1230
      %v1273 = vadd.f32 %v240, %v1233
      %v1274 = vadd.f32 %v241, %v1235
      %v1275 = vadd.f32 %v242, %v1238
      %v1276 = vadd.f32 %v243, %v1240
      %v1277 = vadd.f32 %v244, %v1243
      %v1278 = vadd.f32 %v245, %v1245
      %1279 = vst [vmem:[%s176] sm:$0xff] %v1247
      %1280 = vst [vmem:[%s176 + $0x8] sm:$0xff] %v1248
      %1281 = vst [vmem:[%s176 + $0x10] sm:$0xff] %v1249
      %1282 = vst [vmem:[%s176 + $0x18] sm:$0xff] %v1250
      %1283 = vst [vmem:[%s176 + $0x20] sm:$0xff] %v1251
      %1284 = vst [vmem:[%s176 + $0x28] sm:$0xff] %v1252
      %1285 = vst [vmem:[%s176 + $0x30] sm:$0xff] %v1253
      %1286 = vst [vmem:[%s176 + $0x38] sm:$0xff] %v1254
      %1287 = vst [vmem:[%s176 + $0x40] sm:$0xff] %v1255
      %1288 = vst [vmem:[%s176 + $0x48] sm:$0xff] %v1256
      %1289 = vst [vmem:[%s176 + $0x50] sm:$0xff] %v1257
      %1290 = vst [vmem:[%s176 + $0x58] sm:$0xff] %v1258
      %1291 = vst [vmem:[%s176 + $0x60] sm:$0xff] %v1259
      %1292 = vst [vmem:[%s176 + $0x68] sm:$0xff] %v1260
      %1293 = vst [vmem:[%s176 + $0x70] sm:$0xff] %v1261
      %1294 = vst [vmem:[%s176 + $0x78] sm:$0xff] %v1262
      %1295 = vst [vmem:[%s176 + $0x80] sm:$0xff] %v1263
      %1296 = vst [vmem:[%s176 + $0x88] sm:$0xff] %v1264
      %1297 = vst [vmem:[%s176 + $0x90] sm:$0xff] %v1265
      %1298 = vst [vmem:[%s176 + $0x98] sm:$0xff] %v1266
      %1299 = vst [vmem:[%s176 + $0xa0] sm:$0xff] %v1267
      %1300 = vst [vmem:[%s176 + $0xa8] sm:$0xff] %v1268
      %1301 = vst [vmem:[%s176 + $0xb0] sm:$0xff] %v1269
      %1302 = vst [vmem:[%s176 + $0xb8] sm:$0xff] %v1270
      %1303 = vst [vmem:[%s176 + $0xc0] sm:$0xff] %v1271
      %1304 = vst [vmem:[%s176 + $0xc8] sm:$0xff] %v1272
      %1305 = vst [vmem:[%s176 + $0xd0] sm:$0xff] %v1273
      %1306 = vst [vmem:[%s176 + $0xd8] sm:$0xff] %v1274
      %1307 = vst [vmem:[%s176 + $0xe0] sm:$0xff] %v1275
      %1308 = vst [vmem:[%s176 + $0xe8] sm:$0xff] %v1276
      %1309 = vst [vmem:[%s176 + $0xf0] sm:$0xff] %v1277
      %1310 = vst [vmem:[%s176 + $0xf8] sm:$0xff] %v1278
      %s1311 = smul.u32 32, %s17
      %p1312 = scmp.lt.s32.totalorder %s1311, 63
      %s1313 = scalar_select %p1312, %s1311, 63
      %s1314 = smul.addr %s1313, 8
      %s1315 = scalar_lea.vmem %s2, %s1314
      // Predicated region
      $region33: #{graph_encoder_forward.8} parent=27 // pred_check
        %p1316 = pneg %p92
      $region34: #{graph_encoder_forward.8} parent=27 // pred_check_branch
        %1318 = sbr.rel (%p1316) target = $region36
      $region35: #{graph_encoder_forward.8} parent=27 // pred_region
        %s1319 = smul.u32 32, %s17
      $region36: #{graph_encoder_forward.8} parent=27 // pred_fallthru
        _
    $region28: #{graph_encoder_forward.8} parent=5 // pred_fallthru
      _
    %p1320 = scmp.le.s32.totalorder 2, %s8
    // Predicated region
    $region37: #{graph_encoder_forward.8} parent=5 // pred_check
      %p1321 = pneg %p1320
    $region38: #{graph_encoder_forward.8} parent=5 // pred_check_branch
      %1323 = sbr.rel (%p1321) target = $region40
    $region39: #{graph_encoder_forward.8} parent=5 // pred_region
      %s1324 = ssub.s32 %s8, 2
      // Predicated region
      $region41: #{graph_encoder_forward.8} parent=39 // pred_check
        %p1325 = pneg %p98
      $region42: #{graph_encoder_forward.8} parent=39 // pred_check_branch
        %1327 = sbr.rel (%p1325) target = $region44
      $region43: #{graph_encoder_forward.8} parent=39 // pred_region
        %s1328 = smul.u32 32, %s19
        %p1329 = scmp.lt.s32.totalorder %s1328, 63
        %s1330 = scalar_select %p1329, %s1328, 63
        %s1331 = smul.addr %s1330, 8
        %s1332 = scalar_lea.vmem %s2, %s1331
      $region44: #{graph_encoder_forward.8} parent=39 // pred_fallthru
        _
    $region40: #{graph_encoder_forward.8} parent=5 // pred_fallthru
      _
  $region6: #{graph_encoder_forward.8} parent=0 // loop_footer
    %s12 = sadd.s32 1, %s8
  $region7: #{graph_encoder_forward.8} parent=0 // loop_footer_branch
    %7 = sbr.rel target = $region3
  $region8: #{graph_encoder_forward.8} parent=0 // loop_exit
    _

// kernel: graph_encoder_forward.6
$region0: #{graph_encoder_forward.6}
  #allocation0 [shape = 'u32[]', space=smem, size = 0x4, offset = 0x4, fixed_abs, tag = 'smem constant byte address 0x4 - core index']
  #allocation1 [shape = 'u32[72,128]{1,0:T(1,128)}', space=vmem, size = 0x9000, scoped, tag = 'internal scratch']
  #allocation2 [shape = 'f32[256,128]{1,0:T(8,128)}', space=vmem, size = 0x20000, scoped, tag = 'scratch operand']
  %s0 = inlined_call_operand.hbm [shape: bf16[512,512], index: 0, kind: input, shape index: {}]
  %s1 = inlined_call_operand.vmem [shape: bf16[512,128], index: 1, kind: input, shape index: {}]
  %s2 = inlined_call_operand.vmem [shape: bf16[512,128], index: 2, kind: output, shape index: {}]
  %s3 = sld [smem:[#allocation0]]
  $region53: #{graph_encoder_forward.6} parent=0
    _
  %s5 = ssub.s32 1, %s3
  %s6 = scalar_select 0, %s5, %s3
  $region1: #{graph_encoder_forward.6} parent=0
    #allocation3 [shape = 'u8[524288]{0}', space=vmem, size = 0x80000, scoped, tag = 'input window, operand 0']
    #allocation4 [shape = 's32[2]{0}', space=sflag, size = 0x8, scoped, tag = 'scoped memory for graph_encoder_forward.6']
    %7 = vsyncpa [#allocation4], 0
    %s8 = scalar_lea.sflag [#allocation4], 1
    %9 = vsyncpa %s8, 0
    loop: start=0, step=1, limit=4
    $region2: #{graph_encoder_forward.6} parent=1 // loop_pre_header
      _
    $region3: #{graph_encoder_forward.6} parent=1 // loop_header
      %s11 = sphi 0, %s15
      %p12 = scmp.ge.s32.totalorder %s11, 4
      %s18 = sphi 0, %s30
      %s19 = sphi 0, %s26
      %s20 = sphi 0, %s18
      %s21 = sphi 0, %s19
      %s22 = sphi 0, %s20
      %s23 = sphi 0, %s21
      %s35 = sphi 0, %s37
      %s38 = sphi 0, %s35
      %s39 = sphi 0, %s38
      %s55 = sphi 0, %s39
      %s59 = sphi 0, %s59
      %s61 = sphi 0, %s59
      %s62 = sphi 0, %s61
      %s76 = sphi 0, %s62
      %s82 = sphi 0, %s84
      %s85 = sphi 0, %s82
      %s86 = sphi 0, %s85
      %s102 = sphi 0, %s86
    $region4: #{graph_encoder_forward.6} parent=1 // loop_header_branch
      %14 = sbr.rel (%p12) target = $region8
    $region5: #{graph_encoder_forward.6} parent=1 // loop_body
      %s16 = ssub.s32 %s11, 1
      %s17 = ssub.s32 %s11, 2
      %s24 = sadd.s32 1, %s19
      %p25 = scmp.ge.s32.totalorder %s24, 1
      %s26 = scalar_select %p25, 0, %s24
      %s27 = sadd.s32 1, %s18
      %s28 = scalar_select %p25, %s27, %s18
      %p29 = scmp.ge.s32.totalorder %s28, 2
      %s30 = scalar_select %p29, 0, %s28
      %s31 = ssub.s32 %s18, %s30
      %s32 = ssub.s32 %s19, %s26
      %s33 = sor.u32 %s31, %s32
      %p34 = scmp.eq.s32.totalorder %s33, 0
      %s36 = sadd.s32 %s35, 1
      %s37 = scalar_select %p34, %s35, %s36
      %p40 = pneg %p34
      %p41 = scmp.eq.s32.totalorder %s11, 1
      %p42 = por %p40, %p41
      %p43 = scmp.ne.s32.totalorder %s35, %s38
      %p44 = scmp.eq.s32.totalorder %s11, 0
      %p45 = por %p43, %p44
      %p46 = scmp.ne.s32.totalorder %s35, %s38
      %p47 = scmp.eq.s32.totalorder %s16, 1
      %p48 = por %p46, %p47
      %p49 = scmp.ne.s32.totalorder %s38, %s39
      %p50 = scmp.eq.s32.totalorder %s16, 0
      %p51 = por %p49, %p50
      %p52 = scmp.ne.s32.totalorder %s38, %s39
      %p53 = scmp.eq.s32.totalorder %s17, 1
      %p54 = por %p52, %p53
      %p56 = scmp.ne.s32.totalorder %s39, %s55
      %p57 = scmp.eq.s32.totalorder %s17, 0
      %p58 = por %p56, %p57
      %s60 = sadd.s32 %s59, 1
      %p63 = scmp.eq.s32.totalorder %s11, 1
      %p64 = scmp.ne.s32.totalorder %s59, %s61
      %p65 = scmp.eq.s32.totalorder %s11, 0
      %p66 = por %p64, %p65
      %p67 = scmp.ne.s32.totalorder %s59, %s61
      %p68 = scmp.eq.s32.totalorder %s16, 1
      %p69 = por %p67, %p68
      %p70 = scmp.ne.s32.totalorder %s61, %s62
      %p71 = scmp.eq.s32.totalorder %s16, 0
      %p72 = por %p70, %p71
      %p73 = scmp.ne.s32.totalorder %s61, %s62
      %p74 = scmp.eq.s32.totalorder %s17, 1
      %p75 = por %p73, %p74
      %p77 = scmp.ne.s32.totalorder %s62, %s76
      %p78 = scmp.eq.s32.totalorder %s17, 0
      %p79 = por %p77, %p78
      %s80 = ssub.s32 %s18, %s30
      %p81 = scmp.eq.s32.totalorder %s80, 0
      %s83 = sadd.s32 %s82, 1
      %s84 = scalar_select %p81, %s82, %s83
      %p87 = pneg %p81
      %p88 = scmp.eq.s32.totalorder %s11, 1
      %p89 = por %p87, %p88
      %p90 = scmp.ne.s32.totalorder %s82, %s85
      %p91 = scmp.eq.s32.totalorder %s11, 0
      %p92 = por %p90, %p91
      %p93 = scmp.ne.s32.totalorder %s82, %s85
      %p94 = scmp.eq.s32.totalorder %s16, 1
      %p95 = por %p93, %p94
      %p96 = scmp.ne.s32.totalorder %s85, %s86
      %p97 = scmp.eq.s32.totalorder %s16, 0
      %p98 = por %p96, %p97
      %p99 = scmp.ne.s32.totalorder %s85, %s86
      %p100 = scmp.eq.s32.totalorder %s17, 1
      %p101 = por %p99, %p100
      %p103 = scmp.ne.s32.totalorder %s86, %s102
      %p104 = scmp.eq.s32.totalorder %s17, 0
      %p105 = por %p103, %p104
      %p106 = scmp.le.s32.totalorder 1, %s11
      %p107 = scmp.lt.s32.totalorder %s11, 3
      %p108 = pnand %p106, %p107
      %p109 = pneg %p108
      // Predicated region
      $region9: #{graph_encoder_forward.6} parent=5 // pred_check
        _
      $region10: #{graph_encoder_forward.6} parent=5 // pred_check_branch
        %111 = sbr.rel (%p108) target = $region12
      $region11: #{graph_encoder_forward.6} parent=5 // pred_region
        %s112 = ssub.s32 %s11, 1
        // Predicated region
        $region13: #{graph_encoder_forward.6} parent=11 // pred_check
          %p113 = pneg %p72
        $region14: #{graph_encoder_forward.6} parent=11 // pred_check_branch
          %115 = sbr.rel (%p113) target = $region16
        $region15: #{graph_encoder_forward.6} parent=11 // pred_region
          _
        $region16: #{graph_encoder_forward.6} parent=11 // pred_fallthru
          _
      $region12: #{graph_encoder_forward.6} parent=5 // pred_fallthru
        _
      %p116 = scmp.lt.s32.totalorder %s11, 2
      // Predicated region
      $region17: #{graph_encoder_forward.6} parent=5 // pred_check
        %p117 = pneg %p116
      $region18: #{graph_encoder_forward.6} parent=5 // pred_check_branch
        %119 = sbr.rel (%p117) target = $region20
      $region19: #{graph_encoder_forward.6} parent=5 // pred_region
        // Predicated region
        $region21: #{graph_encoder_forward.6} parent=19 // pred_check
          %p120 = pneg %p45
        $region22: #{graph_encoder_forward.6} parent=19 // pred_check_branch
          %122 = sbr.rel (%p120) target = $region24
        $region23: #{graph_encoder_forward.6} parent=19 // pred_region
          %s123 = sand.u32 %s35, 1
          %s124 = scalar_lea.sflag [#allocation4], %s123
          %s125 = sand.u32 %s35, 1
          %s126 = smul.addr %s125, 512
          %s127 = scalar_lea.vmem [#allocation3], %s126
          %s128 = smul.u32 32, %s18
          %s129 = smul.u32 4, %s19
          %131 = vsyncadd %s124, 0
          %s132 = smul.addr %s128, 4
          %s133 = sadd.s32 %s129, %s132
          %s134 = smul.addr %s133, 4
          %s135 = scalar_lea.hbm %s0, %s134
          %s136 = sshll.u32 %s135, 4
          %s137 = int_to_ptr.hbm [resolvable:$true] %s136
          %s138 = sshll.u32 %s127, 4
          %s139 = int_to_ptr.vmem [resolvable:$true] %s138
          %144 = dma.hbm_to_vmem [thread:$0]  %s137, 8192, %s139, %s124, 256, 256, 16
        $region24: #{graph_encoder_forward.6} parent=19 // pred_fallthru
          _
      $region20: #{graph_encoder_forward.6} parent=5 // pred_fallthru
        _
      %p145 = scmp.le.s32.totalorder 1, %s11
      %p146 = scmp.lt.s32.totalorder %s11, 3
      %p147 = pnand %p145, %p146
      %p148 = pneg %p147
      // Predicated region
      $region25: #{graph_encoder_forward.6} parent=5 // pred_check
        _
      $region26: #{graph_encoder_forward.6} parent=5 // pred_check_branch
        %150 = sbr.rel (%p147) target = $region28
      $region27: #{graph_encoder_forward.6} parent=5 // pred_region
        %s151 = ssub.s32 %s11, 1
        %s152 = sand.u32 %s38, 1
        %s153 = scalar_lea.sflag [#allocation4], %s152
        %s154 = sand.u32 %s38, 1
        %s155 = smul.addr %s154, 512
        %s156 = scalar_lea.vmem [#allocation3], %s155
        // Predicated region
        $region29: #{graph_encoder_forward.6} parent=27 // pred_check
          %p157 = pneg %p51
        $region30: #{graph_encoder_forward.6} parent=27 // pred_check_branch
          %159 = sbr.rel (%p157) target = $region32
        $region31: #{graph_encoder_forward.6} parent=27 // pred_region
          %161 = dma.done %s153, 8192
        $region32: #{graph_encoder_forward.6} parent=27 // pred_fallthru
          _
        %s162 = sand.u32 %s38, 1
        %s163 = scalar_lea.sflag [#allocation4], %s162
        %s164 = sand.u32 %s38, 1
        %s165 = smul.addr %s164, 512
        %s166 = scalar_lea.vmem [#allocation3], %s165
        %p167 = pneg %p51
        %p168 = pneg %p48
        %p169 = pneg %p72
        %p170 = pneg %p69
        %p171 = pneg %p98
        %p172 = pneg %p95
        %s173 = smul.u32 32, %s20
        %p174 = scmp.lt.s32.totalorder %s173, 63
        %s175 = scalar_select %p174, %s173, 63
        %s176 = smul.addr %s175, 4
        %s177 = scalar_lea.vmem %s2, %s176
        %s178 = smul.u32 32, %s20
        %s179 = smul.u32 4, %s21
        %s180 = smul.u32 32, %s20
        %p181 = scmp.lt.s32.totalorder %s180, 63
        %s182 = scalar_select %p181, %s180, 63
        %s183 = smul.addr %s182, 4
        %s184 = scalar_lea.vmem %s2, %s183
        %s185 = smul.u32 32, %s20
        %p186 = scmp.eq.s32.totalorder %s21, 0
        // Predicated region
        $region33: #{graph_encoder_forward.6} parent=27 // pred_check
          %p187 = pneg %p186
        $region34: #{graph_encoder_forward.6} parent=27 // pred_check_branch
          %189 = sbr.rel (%p187) target = $region36
        $region35: #{graph_encoder_forward.6} parent=27 // pred_region
          %190 = vst [vmem:[#allocation2] sm:$0xff] 0.0
          %191 = vst [vmem:[#allocation2 + $0x8] sm:$0xff] 0.0
          %192 = vst [vmem:[#allocation2 + $0x10] sm:$0xff] 0.0
          %193 = vst [vmem:[#allocation2 + $0x18] sm:$0xff] 0.0
          %194 = vst [vmem:[#allocation2 + $0x20] sm:$0xff] 0.0
          %195 = vst [vmem:[#allocation2 + $0x28] sm:$0xff] 0.0
          %196 = vst [vmem:[#allocation2 + $0x30] sm:$0xff] 0.0
          %197 = vst [vmem:[#allocation2 + $0x38] sm:$0xff] 0.0
          %198 = vst [vmem:[#allocation2 + $0x40] sm:$0xff] 0.0
          %199 = vst [vmem:[#allocation2 + $0x48] sm:$0xff] 0.0
          %200 = vst [vmem:[#allocation2 + $0x50] sm:$0xff] 0.0
          %201 = vst [vmem:[#allocation2 + $0x58] sm:$0xff] 0.0
          %202 = vst [vmem:[#allocation2 + $0x60] sm:$0xff] 0.0
          %203 = vst [vmem:[#allocation2 + $0x68] sm:$0xff] 0.0
          %204 = vst [vmem:[#allocation2 + $0x70] sm:$0xff] 0.0
          %205 = vst [vmem:[#allocation2 + $0x78] sm:$0xff] 0.0
          %206 = vst [vmem:[#allocation2 + $0x80] sm:$0xff] 0.0
          %207 = vst [vmem:[#allocation2 + $0x88] sm:$0xff] 0.0
          %208 = vst [vmem:[#allocation2 + $0x90] sm:$0xff] 0.0
          %209 = vst [vmem:[#allocation2 + $0x98] sm:$0xff] 0.0
          %210 = vst [vmem:[#allocation2 + $0xa0] sm:$0xff] 0.0
          %211 = vst [vmem:[#allocation2 + $0xa8] sm:$0xff] 0.0
          %212 = vst [vmem:[#allocation2 + $0xb0] sm:$0xff] 0.0
          %213 = vst [vmem:[#allocation2 + $0xb8] sm:$0xff] 0.0
          %214 = vst [vmem:[#allocation2 + $0xc0] sm:$0xff] 0.0
          %215 = vst [vmem:[#allocation2 + $0xc8] sm:$0xff] 0.0
          %216 = vst [vmem:[#allocation2 + $0xd0] sm:$0xff] 0.0
          %217 = vst [vmem:[#allocation2 + $0xd8] sm:$0xff] 0.0
          %218 = vst [vmem:[#allocation2 + $0xe0] sm:$0xff] 0.0
          %219 = vst [vmem:[#allocation2 + $0xe8] sm:$0xff] 0.0
          %220 = vst [vmem:[#allocation2 + $0xf0] sm:$0xff] 0.0
          %221 = vst [vmem:[#allocation2 + $0xf8] sm:$0xff] 0.0
        $region36: #{graph_encoder_forward.6} parent=27 // pred_fallthru
          _
        %v222 = vld [vmem:[#allocation2] sm:$0xff]
        %v223 = vld [vmem:[#allocation2 + $0x8] sm:$0xff]
        %v224 = vld [vmem:[#allocation2 + $0x10] sm:$0xff]
        %v225 = vld [vmem:[#allocation2 + $0x18] sm:$0xff]
        %v226 = vld [vmem:[#allocation2 + $0x20] sm:$0xff]
        %v227 = vld [vmem:[#allocation2 + $0x28] sm:$0xff]
        %v228 = vld [vmem:[#allocation2 + $0x30] sm:$0xff]
        %v229 = vld [vmem:[#allocation2 + $0x38] sm:$0xff]
        %v230 = vld [vmem:[#allocation2 + $0x40] sm:$0xff]
        %v231 = vld [vmem:[#allocation2 + $0x48] sm:$0xff]
        %v232 = vld [vmem:[#allocation2 + $0x50] sm:$0xff]
        %v233 = vld [vmem:[#allocation2 + $0x58] sm:$0xff]
        %v234 = vld [vmem:[#allocation2 + $0x60] sm:$0xff]
        %v235 = vld [vmem:[#allocation2 + $0x68] sm:$0xff]
        %v236 = vld [vmem:[#allocation2 + $0x70] sm:$0xff]
        %v237 = vld [vmem:[#allocation2 + $0x78] sm:$0xff]
        %v238 = vld [vmem:[#allocation2 + $0x80] sm:$0xff]
        %v239 = vld [vmem:[#allocation2 + $0x88] sm:$0xff]
        %v240 = vld [vmem:[#allocation2 + $0x90] sm:$0xff]
        %v241 = vld [vmem:[#allocation2 + $0x98] sm:$0xff]
        %v242 = vld [vmem:[#allocation2 + $0xa0] sm:$0xff]
        %v243 = vld [vmem:[#allocation2 + $0xa8] sm:$0xff]
        %v244 = vld [vmem:[#allocation2 + $0xb0] sm:$0xff]
        %v245 = vld [vmem:[#allocation2 + $0xb8] sm:$0xff]
        %v246 = vld [vmem:[#allocation2 + $0xc0] sm:$0xff]
        %v247 = vld [vmem:[#allocation2 + $0xc8] sm:$0xff]
        %v248 = vld [vmem:[#allocation2 + $0xd0] sm:$0xff]
        %v249 = vld [vmem:[#allocation2 + $0xd8] sm:$0xff]
        %v250 = vld [vmem:[#allocation2 + $0xe0] sm:$0xff]
        %v251 = vld [vmem:[#allocation2 + $0xe8] sm:$0xff]
        %v252 = vld [vmem:[#allocation2 + $0xf0] sm:$0xff]
        %v253 = vld [vmem:[#allocation2 + $0xf8] sm:$0xff]
        %v254 = vld [vmem:[%s156] sm:$0xff]
        %v255 = vld [vmem:[%s156 + $0x8] sm:$0xff]
        %v256 = vld [vmem:[%s156 + $0x10] sm:$0xff]
        %v257 = vld [vmem:[%s156 + $0x18] sm:$0xff]
        %v258 = vld [vmem:[%s156 + $0x20] sm:$0xff]
        %v259 = vld [vmem:[%s156 + $0x28] sm:$0xff]
        %v260 = vld [vmem:[%s156 + $0x30] sm:$0xff]
        %v261 = vld [vmem:[%s156 + $0x38] sm:$0xff]
        %v262 = vld [vmem:[%s156 + $0x40] sm:$0xff]
        %v263 = vld [vmem:[%s156 + $0x48] sm:$0xff]
        %v264 = vld [vmem:[%s156 + $0x50] sm:$0xff]
        %v265 = vld [vmem:[%s156 + $0x58] sm:$0xff]
        %v266 = vld [vmem:[%s156 + $0x60] sm:$0xff]
        %v267 = vld [vmem:[%s156 + $0x68] sm:$0xff]
        %v268 = vld [vmem:[%s156 + $0x70] sm:$0xff]
        %v269 = vld [vmem:[%s156 + $0x78] sm:$0xff]
        %v270 = vld [vmem:[%s156 + $0x80] sm:$0xff]
        %v271 = vld [vmem:[%s156 + $0x88] sm:$0xff]
        %v272 = vld [vmem:[%s156 + $0x90] sm:$0xff]
        %v273 = vld [vmem:[%s156 + $0x98] sm:$0xff]
        %v274 = vld [vmem:[%s156 + $0xa0] sm:$0xff]
        %v275 = vld [vmem:[%s156 + $0xa8] sm:$0xff]
        %v276 = vld [vmem:[%s156 + $0xb0] sm:$0xff]
        %v277 = vld [vmem:[%s156 + $0xb8] sm:$0xff]
        %v278 = vld [vmem:[%s156 + $0xc0] sm:$0xff]
        %v279 = vld [vmem:[%s156 + $0xc8] sm:$0xff]
        %v280 = vld [vmem:[%s156 + $0xd0] sm:$0xff]
        %v281 = vld [vmem:[%s156 + $0xd8] sm:$0xff]
        %v282 = vld [vmem:[%s156 + $0xe0] sm:$0xff]
        %v283 = vld [vmem:[%s156 + $0xe8] sm:$0xff]
        %v284 = vld [vmem:[%s156 + $0xf0] sm:$0xff]
        %v285 = vld [vmem:[%s156 + $0xf8] sm:$0xff]
        %v286 = vld [vmem:[%s156 + $0x100] sm:$0xff]
        %v287 = vld [vmem:[%s156 + $0x108] sm:$0xff]
        %v288 = vld [vmem:[%s156 + $0x110] sm:$0xff]
        %v289 = vld [vmem:[%s156 + $0x118] sm:$0xff]
        %v290 = vld [vmem:[%s156 + $0x120] sm:$0xff]
        %v291 = vld [vmem:[%s156 + $0x128] sm:$0xff]
        %v292 = vld [vmem:[%s156 + $0x130] sm:$0xff]
        %v293 = vld [vmem:[%s156 + $0x138] sm:$0xff]
        %v294 = vld [vmem:[%s156 + $0x140] sm:$0xff]
        %v295 = vld [vmem:[%s156 + $0x148] sm:$0xff]
        %v296 = vld [vmem:[%s156 + $0x150] sm:$0xff]
        %v297 = vld [vmem:[%s156 + $0x158] sm:$0xff]
        %v298 = vld [vmem:[%s156 + $0x160] sm:$0xff]
        %v299 = vld [vmem:[%s156 + $0x168] sm:$0xff]
        %v300 = vld [vmem:[%s156 + $0x170] sm:$0xff]
        %v301 = vld [vmem:[%s156 + $0x178] sm:$0xff]
        %v302 = vld [vmem:[%s156 + $0x180] sm:$0xff]
        %v303 = vld [vmem:[%s156 + $0x188] sm:$0xff]
        %v304 = vld [vmem:[%s156 + $0x190] sm:$0xff]
        %v305 = vld [vmem:[%s156 + $0x198] sm:$0xff]
        %v306 = vld [vmem:[%s156 + $0x1a0] sm:$0xff]
        %v307 = vld [vmem:[%s156 + $0x1a8] sm:$0xff]
        %v308 = vld [vmem:[%s156 + $0x1b0] sm:$0xff]
        %v309 = vld [vmem:[%s156 + $0x1b8] sm:$0xff]
        %v310 = vld [vmem:[%s156 + $0x1c0] sm:$0xff]
        %v311 = vld [vmem:[%s156 + $0x1c8] sm:$0xff]
        %v312 = vld [vmem:[%s156 + $0x1d0] sm:$0xff]
        %v313 = vld [vmem:[%s156 + $0x1d8] sm:$0xff]
        %v314 = vld [vmem:[%s156 + $0x1e0] sm:$0xff]
        %v315 = vld [vmem:[%s156 + $0x1e8] sm:$0xff]
        %v316 = vld [vmem:[%s156 + $0x1f0] sm:$0xff]
        %v317 = vld [vmem:[%s156 + $0x1f8] sm:$0xff]
        %s318 = smul.u32 %s21, 512
        %s319 = sshra.s32 %s318, 3
        %s320 = sand.u32 %s318, 7
        %s321 = smul.addr %s319, 4
        %s322 = scalar_lea.vmem %s1, %s321
        %v323 = vld [vmem:[%s322] sm:$0xf]
        %v324 = vld [vmem:[%s322 + $0x4] sm:$0xf]
        %v325 = vld [vmem:[%s322 + $0x8] sm:$0xf]
        %v326 = vld [vmem:[%s322 + $0xc] sm:$0xf]
        %v327 = vld [vmem:[%s322 + $0x10] sm:$0xf]
        %v328 = vld [vmem:[%s322 + $0x14] sm:$0xf]
        %v329 = vld [vmem:[%s322 + $0x18] sm:$0xf]
        %v330 = vld [vmem:[%s322 + $0x1c] sm:$0xf]
        %v331 = vld [vmem:[%s322 + $0x20] sm:$0xf]
        %v332 = vld [vmem:[%s322 + $0x24] sm:$0xf]
        %v333 = vld [vmem:[%s322 + $0x28] sm:$0xf]
        %v334 = vld [vmem:[%s322 + $0x2c] sm:$0xf]
        %v335 = vld [vmem:[%s322 + $0x30] sm:$0xf]
        %v336 = vld [vmem:[%s322 + $0x34] sm:$0xf]
        %v337 = vld [vmem:[%s322 + $0x38] sm:$0xf]
        %v338 = vld [vmem:[%s322 + $0x3c] sm:$0xf]
        %v339 = vld [vmem:[%s322 + $0x40] sm:$0xf]
        %v340 = vld [vmem:[%s322 + $0x44] sm:$0xf]
        %v341 = vld [vmem:[%s322 + $0x48] sm:$0xf]
        %v342 = vld [vmem:[%s322 + $0x4c] sm:$0xf]
        %v343 = vld [vmem:[%s322 + $0x50] sm:$0xf]
        %v344 = vld [vmem:[%s322 + $0x54] sm:$0xf]
        %v345 = vld [vmem:[%s322 + $0x58] sm:$0xf]
        %v346 = vld [vmem:[%s322 + $0x5c] sm:$0xf]
        %v347 = vld [vmem:[%s322 + $0x60] sm:$0xf]
        %v348 = vld [vmem:[%s322 + $0x64] sm:$0xf]
        %v349 = vld [vmem:[%s322 + $0x68] sm:$0xf]
        %v350 = vld [vmem:[%s322 + $0x6c] sm:$0xf]
        %v351 = vld [vmem:[%s322 + $0x70] sm:$0xf]
        %v352 = vld [vmem:[%s322 + $0x74] sm:$0xf]
        %v353 = vld [vmem:[%s322 + $0x78] sm:$0xf]
        %v354 = vld [vmem:[%s322 + $0x7c] sm:$0xf]
        %v355 = vld [vmem:[%s322 + $0x80] sm:$0xf]
        %v356 = vld [vmem:[%s322 + $0x84] sm:$0xf]
        %v357 = vld [vmem:[%s322 + $0x88] sm:$0xf]
        %v358 = vld [vmem:[%s322 + $0x8c] sm:$0xf]
        %v359 = vld [vmem:[%s322 + $0x90] sm:$0xf]
        %v360 = vld [vmem:[%s322 + $0x94] sm:$0xf]
        %v361 = vld [vmem:[%s322 + $0x98] sm:$0xf]
        %v362 = vld [vmem:[%s322 + $0x9c] sm:$0xf]
        %v363 = vld [vmem:[%s322 + $0xa0] sm:$0xf]
        %v364 = vld [vmem:[%s322 + $0xa4] sm:$0xf]
        %v365 = vld [vmem:[%s322 + $0xa8] sm:$0xf]
        %v366 = vld [vmem:[%s322 + $0xac] sm:$0xf]
        %v367 = vld [vmem:[%s322 + $0xb0] sm:$0xf]
        %v368 = vld [vmem:[%s322 + $0xb4] sm:$0xf]
        %v369 = vld [vmem:[%s322 + $0xb8] sm:$0xf]
        %v370 = vld [vmem:[%s322 + $0xbc] sm:$0xf]
        %v371 = vld [vmem:[%s322 + $0xc0] sm:$0xf]
        %v372 = vld [vmem:[%s322 + $0xc4] sm:$0xf]
        %v373 = vld [vmem:[%s322 + $0xc8] sm:$0xf]
        %v374 = vld [vmem:[%s322 + $0xcc] sm:$0xf]
        %v375 = vld [vmem:[%s322 + $0xd0] sm:$0xf]
        %v376 = vld [vmem:[%s322 + $0xd4] sm:$0xf]
        %v377 = vld [vmem:[%s322 + $0xd8] sm:$0xf]
        %v378 = vld [vmem:[%s322 + $0xdc] sm:$0xf]
        %v379 = vld [vmem:[%s322 + $0xe0] sm:$0xf]
        %v380 = vld [vmem:[%s322 + $0xe4] sm:$0xf]
        %v381 = vld [vmem:[%s322 + $0xe8] sm:$0xf]
        %v382 = vld [vmem:[%s322 + $0xec] sm:$0xf]
        %v383 = vld [vmem:[%s322 + $0xf0] sm:$0xf]
        %v384 = vld [vmem:[%s322 + $0xf4] sm:$0xf]
        %v385 = vld [vmem:[%s322 + $0xf8] sm:$0xf]
        %v386 = vld [vmem:[%s322 + $0xfc] sm:$0xf]
        %v451 = vunpack.c.l.b16 %v254
        %v452 = vunpack.c.h.b16 %v254
        %v453 = vunpack.c.l.b16 %v255
        %v454 = vunpack.c.h.b16 %v255
        %v455 = vunpack.c.l.b16 %v256
        %v456 = vunpack.c.h.b16 %v256
        %v457 = vunpack.c.l.b16 %v257
        %v458 = vunpack.c.h.b16 %v257
        %v459 = vunpack.c.l.b16 %v258
        %v460 = vunpack.c.h.b16 %v258
        %v461 = vunpack.c.l.b16 %v259
        %v462 = vunpack.c.h.b16 %v259
        %v463 = vunpack.c.l.b16 %v260
        %v464 = vunpack.c.h.b16 %v260
        %v465 = vunpack.c.l.b16 %v261
        %v466 = vunpack.c.h.b16 %v261
        %v467 = vunpack.c.l.b16 %v262
        %v468 = vunpack.c.h.b16 %v262
        %v469 = vunpack.c.l.b16 %v263
        %v470 = vunpack.c.h.b16 %v263
        %v471 = vunpack.c.l.b16 %v264
        %v472 = vunpack.c.h.b16 %v264
        %v473 = vunpack.c.l.b16 %v265
        %v474 = vunpack.c.h.b16 %v265
        %v475 = vunpack.c.l.b16 %v266
        %v476 = vunpack.c.h.b16 %v266
        %v477 = vunpack.c.l.b16 %v267
        %v478 = vunpack.c.h.b16 %v267
        %v479 = vunpack.c.l.b16 %v268
        %v480 = vunpack.c.h.b16 %v268
        %v481 = vunpack.c.l.b16 %v269
        %v482 = vunpack.c.h.b16 %v269
        %v483 = vunpack.c.l.b16 %v270
        %v484 = vunpack.c.h.b16 %v270
        %v485 = vunpack.c.l.b16 %v271
        %v486 = vunpack.c.h.b16 %v271
        %v487 = vunpack.c.l.b16 %v272
        %v488 = vunpack.c.h.b16 %v272
        %v489 = vunpack.c.l.b16 %v273
        %v490 = vunpack.c.h.b16 %v273
        %v491 = vunpack.c.l.b16 %v274
        %v492 = vunpack.c.h.b16 %v274
        %v493 = vunpack.c.l.b16 %v275
        %v494 = vunpack.c.h.b16 %v275
        %v495 = vunpack.c.l.b16 %v276
        %v496 = vunpack.c.h.b16 %v276
        %v497 = vunpack.c.l.b16 %v277
        %v498 = vunpack.c.h.b16 %v277
        %v499 = vunpack.c.l.b16 %v278
        %v500 = vunpack.c.h.b16 %v278
        %v501 = vunpack.c.l.b16 %v279
        %v502 = vunpack.c.h.b16 %v279
        %v503 = vunpack.c.l.b16 %v280
        %v504 = vunpack.c.h.b16 %v280
        %v505 = vunpack.c.l.b16 %v281
        %v506 = vunpack.c.h.b16 %v281
        %v507 = vunpack.c.l.b16 %v282
        %v508 = vunpack.c.h.b16 %v282
        %v509 = vunpack.c.l.b16 %v283
        %v510 = vunpack.c.h.b16 %v283
        %v511 = vunpack.c.l.b16 %v284
        %v512 = vunpack.c.h.b16 %v284
        %v513 = vunpack.c.l.b16 %v285
        %v514 = vunpack.c.h.b16 %v285
        %v515 = vunpack.c.l.b16 %v286
        %v516 = vunpack.c.h.b16 %v286
        %v517 = vunpack.c.l.b16 %v287
        %v518 = vunpack.c.h.b16 %v287
        %v519 = vunpack.c.l.b16 %v288
        %v520 = vunpack.c.h.b16 %v288
        %v521 = vunpack.c.l.b16 %v289
        %v522 = vunpack.c.h.b16 %v289
        %v523 = vunpack.c.l.b16 %v290
        %v524 = vunpack.c.h.b16 %v290
        %v525 = vunpack.c.l.b16 %v291
        %v526 = vunpack.c.h.b16 %v291
        %v527 = vunpack.c.l.b16 %v292
        %v528 = vunpack.c.h.b16 %v292
        %v529 = vunpack.c.l.b16 %v293
        %v530 = vunpack.c.h.b16 %v293
        %v531 = vunpack.c.l.b16 %v294
        %v532 = vunpack.c.h.b16 %v294
        %v533 = vunpack.c.l.b16 %v295
        %v534 = vunpack.c.h.b16 %v295
        %v535 = vunpack.c.l.b16 %v296
        %v536 = vunpack.c.h.b16 %v296
        %v537 = vunpack.c.l.b16 %v297
        %v538 = vunpack.c.h.b16 %v297
        %v539 = vunpack.c.l.b16 %v298
        %v540 = vunpack.c.h.b16 %v298
        %v541 = vunpack.c.l.b16 %v299
        %v542 = vunpack.c.h.b16 %v299
        %v543 = vunpack.c.l.b16 %v300
        %v544 = vunpack.c.h.b16 %v300
        %v545 = vunpack.c.l.b16 %v301
        %v546 = vunpack.c.h.b16 %v301
        %v547 = vunpack.c.l.b16 %v302
        %v548 = vunpack.c.h.b16 %v302
        %v549 = vunpack.c.l.b16 %v303
        %v550 = vunpack.c.h.b16 %v303
        %v551 = vunpack.c.l.b16 %v304
        %v552 = vunpack.c.h.b16 %v304
        %v553 = vunpack.c.l.b16 %v305
        %v554 = vunpack.c.h.b16 %v305
        %v555 = vunpack.c.l.b16 %v306
        %v556 = vunpack.c.h.b16 %v306
        %v557 = vunpack.c.l.b16 %v307
        %v558 = vunpack.c.h.b16 %v307
        %v559 = vunpack.c.l.b16 %v308
        %v560 = vunpack.c.h.b16 %v308
        %v561 = vunpack.c.l.b16 %v309
        %v562 = vunpack.c.h.b16 %v309
        %v563 = vunpack.c.l.b16 %v310
        %v564 = vunpack.c.h.b16 %v310
        %v565 = vunpack.c.l.b16 %v311
        %v566 = vunpack.c.h.b16 %v311
        %v567 = vunpack.c.l.b16 %v312
        %v568 = vunpack.c.h.b16 %v312
        %v569 = vunpack.c.l.b16 %v313
        %v570 = vunpack.c.h.b16 %v313
        %v571 = vunpack.c.l.b16 %v314
        %v572 = vunpack.c.h.b16 %v314
        %v573 = vunpack.c.l.b16 %v315
        %v574 = vunpack.c.h.b16 %v315
        %v575 = vunpack.c.l.b16 %v316
        %v576 = vunpack.c.h.b16 %v316
        %v577 = vunpack.c.l.b16 %v317
        %v578 = vunpack.c.h.b16 %v317
        %v579 = vpack.c.b16 %v455, %v451
        %v580 = vpack.c.b16 %v456, %v452
        %v581 = vpack.c.b16 %v457, %v453
        %v582 = vpack.c.b16 %v458, %v454
        %v583 = vpack.c.b16 %v463, %v459
        %v584 = vpack.c.b16 %v464, %v460
        %v585 = vpack.c.b16 %v465, %v461
        %v586 = vpack.c.b16 %v466, %v462
        %v587 = vpack.c.b16 %v471, %v467
        %v588 = vpack.c.b16 %v472, %v468
        %v589 = vpack.c.b16 %v473, %v469
        %v590 = vpack.c.b16 %v474, %v470
        %v591 = vpack.c.b16 %v479, %v475
        %v592 = vpack.c.b16 %v480, %v476
        %v593 = vpack.c.b16 %v481, %v477
        %v594 = vpack.c.b16 %v482, %v478
        %v595 = vpack.c.b16 %v487, %v483
        %v596 = vpack.c.b16 %v488, %v484
        %v597 = vpack.c.b16 %v489, %v485
        %v598 = vpack.c.b16 %v490, %v486
        %v599 = vpack.c.b16 %v495, %v491
        %v600 = vpack.c.b16 %v496, %v492
        %v601 = vpack.c.b16 %v497, %v493
        %v602 = vpack.c.b16 %v498, %v494
        %v603 = vpack.c.b16 %v503, %v499
        %v604 = vpack.c.b16 %v504, %v500
        %v605 = vpack.c.b16 %v505, %v501
        %v606 = vpack.c.b16 %v506, %v502
        %v607 = vpack.c.b16 %v511, %v507
        %v608 = vpack.c.b16 %v512, %v508
        %v609 = vpack.c.b16 %v513, %v509
        %v610 = vpack.c.b16 %v514, %v510
        %v611 = vpack.c.b16 %v519, %v515
        %v612 = vpack.c.b16 %v520, %v516
        %v613 = vpack.c.b16 %v521, %v517
        %v614 = vpack.c.b16 %v522, %v518
        %v615 = vpack.c.b16 %v527, %v523
        %v616 = vpack.c.b16 %v528, %v524
        %v617 = vpack.c.b16 %v529, %v525
        %v618 = vpack.c.b16 %v530, %v526
        %v619 = vpack.c.b16 %v535, %v531
        %v620 = vpack.c.b16 %v536, %v532
        %v621 = vpack.c.b16 %v537, %v533
        %v622 = vpack.c.b16 %v538, %v534
        %v623 = vpack.c.b16 %v543, %v539
        %v624 = vpack.c.b16 %v544, %v540
        %v625 = vpack.c.b16 %v545, %v541
        %v626 = vpack.c.b16 %v546, %v542
        %v627 = vpack.c.b16 %v551, %v547
        %v628 = vpack.c.b16 %v552, %v548
        %v629 = vpack.c.b16 %v553, %v549
        %v630 = vpack.c.b16 %v554, %v550
        %v631 = vpack.c.b16 %v559, %v555
        %v632 = vpack.c.b16 %v560, %v556
        %v633 = vpack.c.b16 %v561, %v557
        %v634 = vpack.c.b16 %v562, %v558
        %v635 = vpack.c.b16 %v567, %v563
        %v636 = vpack.c.b16 %v568, %v564
        %v637 = vpack.c.b16 %v569, %v565
        %v638 = vpack.c.b16 %v570, %v566
        %v639 = vpack.c.b16 %v575, %v571
        %v640 = vpack.c.b16 %v576, %v572
        %v641 = vpack.c.b16 %v577, %v573
        %v642 = vpack.c.b16 %v578, %v574
        %v771 = vunpack.c.l.b16 %v323
        %v772 = vunpack.c.l.b16 %v324
        %v773 = vunpack.c.l.b16 %v325
        %v774 = vunpack.c.l.b16 %v326
        %v775 = vunpack.c.l.b16 %v327
        %v776 = vunpack.c.l.b16 %v328
        %v777 = vunpack.c.l.b16 %v329
        %v778 = vunpack.c.l.b16 %v330
        %v779 = vunpack.c.l.b16 %v331
        %v780 = vunpack.c.l.b16 %v332
        %v781 = vunpack.c.l.b16 %v333
        %v782 = vunpack.c.l.b16 %v334
        %v783 = vunpack.c.l.b16 %v335
        %v784 = vunpack.c.l.b16 %v336
        %v785 = vunpack.c.l.b16 %v337
        %v786 = vunpack.c.l.b16 %v338
        %v787 = vunpack.c.l.b16 %v339
        %v788 = vunpack.c.l.b16 %v340
        %v789 = vunpack.c.l.b16 %v341
        %v790 = vunpack.c.l.b16 %v342
        %v791 = vunpack.c.l.b16 %v343
        %v792 = vunpack.c.l.b16 %v344
        %v793 = vunpack.c.l.b16 %v345
        %v794 = vunpack.c.l.b16 %v346
        %v795 = vunpack.c.l.b16 %v347
        %v796 = vunpack.c.l.b16 %v348
        %v797 = vunpack.c.l.b16 %v349
        %v798 = vunpack.c.l.b16 %v350
        %v799 = vunpack.c.l.b16 %v351
        %v800 = vunpack.c.l.b16 %v352
        %v801 = vunpack.c.l.b16 %v353
        %v802 = vunpack.c.l.b16 %v354
        %v803 = vunpack.c.l.b16 %v355
        %v804 = vunpack.c.l.b16 %v356
        %v805 = vunpack.c.l.b16 %v357
        %v806 = vunpack.c.l.b16 %v358
        %v807 = vunpack.c.l.b16 %v359
        %v808 = vunpack.c.l.b16 %v360
        %v809 = vunpack.c.l.b16 %v361
        %v810 = vunpack.c.l.b16 %v362
        %v811 = vunpack.c.l.b16 %v363
        %v812 = vunpack.c.l.b16 %v364
        %v813 = vunpack.c.l.b16 %v365
        %v814 = vunpack.c.l.b16 %v366
        %v815 = vunpack.c.l.b16 %v367
        %v816 = vunpack.c.l.b16 %v368
        %v817 = vunpack.c.l.b16 %v369
        %v818 = vunpack.c.l.b16 %v370
        %v819 = vunpack.c.l.b16 %v371
        %v820 = vunpack.c.l.b16 %v372
        %v821 = vunpack.c.l.b16 %v373
        %v822 = vunpack.c.l.b16 %v374
        %v823 = vunpack.c.l.b16 %v375
        %v824 = vunpack.c.l.b16 %v376
        %v825 = vunpack.c.l.b16 %v377
        %v826 = vunpack.c.l.b16 %v378
        %v827 = vunpack.c.l.b16 %v379
        %v828 = vunpack.c.l.b16 %v380
        %v829 = vunpack.c.l.b16 %v381
        %v830 = vunpack.c.l.b16 %v382
        %v831 = vunpack.c.l.b16 %v383
        %v832 = vunpack.c.l.b16 %v384
        %v833 = vunpack.c.l.b16 %v385
        %v834 = vunpack.c.l.b16 %v386
        %v835 = vpack.c.b16 %v772, %v771
        %v836 = vpack.c.b16 %v774, %v773
        %v837 = vpack.c.b16 %v776, %v775
        %v838 = vpack.c.b16 %v778, %v777
        %v839 = vpack.c.b16 %v780, %v779
        %v840 = vpack.c.b16 %v782, %v781
        %v841 = vpack.c.b16 %v784, %v783
        %v842 = vpack.c.b16 %v786, %v785
        %v843 = vpack.c.b16 %v788, %v787
        %v844 = vpack.c.b16 %v790, %v789
        %v845 = vpack.c.b16 %v792, %v791
        %v846 = vpack.c.b16 %v794, %v793
        %v847 = vpack.c.b16 %v796, %v795
        %v848 = vpack.c.b16 %v798, %v797
        %v849 = vpack.c.b16 %v800, %v799
        %v850 = vpack.c.b16 %v802, %v801
        %v851 = vpack.c.b16 %v804, %v803
        %v852 = vpack.c.b16 %v806, %v805
        %v853 = vpack.c.b16 %v808, %v807
        %v854 = vpack.c.b16 %v810, %v809
        %v855 = vpack.c.b16 %v812, %v811
        %v856 = vpack.c.b16 %v814, %v813
        %v857 = vpack.c.b16 %v816, %v815
        %v858 = vpack.c.b16 %v818, %v817
        %v859 = vpack.c.b16 %v820, %v819
        %v860 = vpack.c.b16 %v822, %v821
        %v861 = vpack.c.b16 %v824, %v823
        %v862 = vpack.c.b16 %v826, %v825
        %v863 = vpack.c.b16 %v828, %v827
        %v864 = vpack.c.b16 %v830, %v829
        %v865 = vpack.c.b16 %v832, %v831
        %v866 = vpack.c.b16 %v834, %v833
        %899 = vmatpush.bf16.msra.mxu0 %v842
        %900 = vmatpush.bf16.msra.mxu0 %v841
        %901 = vmatpush.bf16.msra.mxu0 %v840
        %902 = vmatpush.bf16.msra.mxu0 %v839
        %903 = vmatpush.bf16.msra.mxu0 %v838
        %904 = vmatpush.bf16.msra.mxu0 %v837
        %905 = vmatpush.bf16.msra.mxu0 %v836
        %906 = vmatpush.bf16.msra.mxu0 %v835
        %907 = vmatmul.bf16.gmra.mxu0 %v579
        %v908 = vpop.f32.mrf.mxu0
        %v909 = vadd.f32 0.0, %v908
        %v910 = vpop.f32.mrf.mxu0
        %v911 = vadd.f32 0.0, %v910
        %912 = vmatmul.bf16.gmra.mxu0 %v583
        %v913 = vpop.f32.mrf.mxu0
        %v914 = vadd.f32 0.0, %v913
        %v915 = vpop.f32.mrf.mxu0
        %v916 = vadd.f32 0.0, %v915
        %917 = vmatmul.bf16.gmra.mxu0 %v587
        %v918 = vpop.f32.mrf.mxu0
        %v919 = vadd.f32 0.0, %v918
        %v920 = vpop.f32.mrf.mxu0
        %v921 = vadd.f32 0.0, %v920
        %922 = vmatmul.bf16.gmra.mxu0 %v591
        %v923 = vpop.f32.mrf.mxu0
        %v924 = vadd.f32 0.0, %v923
        %v925 = vpop.f32.mrf.mxu0
        %v926 = vadd.f32 0.0, %v925
        %927 = vmatmul.bf16.gmra.mxu0 %v595
        %v928 = vpop.f32.mrf.mxu0
        %v929 = vadd.f32 0.0, %v928
        %v930 = vpop.f32.mrf.mxu0
        %v931 = vadd.f32 0.0, %v930
        %932 = vmatmul.bf16.gmra.mxu0 %v599
        %v933 = vpop.f32.mrf.mxu0
        %v934 = vadd.f32 0.0, %v933
        %v935 = vpop.f32.mrf.mxu0
        %v936 = vadd.f32 0.0, %v935
        %937 = vmatmul.bf16.gmra.mxu0 %v603
        %v938 = vpop.f32.mrf.mxu0
        %v939 = vadd.f32 0.0, %v938
        %v940 = vpop.f32.mrf.mxu0
        %v941 = vadd.f32 0.0, %v940
        %942 = vmatmul.bf16.gmra.mxu0 %v607
        %v943 = vpop.f32.mrf.mxu0
        %v944 = vadd.f32 0.0, %v943
        %v945 = vpop.f32.mrf.mxu0
        %v946 = vadd.f32 0.0, %v945
        %947 = vmatmul.bf16.gmra.mxu0 %v611
        %v948 = vpop.f32.mrf.mxu0
        %v949 = vadd.f32 0.0, %v948
        %v950 = vpop.f32.mrf.mxu0
        %v951 = vadd.f32 0.0, %v950
        %952 = vmatmul.bf16.gmra.mxu0 %v615
        %v953 = vpop.f32.mrf.mxu0
        %v954 = vadd.f32 0.0, %v953
        %v955 = vpop.f32.mrf.mxu0
        %v956 = vadd.f32 0.0, %v955
        %957 = vmatmul.bf16.gmra.mxu0 %v619
        %v958 = vpop.f32.mrf.mxu0
        %v959 = vadd.f32 0.0, %v958
        %v960 = vpop.f32.mrf.mxu0
        %v961 = vadd.f32 0.0, %v960
        %962 = vmatmul.bf16.gmra.mxu0 %v623
        %v963 = vpop.f32.mrf.mxu0
        %v964 = vadd.f32 0.0, %v963
        %v965 = vpop.f32.mrf.mxu0
        %v966 = vadd.f32 0.0, %v965
        %967 = vmatmul.bf16.gmra.mxu0 %v627
        %v968 = vpop.f32.mrf.mxu0
        %v969 = vadd.f32 0.0, %v968
        %v970 = vpop.f32.mrf.mxu0
        %v971 = vadd.f32 0.0, %v970
        %972 = vmatmul.bf16.gmra.mxu0 %v631
        %v973 = vpop.f32.mrf.mxu0
        %v974 = vadd.f32 0.0, %v973
        %v975 = vpop.f32.mrf.mxu0
        %v976 = vadd.f32 0.0, %v975
        %977 = vmatmul.bf16.gmra.mxu0 %v635
        %v978 = vpop.f32.mrf.mxu0
        %v979 = vadd.f32 0.0, %v978
        %v980 = vpop.f32.mrf.mxu0
        %v981 = vadd.f32 0.0, %v980
        %982 = vmatmul.bf16.gmra.mxu0 %v639
        %v983 = vpop.f32.mrf.mxu0
        %v984 = vadd.f32 0.0, %v983
        %v985 = vpop.f32.mrf.mxu0
        %v986 = vadd.f32 0.0, %v985
        %987 = vdwg.mxu0
        %988 = vmatpush.bf16.msra.mxu0 %v850
        %989 = vmatpush.bf16.msra.mxu0 %v849
        %990 = vmatpush.bf16.msra.mxu0 %v848
        %991 = vmatpush.bf16.msra.mxu0 %v847
        %992 = vmatpush.bf16.msra.mxu0 %v846
        %993 = vmatpush.bf16.msra.mxu0 %v845
        %994 = vmatpush.bf16.msra.mxu0 %v844
        %995 = vmatpush.bf16.msra.mxu0 %v843
        %996 = vmatmul.bf16.gmra.mxu0 %v580
        %v997 = vpop.f32.mrf.mxu0
        %v998 = vadd.f32 %v909, %v997
        %v999 = vpop.f32.mrf.mxu0
        %v1000 = vadd.f32 %v911, %v999
        %1001 = vmatmul.bf16.gmra.mxu0 %v584
        %v1002 = vpop.f32.mrf.mxu0
        %v1003 = vadd.f32 %v914, %v1002
        %v1004 = vpop.f32.mrf.mxu0
        %v1005 = vadd.f32 %v916, %v1004
        %1006 = vmatmul.bf16.gmra.mxu0 %v588
        %v1007 = vpop.f32.mrf.mxu0
        %v1008 = vadd.f32 %v919, %v1007
        %v1009 = vpop.f32.mrf.mxu0
        %v1010 = vadd.f32 %v921, %v1009
        %1011 = vmatmul.bf16.gmra.mxu0 %v592
        %v1012 = vpop.f32.mrf.mxu0
        %v1013 = vadd.f32 %v924, %v1012
        %v1014 = vpop.f32.mrf.mxu0
        %v1015 = vadd.f32 %v926, %v1014
        %1016 = vmatmul.bf16.gmra.mxu0 %v596
        %v1017 = vpop.f32.mrf.mxu0
        %v1018 = vadd.f32 %v929, %v1017
        %v1019 = vpop.f32.mrf.mxu0
        %v1020 = vadd.f32 %v931, %v1019
        %1021 = vmatmul.bf16.gmra.mxu0 %v600
        %v1022 = vpop.f32.mrf.mxu0
        %v1023 = vadd.f32 %v934, %v1022
        %v1024 = vpop.f32.mrf.mxu0
        %v1025 = vadd.f32 %v936, %v1024
        %1026 = vmatmul.bf16.gmra.mxu0 %v604
        %v1027 = vpop.f32.mrf.mxu0
        %v1028 = vadd.f32 %v939, %v1027
        %v1029 = vpop.f32.mrf.mxu0
        %v1030 = vadd.f32 %v941, %v1029
        %1031 = vmatmul.bf16.gmra.mxu0 %v608
        %v1032 = vpop.f32.mrf.mxu0
        %v1033 = vadd.f32 %v944, %v1032
        %v1034 = vpop.f32.mrf.mxu0
        %v1035 = vadd.f32 %v946, %v1034
        %1036 = vmatmul.bf16.gmra.mxu0 %v612
        %v1037 = vpop.f32.mrf.mxu0
        %v1038 = vadd.f32 %v949, %v1037
        %v1039 = vpop.f32.mrf.mxu0
        %v1040 = vadd.f32 %v951, %v1039
        %1041 = vmatmul.bf16.gmra.mxu0 %v616
        %v1042 = vpop.f32.mrf.mxu0
        %v1043 = vadd.f32 %v954, %v1042
        %v1044 = vpop.f32.mrf.mxu0
        %v1045 = vadd.f32 %v956, %v1044
        %1046 = vmatmul.bf16.gmra.mxu0 %v620
        %v1047 = vpop.f32.mrf.mxu0
        %v1048 = vadd.f32 %v959, %v1047
        %v1049 = vpop.f32.mrf.mxu0
        %v1050 = vadd.f32 %v961, %v1049
        %1051 = vmatmul.bf16.gmra.mxu0 %v624
        %v1052 = vpop.f32.mrf.mxu0
        %v1053 = vadd.f32 %v964, %v1052
        %v1054 = vpop.f32.mrf.mxu0
        %v1055 = vadd.f32 %v966, %v1054
        %1056 = vmatmul.bf16.gmra.mxu0 %v628
        %v1057 = vpop.f32.mrf.mxu0
        %v1058 = vadd.f32 %v969, %v1057
        %v1059 = vpop.f32.mrf.mxu0
        %v1060 = vadd.f32 %v971, %v1059
        %1061 = vmatmul.bf16.gmra.mxu0 %v632
        %v1062 = vpop.f32.mrf.mxu0
        %v1063 = vadd.f32 %v974, %v1062
        %v1064 = vpop.f32.mrf.mxu0
        %v1065 = vadd.f32 %v976, %v1064
        %1066 = vmatmul.bf16.gmra.mxu0 %v636
        %v1067 = vpop.f32.mrf.mxu0
        %v1068 = vadd.f32 %v979, %v1067
        %v1069 = vpop.f32.mrf.mxu0
        %v1070 = vadd.f32 %v981, %v1069
        %1071 = vmatmul.bf16.gmra.mxu0 %v640
        %v1072 = vpop.f32.mrf.mxu0
        %v1073 = vadd.f32 %v984, %v1072
        %v1074 = vpop.f32.mrf.mxu0
        %v1075 = vadd.f32 %v986, %v1074
        %1076 = vdwg.mxu0
        %1077 = vmatpush.bf16.msra.mxu0 %v858
        %1078 = vmatpush.bf16.msra.mxu0 %v857
        %1079 = vmatpush.bf16.msra.mxu0 %v856
        %1080 = vmatpush.bf16.msra.mxu0 %v855
        %1081 = vmatpush.bf16.msra.mxu0 %v854
        %1082 = vmatpush.bf16.msra.mxu0 %v853
        %1083 = vmatpush.bf16.msra.mxu0 %v852
        %1084 = vmatpush.bf16.msra.mxu0 %v851
        %1085 = vmatmul.bf16.gmra.mxu0 %v581
        %v1086 = vpop.f32.mrf.mxu0
        %v1087 = vadd.f32 %v998, %v1086
        %v1088 = vpop.f32.mrf.mxu0
        %v1089 = vadd.f32 %v1000, %v1088
        %1090 = vmatmul.bf16.gmra.mxu0 %v585
        %v1091 = vpop.f32.mrf.mxu0
        %v1092 = vadd.f32 %v1003, %v1091
        %v1093 = vpop.f32.mrf.mxu0
        %v1094 = vadd.f32 %v1005, %v1093
        %1095 = vmatmul.bf16.gmra.mxu0 %v589
        %v1096 = vpop.f32.mrf.mxu0
        %v1097 = vadd.f32 %v1008, %v1096
        %v1098 = vpop.f32.mrf.mxu0
        %v1099 = vadd.f32 %v1010, %v1098
        %1100 = vmatmul.bf16.gmra.mxu0 %v593
        %v1101 = vpop.f32.mrf.mxu0
        %v1102 = vadd.f32 %v1013, %v1101
        %v1103 = vpop.f32.mrf.mxu0
        %v1104 = vadd.f32 %v1015, %v1103
        %1105 = vmatmul.bf16.gmra.mxu0 %v597
        %v1106 = vpop.f32.mrf.mxu0
        %v1107 = vadd.f32 %v1018, %v1106
        %v1108 = vpop.f32.mrf.mxu0
        %v1109 = vadd.f32 %v1020, %v1108
        %1110 = vmatmul.bf16.gmra.mxu0 %v601
        %v1111 = vpop.f32.mrf.mxu0
        %v1112 = vadd.f32 %v1023, %v1111
        %v1113 = vpop.f32.mrf.mxu0
        %v1114 = vadd.f32 %v1025, %v1113
        %1115 = vmatmul.bf16.gmra.mxu0 %v605
        %v1116 = vpop.f32.mrf.mxu0
        %v1117 = vadd.f32 %v1028, %v1116
        %v1118 = vpop.f32.mrf.mxu0
        %v1119 = vadd.f32 %v1030, %v1118
        %1120 = vmatmul.bf16.gmra.mxu0 %v609
        %v1121 = vpop.f32.mrf.mxu0
        %v1122 = vadd.f32 %v1033, %v1121
        %v1123 = vpop.f32.mrf.mxu0
        %v1124 = vadd.f32 %v1035, %v1123
        %1125 = vmatmul.bf16.gmra.mxu0 %v613
        %v1126 = vpop.f32.mrf.mxu0
        %v1127 = vadd.f32 %v1038, %v1126
        %v1128 = vpop.f32.mrf.mxu0
        %v1129 = vadd.f32 %v1040, %v1128
        %1130 = vmatmul.bf16.gmra.mxu0 %v617
        %v1131 = vpop.f32.mrf.mxu0
        %v1132 = vadd.f32 %v1043, %v1131
        %v1133 = vpop.f32.mrf.mxu0
        %v1134 = vadd.f32 %v1045, %v1133
        %1135 = vmatmul.bf16.gmra.mxu0 %v621
        %v1136 = vpop.f32.mrf.mxu0
        %v1137 = vadd.f32 %v1048, %v1136
        %v1138 = vpop.f32.mrf.mxu0
        %v1139 = vadd.f32 %v1050, %v1138
        %1140 = vmatmul.bf16.gmra.mxu0 %v625
        %v1141 = vpop.f32.mrf.mxu0
        %v1142 = vadd.f32 %v1053, %v1141
        %v1143 = vpop.f32.mrf.mxu0
        %v1144 = vadd.f32 %v1055, %v1143
        %1145 = vmatmul.bf16.gmra.mxu0 %v629
        %v1146 = vpop.f32.mrf.mxu0
        %v1147 = vadd.f32 %v1058, %v1146
        %v1148 = vpop.f32.mrf.mxu0
        %v1149 = vadd.f32 %v1060, %v1148
        %1150 = vmatmul.bf16.gmra.mxu0 %v633
        %v1151 = vpop.f32.mrf.mxu0
        %v1152 = vadd.f32 %v1063, %v1151
        %v1153 = vpop.f32.mrf.mxu0
        %v1154 = vadd.f32 %v1065, %v1153
        %1155 = vmatmul.bf16.gmra.mxu0 %v637
        %v1156 = vpop.f32.mrf.mxu0
        %v1157 = vadd.f32 %v1068, %v1156
        %v1158 = vpop.f32.mrf.mxu0
        %v1159 = vadd.f32 %v1070, %v1158
        %1160 = vmatmul.bf16.gmra.mxu0 %v641
        %v1161 = vpop.f32.mrf.mxu0
        %v1162 = vadd.f32 %v1073, %v1161
        %v1163 = vpop.f32.mrf.mxu0
        %v1164 = vadd.f32 %v1075, %v1163
        %1165 = vdwg.mxu0
        %1166 = vmatpush.bf16.msra.mxu0 %v866
        %1167 = vmatpush.bf16.msra.mxu0 %v865
        %1168 = vmatpush.bf16.msra.mxu0 %v864
        %1169 = vmatpush.bf16.msra.mxu0 %v863
        %1170 = vmatpush.bf16.msra.mxu0 %v862
        %1171 = vmatpush.bf16.msra.mxu0 %v861
        %1172 = vmatpush.bf16.msra.mxu0 %v860
        %1173 = vmatpush.bf16.msra.mxu0 %v859
        %1174 = vmatmul.bf16.gmra.mxu0 %v582
        %v1175 = vpop.f32.mrf.mxu0
        %v1176 = vadd.f32 %v1087, %v1175
        %v1177 = vpop.f32.mrf.mxu0
        %v1178 = vadd.f32 %v1089, %v1177
        %1179 = vmatmul.bf16.gmra.mxu0 %v586
        %v1180 = vpop.f32.mrf.mxu0
        %v1181 = vadd.f32 %v1092, %v1180
        %v1182 = vpop.f32.mrf.mxu0
        %v1183 = vadd.f32 %v1094, %v1182
        %1184 = vmatmul.bf16.gmra.mxu0 %v590
        %v1185 = vpop.f32.mrf.mxu0
        %v1186 = vadd.f32 %v1097, %v1185
        %v1187 = vpop.f32.mrf.mxu0
        %v1188 = vadd.f32 %v1099, %v1187
        %1189 = vmatmul.bf16.gmra.mxu0 %v594
        %v1190 = vpop.f32.mrf.mxu0
        %v1191 = vadd.f32 %v1102, %v1190
        %v1192 = vpop.f32.mrf.mxu0
        %v1193 = vadd.f32 %v1104, %v1192
        %1194 = vmatmul.bf16.gmra.mxu0 %v598
        %v1195 = vpop.f32.mrf.mxu0
        %v1196 = vadd.f32 %v1107, %v1195
        %v1197 = vpop.f32.mrf.mxu0
        %v1198 = vadd.f32 %v1109, %v1197
        %1199 = vmatmul.bf16.gmra.mxu0 %v602
        %v1200 = vpop.f32.mrf.mxu0
        %v1201 = vadd.f32 %v1112, %v1200
        %v1202 = vpop.f32.mrf.mxu0
        %v1203 = vadd.f32 %v1114, %v1202
        %1204 = vmatmul.bf16.gmra.mxu0 %v606
        %v1205 = vpop.f32.mrf.mxu0
        %v1206 = vadd.f32 %v1117, %v1205
        %v1207 = vpop.f32.mrf.mxu0
        %v1208 = vadd.f32 %v1119, %v1207
        %1209 = vmatmul.bf16.gmra.mxu0 %v610
        %v1210 = vpop.f32.mrf.mxu0
        %v1211 = vadd.f32 %v1122, %v1210
        %v1212 = vpop.f32.mrf.mxu0
        %v1213 = vadd.f32 %v1124, %v1212
        %1214 = vmatmul.bf16.gmra.mxu0 %v614
        %v1215 = vpop.f32.mrf.mxu0
        %v1216 = vadd.f32 %v1127, %v1215
        %v1217 = vpop.f32.mrf.mxu0
        %v1218 = vadd.f32 %v1129, %v1217
        %1219 = vmatmul.bf16.gmra.mxu0 %v618
        %v1220 = vpop.f32.mrf.mxu0
        %v1221 = vadd.f32 %v1132, %v1220
        %v1222 = vpop.f32.mrf.mxu0
        %v1223 = vadd.f32 %v1134, %v1222
        %1224 = vmatmul.bf16.gmra.mxu0 %v622
        %v1225 = vpop.f32.mrf.mxu0
        %v1226 = vadd.f32 %v1137, %v1225
        %v1227 = vpop.f32.mrf.mxu0
        %v1228 = vadd.f32 %v1139, %v1227
        %1229 = vmatmul.bf16.gmra.mxu0 %v626
        %v1230 = vpop.f32.mrf.mxu0
        %v1231 = vadd.f32 %v1142, %v1230
        %v1232 = vpop.f32.mrf.mxu0
        %v1233 = vadd.f32 %v1144, %v1232
        %1234 = vmatmul.bf16.gmra.mxu0 %v630
        %v1235 = vpop.f32.mrf.mxu0
        %v1236 = vadd.f32 %v1147, %v1235
        %v1237 = vpop.f32.mrf.mxu0
        %v1238 = vadd.f32 %v1149, %v1237
        %1239 = vmatmul.bf16.gmra.mxu0 %v634
        %v1240 = vpop.f32.mrf.mxu0
        %v1241 = vadd.f32 %v1152, %v1240
        %v1242 = vpop.f32.mrf.mxu0
        %v1243 = vadd.f32 %v1154, %v1242
        %1244 = vmatmul.bf16.gmra.mxu0 %v638
        %v1245 = vpop.f32.mrf.mxu0
        %v1246 = vadd.f32 %v1157, %v1245
        %v1247 = vpop.f32.mrf.mxu0
        %v1248 = vadd.f32 %v1159, %v1247
        %1249 = vmatmul.bf16.gmra.mxu0 %v642
        %v1250 = vpop.f32.mrf.mxu0
        %v1251 = vadd.f32 %v1162, %v1250
        %v1252 = vpop.f32.mrf.mxu0
        %v1253 = vadd.f32 %v1164, %v1252
        %1254 = vdwg.mxu0
        %v1255 = vadd.f32 %v222, %v1176
        %v1256 = vadd.f32 %v223, %v1178
        %v1257 = vadd.f32 %v224, %v1181
        %v1258 = vadd.f32 %v225, %v1183
        %v1259 = vadd.f32 %v226, %v1186
        %v1260 = vadd.f32 %v227, %v1188
        %v1261 = vadd.f32 %v228, %v1191
        %v1262 = vadd.f32 %v229, %v1193
        %v1263 = vadd.f32 %v230, %v1196
        %v1264 = vadd.f32 %v231, %v1198
        %v1265 = vadd.f32 %v232, %v1201
        %v1266 = vadd.f32 %v233, %v1203
        %v1267 = vadd.f32 %v234, %v1206
        %v1268 = vadd.f32 %v235, %v1208
        %v1269 = vadd.f32 %v236, %v1211
        %v1270 = vadd.f32 %v237, %v1213
        %v1271 = vadd.f32 %v238, %v1216
        %v1272 = vadd.f32 %v239, %v1218
        %v1273 = vadd.f32 %v240, %v1221
        %v1274 = vadd.f32 %v241, %v1223
        %v1275 = vadd.f32 %v242, %v1226
        %v1276 = vadd.f32 %v243, %v1228
        %v1277 = vadd.f32 %v244, %v1231
        %v1278 = vadd.f32 %v245, %v1233
        %v1279 = vadd.f32 %v246, %v1236
        %v1280 = vadd.f32 %v247, %v1238
        %v1281 = vadd.f32 %v248, %v1241
        %v1282 = vadd.f32 %v249, %v1243
        %v1283 = vadd.f32 %v250, %v1246
        %v1284 = vadd.f32 %v251, %v1248
        %v1285 = vadd.f32 %v252, %v1251
        %v1286 = vadd.f32 %v253, %v1253
        %1287 = vst [vmem:[#allocation2] sm:$0xff] %v1255
        %1288 = vst [vmem:[#allocation2 + $0x8] sm:$0xff] %v1256
        %1289 = vst [vmem:[#allocation2 + $0x10] sm:$0xff] %v1257
        %1290 = vst [vmem:[#allocation2 + $0x18] sm:$0xff] %v1258
        %1291 = vst [vmem:[#allocation2 + $0x20] sm:$0xff] %v1259
        %1292 = vst [vmem:[#allocation2 + $0x28] sm:$0xff] %v1260
        %1293 = vst [vmem:[#allocation2 + $0x30] sm:$0xff] %v1261
        %1294 = vst [vmem:[#allocation2 + $0x38] sm:$0xff] %v1262
        %1295 = vst [vmem:[#allocation2 + $0x40] sm:$0xff] %v1263
        %1296 = vst [vmem:[#allocation2 + $0x48] sm:$0xff] %v1264
        %1297 = vst [vmem:[#allocation2 + $0x50] sm:$0xff] %v1265
        %1298 = vst [vmem:[#allocation2 + $0x58] sm:$0xff] %v1266
        %1299 = vst [vmem:[#allocation2 + $0x60] sm:$0xff] %v1267
        %1300 = vst [vmem:[#allocation2 + $0x68] sm:$0xff] %v1268
        %1301 = vst [vmem:[#allocation2 + $0x70] sm:$0xff] %v1269
        %1302 = vst [vmem:[#allocation2 + $0x78] sm:$0xff] %v1270
        %1303 = vst [vmem:[#allocation2 + $0x80] sm:$0xff] %v1271
        %1304 = vst [vmem:[#allocation2 + $0x88] sm:$0xff] %v1272
        %1305 = vst [vmem:[#allocation2 + $0x90] sm:$0xff] %v1273
        %1306 = vst [vmem:[#allocation2 + $0x98] sm:$0xff] %v1274
        %1307 = vst [vmem:[#allocation2 + $0xa0] sm:$0xff] %v1275
        %1308 = vst [vmem:[#allocation2 + $0xa8] sm:$0xff] %v1276
        %1309 = vst [vmem:[#allocation2 + $0xb0] sm:$0xff] %v1277
        %1310 = vst [vmem:[#allocation2 + $0xb8] sm:$0xff] %v1278
        %1311 = vst [vmem:[#allocation2 + $0xc0] sm:$0xff] %v1279
        %1312 = vst [vmem:[#allocation2 + $0xc8] sm:$0xff] %v1280
        %1313 = vst [vmem:[#allocation2 + $0xd0] sm:$0xff] %v1281
        %1314 = vst [vmem:[#allocation2 + $0xd8] sm:$0xff] %v1282
        %1315 = vst [vmem:[#allocation2 + $0xe0] sm:$0xff] %v1283
        %1316 = vst [vmem:[#allocation2 + $0xe8] sm:$0xff] %v1284
        %1317 = vst [vmem:[#allocation2 + $0xf0] sm:$0xff] %v1285
        %1318 = vst [vmem:[#allocation2 + $0xf8] sm:$0xff] %v1286
        // Predicated region
        $region37: #{graph_encoder_forward.6} parent=27 // pred_check
          %p1319 = pneg %p186
        $region38: #{graph_encoder_forward.6} parent=27 // pred_check_branch
          %1321 = sbr.rel (%p1319) target = $region40
        $region39: #{graph_encoder_forward.6} parent=27 // pred_region
          %v1322 = vld [vmem:[#allocation2] sm:$0xff]
          %v1323 = vld [vmem:[#allocation2 + $0x8] sm:$0xff]
          %v1324 = vld [vmem:[#allocation2 + $0x10] sm:$0xff]
          %v1325 = vld [vmem:[#allocation2 + $0x18] sm:$0xff]
          %v1326 = vld [vmem:[#allocation2 + $0x20] sm:$0xff]
          %v1327 = vld [vmem:[#allocation2 + $0x28] sm:$0xff]
          %v1328 = vld [vmem:[#allocation2 + $0x30] sm:$0xff]
          %v1329 = vld [vmem:[#allocation2 + $0x38] sm:$0xff]
          %v1330 = vld [vmem:[#allocation2 + $0x40] sm:$0xff]
          %v1331 = vld [vmem:[#allocation2 + $0x48] sm:$0xff]
          %v1332 = vld [vmem:[#allocation2 + $0x50] sm:$0xff]
          %v1333 = vld [vmem:[#allocation2 + $0x58] sm:$0xff]
          %v1334 = vld [vmem:[#allocation2 + $0x60] sm:$0xff]
          %v1335 = vld [vmem:[#allocation2 + $0x68] sm:$0xff]
          %v1336 = vld [vmem:[#allocation2 + $0x70] sm:$0xff]
          %v1337 = vld [vmem:[#allocation2 + $0x78] sm:$0xff]
          %v1338 = vld [vmem:[#allocation2 + $0x80] sm:$0xff]
          %v1339 = vld [vmem:[#allocation2 + $0x88] sm:$0xff]
          %v1340 = vld [vmem:[#allocation2 + $0x90] sm:$0xff]
          %v1341 = vld [vmem:[#allocation2 + $0x98] sm:$0xff]
          %v1342 = vld [vmem:[#allocation2 + $0xa0] sm:$0xff]
          %v1343 = vld [vmem:[#allocation2 + $0xa8] sm:$0xff]
          %v1344 = vld [vmem:[#allocation2 + $0xb0] sm:$0xff]
          %v1345 = vld [vmem:[#allocation2 + $0xb8] sm:$0xff]
          %v1346 = vld [vmem:[#allocation2 + $0xc0] sm:$0xff]
          %v1347 = vld [vmem:[#allocation2 + $0xc8] sm:$0xff]
          %v1348 = vld [vmem:[#allocation2 + $0xd0] sm:$0xff]
          %v1349 = vld [vmem:[#allocation2 + $0xd8] sm:$0xff]
          %v1350 = vld [vmem:[#allocation2 + $0xe0] sm:$0xff]
          %v1351 = vld [vmem:[#allocation2 + $0xe8] sm:$0xff]
          %v1352 = vld [vmem:[#allocation2 + $0xf0] sm:$0xff]
          %v1353 = vld [vmem:[#allocation2 + $0xf8] sm:$0xff]
          %v1354 = vmax.f32 %v1322, 0.0
          %v1355 = vmax.f32 %v1323, 0.0
          %v1356 = vmax.f32 %v1324, 0.0
          %v1357 = vmax.f32 %v1325, 0.0
          %v1358 = vmax.f32 %v1326, 0.0
          %v1359 = vmax.f32 %v1327, 0.0
          %v1360 = vmax.f32 %v1328, 0.0
          %v1361 = vmax.f32 %v1329, 0.0
          %v1362 = vmax.f32 %v1330, 0.0
          %v1363 = vmax.f32 %v1331, 0.0
          %v1364 = vmax.f32 %v1332, 0.0
          %v1365 = vmax.f32 %v1333, 0.0
          %v1366 = vmax.f32 %v1334, 0.0
          %v1367 = vmax.f32 %v1335, 0.0
          %v1368 = vmax.f32 %v1336, 0.0
          %v1369 = vmax.f32 %v1337, 0.0
          %v1370 = vmax.f32 %v1338, 0.0
          %v1371 = vmax.f32 %v1339, 0.0
          %v1372 = vmax.f32 %v1340, 0.0
          %v1373 = vmax.f32 %v1341, 0.0
          %v1374 = vmax.f32 %v1342, 0.0
          %v1375 = vmax.f32 %v1343, 0.0
          %v1376 = vmax.f32 %v1344, 0.0
          %v1377 = vmax.f32 %v1345, 0.0
          %v1378 = vmax.f32 %v1346, 0.0
          %v1379 = vmax.f32 %v1347, 0.0
          %v1380 = vmax.f32 %v1348, 0.0
          %v1381 = vmax.f32 %v1349, 0.0
          %v1382 = vmax.f32 %v1350, 0.0
          %v1383 = vmax.f32 %v1351, 0.0
          %v1384 = vmax.f32 %v1352, 0.0
          %v1385 = vmax.f32 %v1353, 0.0
          %v1386 = vpack.c.bf16 %v1354, %v1354
          %v1387 = vpack.c.bf16 %v1355, %v1355
          %v1388 = vpack.c.bf16 %v1356, %v1356
          %v1389 = vpack.c.bf16 %v1357, %v1357
          %v1390 = vpack.c.bf16 %v1358, %v1358
          %v1391 = vpack.c.bf16 %v1359, %v1359
          %v1392 = vpack.c.bf16 %v1360, %v1360
          %v1393 = vpack.c.bf16 %v1361, %v1361
          %v1394 = vpack.c.bf16 %v1362, %v1362
          %v1395 = vpack.c.bf16 %v1363, %v1363
          %v1396 = vpack.c.bf16 %v1364, %v1364
          %v1397 = vpack.c.bf16 %v1365, %v1365
          %v1398 = vpack.c.bf16 %v1366, %v1366
          %v1399 = vpack.c.bf16 %v1367, %v1367
          %v1400 = vpack.c.bf16 %v1368, %v1368
          %v1401 = vpack.c.bf16 %v1369, %v1369
          %v1402 = vpack.c.bf16 %v1370, %v1370
          %v1403 = vpack.c.bf16 %v1371, %v1371
          %v1404 = vpack.c.bf16 %v1372, %v1372
          %v1405 = vpack.c.bf16 %v1373, %v1373
          %v1406 = vpack.c.bf16 %v1374, %v1374
          %v1407 = vpack.c.bf16 %v1375, %v1375
          %v1408 = vpack.c.bf16 %v1376, %v1376
          %v1409 = vpack.c.bf16 %v1377, %v1377
          %v1410 = vpack.c.bf16 %v1378, %v1378
          %v1411 = vpack.c.bf16 %v1379, %v1379
          %v1412 = vpack.c.bf16 %v1380, %v1380
          %v1413 = vpack.c.bf16 %v1381, %v1381
          %v1414 = vpack.c.bf16 %v1382, %v1382
          %v1415 = vpack.c.bf16 %v1383, %v1383
          %v1416 = vpack.c.bf16 %v1384, %v1384
          %v1417 = vpack.c.bf16 %v1385, %v1385
          %1418 = vst [vmem:[%s184] sm:$0xf] %v1386
          %1419 = vst [vmem:[%s184 + $0x4] sm:$0xf] %v1387
          %1420 = vst [vmem:[%s184 + $0x8] sm:$0xf] %v1388
          %1421 = vst [vmem:[%s184 + $0xc] sm:$0xf] %v1389
          %1422 = vst [vmem:[%s184 + $0x10] sm:$0xf] %v1390
          %1423 = vst [vmem:[%s184 + $0x14] sm:$0xf] %v1391
          %1424 = vst [vmem:[%s184 + $0x18] sm:$0xf] %v1392
          %1425 = vst [vmem:[%s184 + $0x1c] sm:$0xf] %v1393
          %1426 = vst [vmem:[%s184 + $0x20] sm:$0xf] %v1394
          %1427 = vst [vmem:[%s184 + $0x24] sm:$0xf] %v1395
          %1428 = vst [vmem:[%s184 + $0x28] sm:$0xf] %v1396
          %1429 = vst [vmem:[%s184 + $0x2c] sm:$0xf] %v1397
          %1430 = vst [vmem:[%s184 + $0x30] sm:$0xf] %v1398
          %1431 = vst [vmem:[%s184 + $0x34] sm:$0xf] %v1399
          %1432 = vst [vmem:[%s184 + $0x38] sm:$0xf] %v1400
          %1433 = vst [vmem:[%s184 + $0x3c] sm:$0xf] %v1401
          %1434 = vst [vmem:[%s184 + $0x40] sm:$0xf] %v1402
          %1435 = vst [vmem:[%s184 + $0x44] sm:$0xf] %v1403
          %1436 = vst [vmem:[%s184 + $0x48] sm:$0xf] %v1404
          %1437 = vst [vmem:[%s184 + $0x4c] sm:$0xf] %v1405
          %1438 = vst [vmem:[%s184 + $0x50] sm:$0xf] %v1406
          %1439 = vst [vmem:[%s184 + $0x54] sm:$0xf] %v1407
          %1440 = vst [vmem:[%s184 + $0x58] sm:$0xf] %v1408
          %1441 = vst [vmem:[%s184 + $0x5c] sm:$0xf] %v1409
          %1442 = vst [vmem:[%s184 + $0x60] sm:$0xf] %v1410
          %1443 = vst [vmem:[%s184 + $0x64] sm:$0xf] %v1411
          %1444 = vst [vmem:[%s184 + $0x68] sm:$0xf] %v1412
          %1445 = vst [vmem:[%s184 + $0x6c] sm:$0xf] %v1413
          %1446 = vst [vmem:[%s184 + $0x70] sm:$0xf] %v1414
          %1447 = vst [vmem:[%s184 + $0x74] sm:$0xf] %v1415
          %1448 = vst [vmem:[%s184 + $0x78] sm:$0xf] %v1416
          %1449 = vst [vmem:[%s184 + $0x7c] sm:$0xf] %v1417
        $region40: #{graph_encoder_forward.6} parent=27 // pred_fallthru
          _
        %s1450 = smul.u32 32, %s20
        %p1451 = scmp.lt.s32.totalorder %s1450, 63
        %s1452 = scalar_select %p1451, %s1450, 63
        %s1453 = smul.addr %s1452, 4
        %s1454 = scalar_lea.vmem %s2, %s1453
        // Predicated region
        $region41: #{graph_encoder_forward.6} parent=27 // pred_check
          %p1455 = pneg %p95
        $region42: #{graph_encoder_forward.6} parent=27 // pred_check_branch
          %1457 = sbr.rel (%p1455) target = $region44
        $region43: #{graph_encoder_forward.6} parent=27 // pred_region
          %s1458 = smul.u32 32, %s20
        $region44: #{graph_encoder_forward.6} parent=27 // pred_fallthru
          _
      $region28: #{graph_encoder_forward.6} parent=5 // pred_fallthru
        _
      %p1459 = scmp.le.s32.totalorder 2, %s11
      // Predicated region
      $region45: #{graph_encoder_forward.6} parent=5 // pred_check
        %p1460 = pneg %p1459
      $region46: #{graph_encoder_forward.6} parent=5 // pred_check_branch
        %1462 = sbr.rel (%p1460) target = $region48
      $region47: #{graph_encoder_forward.6} parent=5 // pred_region
        %s1463 = ssub.s32 %s11, 2
        // Predicated region
        $region49: #{graph_encoder_forward.6} parent=47 // pred_check
          %p1464 = pneg %p101
        $region50: #{graph_encoder_forward.6} parent=47 // pred_check_branch
          %1466 = sbr.rel (%p1464) target = $region52
        $region51: #{graph_encoder_forward.6} parent=47 // pred_region
          %s1467 = smul.u32 32, %s22
          %p1468 = scmp.lt.s32.totalorder %s1467, 63
          %s1469 = scalar_select %p1468, %s1467, 63
          %s1470 = smul.addr %s1469, 4
          %s1471 = scalar_lea.vmem %s2, %s1470
        $region52: #{graph_encoder_forward.6} parent=47 // pred_fallthru
          _
      $region48: #{graph_encoder_forward.6} parent=5 // pred_fallthru
        _
    $region6: #{graph_encoder_forward.6} parent=1 // loop_footer
      %s15 = sadd.s32 1, %s11
    $region7: #{graph_encoder_forward.6} parent=1 // loop_footer_branch
      %10 = sbr.rel target = $region3
    $region8: #{graph_encoder_forward.6} parent=1 // loop_exit
      _
    %1472 = vsyncpa [#allocation4], 1
    %s1473 = scalar_lea.sflag [#allocation4], 1
    %1474 = vsyncpa %s1473, 1

// kernel: graph_encoder_forward.9
$region0: #{graph_encoder_forward.9}
  #allocation0 [shape = 'u32[]', space=smem, size = 0x4, offset = 0x4, fixed_abs, tag = 'smem constant byte address 0x4 - core index']
  #allocation1 [shape = 'u32[72,128]{1,0:T(1,128)}', space=vmem, size = 0x9000, scoped, tag = 'internal scratch']
  %s0 = inlined_call_operand.vmem [shape: f32[512,128], index: 0, kind: input, shape index: {}]
  %s1 = inlined_call_operand.vmem [shape: f32[128,128], index: 1, kind: input, shape index: {}]
  %s2 = inlined_call_operand.vmem [shape: f32[1,128], index: 2, kind: input, shape index: {}]
  %s3 = inlined_call_operand.vmem [shape: f32[128,128], index: 3, kind: input, shape index: {}]
  %s4 = inlined_call_operand.vmem [shape: f32[1,128], index: 4, kind: input, shape index: {}]
  %s5 = inlined_call_operand.hbm [shape: f32[512,128], index: 5, kind: output, shape index: {}]
  %s6 = sld [smem:[#allocation0]]
  $region30: #{graph_encoder_forward.9} parent=0
    _
  %s8 = ssub.s32 1, %s6
  %s9 = scalar_select 0, %s8, %s6
  $region1: #{graph_encoder_forward.9} parent=0
    #allocation2 [shape = 'u8[262144]{0}', space=vmem, size = 0x40000, scoped, tag = 'output window, operand 0, single buffered']
    #allocation3 [shape = 's32[1]{0}', space=sflag, size = 0x4, scoped, tag = 'scoped memory for graph_encoder_forward.9']
    %10 = vsyncpa [#allocation3], 0
    // Predicated region
    $region2: #{graph_encoder_forward.9} parent=1 // pred_check
      _
    $region3: #{graph_encoder_forward.9} parent=1 // pred_check_branch
      %12 = sbr.rel (0) target = $region5
    $region4: #{graph_encoder_forward.9} parent=1 // pred_region
      _
    $region5: #{graph_encoder_forward.9} parent=1 // pred_fallthru
      _
    // Predicated region
    $region6: #{graph_encoder_forward.9} parent=1 // pred_check
      _
    $region7: #{graph_encoder_forward.9} parent=1 // pred_check_branch
      %14 = sbr.rel (0) target = $region9
    $region8: #{graph_encoder_forward.9} parent=1 // pred_region
      _
    $region9: #{graph_encoder_forward.9} parent=1 // pred_fallthru
      _
    // Predicated region
    $region10: #{graph_encoder_forward.9} parent=1 // pred_check
      _
    $region11: #{graph_encoder_forward.9} parent=1 // pred_check_branch
      %16 = sbr.rel (0) target = $region13
    $region12: #{graph_encoder_forward.9} parent=1 // pred_region
      _
    $region13: #{graph_encoder_forward.9} parent=1 // pred_fallthru
      _
    // Predicated region
    $region14: #{graph_encoder_forward.9} parent=1 // pred_check
      _
    $region15: #{graph_encoder_forward.9} parent=1 // pred_check_branch
      %18 = sbr.rel (0) target = $region17
    $region16: #{graph_encoder_forward.9} parent=1 // pred_region
      _
    $region17: #{graph_encoder_forward.9} parent=1 // pred_fallthru
      _
    // Predicated region
    $region18: #{graph_encoder_forward.9} parent=1 // pred_check
      _
    $region19: #{graph_encoder_forward.9} parent=1 // pred_check_branch
      %20 = sbr.rel (0) target = $region21
    $region20: #{graph_encoder_forward.9} parent=1 // pred_region
      _
    $region21: #{graph_encoder_forward.9} parent=1 // pred_fallthru
      _
    %v21 = vld [vmem:[%s0] sm:$0xff]
    %v22 = vld [vmem:[%s0 + $0x8] sm:$0xff]
    %v23 = vld [vmem:[%s0 + $0x10] sm:$0xff]
    %v24 = vld [vmem:[%s0 + $0x18] sm:$0xff]
    %v25 = vld [vmem:[%s0 + $0x20] sm:$0xff]
    %v26 = vld [vmem:[%s0 + $0x28] sm:$0xff]
    %v27 = vld [vmem:[%s0 + $0x30] sm:$0xff]
    %v28 = vld [vmem:[%s0 + $0x38] sm:$0xff]
    %v29 = vld [vmem:[%s0 + $0x40] sm:$0xff]
    %v30 = vld [vmem:[%s0 + $0x48] sm:$0xff]
    %v31 = vld [vmem:[%s0 + $0x50] sm:$0xff]
    %v32 = vld [vmem:[%s0 + $0x58] sm:$0xff]
    %v33 = vld [vmem:[%s0 + $0x60] sm:$0xff]
    %v34 = vld [vmem:[%s0 + $0x68] sm:$0xff]
    %v35 = vld [vmem:[%s0 + $0x70] sm:$0xff]
    %v36 = vld [vmem:[%s0 + $0x78] sm:$0xff]
    %v37 = vld [vmem:[%s0 + $0x80] sm:$0xff]
    %v38 = vld [vmem:[%s0 + $0x88] sm:$0xff]
    %v39 = vld [vmem:[%s0 + $0x90] sm:$0xff]
    %v40 = vld [vmem:[%s0 + $0x98] sm:$0xff]
    %v41 = vld [vmem:[%s0 + $0xa0] sm:$0xff]
    %v42 = vld [vmem:[%s0 + $0xa8] sm:$0xff]
    %v43 = vld [vmem:[%s0 + $0xb0] sm:$0xff]
    %v44 = vld [vmem:[%s0 + $0xb8] sm:$0xff]
    %v45 = vld [vmem:[%s0 + $0xc0] sm:$0xff]
    %v46 = vld [vmem:[%s0 + $0xc8] sm:$0xff]
    %v47 = vld [vmem:[%s0 + $0xd0] sm:$0xff]
    %v48 = vld [vmem:[%s0 + $0xd8] sm:$0xff]
    %v49 = vld [vmem:[%s0 + $0xe0] sm:$0xff]
    %v50 = vld [vmem:[%s0 + $0xe8] sm:$0xff]
    %v51 = vld [vmem:[%s0 + $0xf0] sm:$0xff]
    %v52 = vld [vmem:[%s0 + $0xf8] sm:$0xff]
    %v53 = vld [vmem:[%s0 + $0x100] sm:$0xff]
    %v54 = vld [vmem:[%s0 + $0x108] sm:$0xff]
    %v55 = vld [vmem:[%s0 + $0x110] sm:$0xff]
    %v56 = vld [vmem:[%s0 + $0x118] sm:$0xff]
    %v57 = vld [vmem:[%s0 + $0x120] sm:$0xff]
    %v58 = vld [vmem:[%s0 + $0x128] sm:$0xff]
    %v59 = vld [vmem:[%s0 + $0x130] sm:$0xff]
    %v60 = vld [vmem:[%s0 + $0x138] sm:$0xff]
    %v61 = vld [vmem:[%s0 + $0x140] sm:$0xff]
    %v62 = vld [vmem:[%s0 + $0x148] sm:$0xff]
    %v63 = vld [vmem:[%s0 + $0x150] sm:$0xff]
    %v64 = vld [vmem:[%s0 + $0x158] sm:$0xff]
    %v65 = vld [vmem:[%s0 + $0x160] sm:$0xff]
    %v66 = vld [vmem:[%s0 + $0x168] sm:$0xff]
    %v67 = vld [vmem:[%s0 + $0x170] sm:$0xff]
    %v68 = vld [vmem:[%s0 + $0x178] sm:$0xff]
    %v69 = vld [vmem:[%s0 + $0x180] sm:$0xff]
    %v70 = vld [vmem:[%s0 + $0x188] sm:$0xff]
    %v71 = vld [vmem:[%s0 + $0x190] sm:$0xff]
    %v72 = vld [vmem:[%s0 + $0x198] sm:$0xff]
    %v73 = vld [vmem:[%s0 + $0x1a0] sm:$0xff]
    %v74 = vld [vmem:[%s0 + $0x1a8] sm:$0xff]
    %v75 = vld [vmem:[%s0 + $0x1b0] sm:$0xff]
    %v76 = vld [vmem:[%s0 + $0x1b8] sm:$0xff]
    %v77 = vld [vmem:[%s0 + $0x1c0] sm:$0xff]
    %v78 = vld [vmem:[%s0 + $0x1c8] sm:$0xff]
    %v79 = vld [vmem:[%s0 + $0x1d0] sm:$0xff]
    %v80 = vld [vmem:[%s0 + $0x1d8] sm:$0xff]
    %v81 = vld [vmem:[%s0 + $0x1e0] sm:$0xff]
    %v82 = vld [vmem:[%s0 + $0x1e8] sm:$0xff]
    %v83 = vld [vmem:[%s0 + $0x1f0] sm:$0xff]
    %v84 = vld [vmem:[%s0 + $0x1f8] sm:$0xff]
    %v85 = vld [vmem:[%s1] sm:$0xff]
    %v86 = vld [vmem:[%s1 + $0x8] sm:$0xff]
    %v87 = vld [vmem:[%s1 + $0x10] sm:$0xff]
    %v88 = vld [vmem:[%s1 + $0x18] sm:$0xff]
    %v89 = vld [vmem:[%s1 + $0x20] sm:$0xff]
    %v90 = vld [vmem:[%s1 + $0x28] sm:$0xff]
    %v91 = vld [vmem:[%s1 + $0x30] sm:$0xff]
    %v92 = vld [vmem:[%s1 + $0x38] sm:$0xff]
    %v93 = vld [vmem:[%s1 + $0x40] sm:$0xff]
    %v94 = vld [vmem:[%s1 + $0x48] sm:$0xff]
    %v95 = vld [vmem:[%s1 + $0x50] sm:$0xff]
    %v96 = vld [vmem:[%s1 + $0x58] sm:$0xff]
    %v97 = vld [vmem:[%s1 + $0x60] sm:$0xff]
    %v98 = vld [vmem:[%s1 + $0x68] sm:$0xff]
    %v99 = vld [vmem:[%s1 + $0x70] sm:$0xff]
    %v100 = vld [vmem:[%s1 + $0x78] sm:$0xff]
    %v101 = vld [vmem:[%s2] sm:$0x1]
    %v103 = vperm.slane %v101, 0
    %105 = vmatpush.msra.mxu0 %v100
    %106 = vmatpush.msra.mxu0 %v99
    %107 = vmatpush.msra.mxu0 %v98
    %108 = vmatpush.msra.mxu0 %v97
    %109 = vmatpush.msra.mxu0 %v96
    %110 = vmatpush.msra.mxu0 %v95
    %111 = vmatpush.msra.mxu0 %v94
    %112 = vmatpush.msra.mxu0 %v93
    %113 = vmatpush.msra.mxu0 %v92
    %114 = vmatpush.msra.mxu0 %v91
    %115 = vmatpush.msra.mxu0 %v90
    %116 = vmatpush.msra.mxu0 %v89
    %117 = vmatpush.msra.mxu0 %v88
    %118 = vmatpush.msra.mxu0 %v87
    %119 = vmatpush.msra.mxu0 %v86
    %120 = vmatpush.msra.mxu0 %v85
    %121 = vmatmul.f32.gmra.mxu0 %v21
    %v122 = vpop.f32.mrf.mxu0
    %v123 = vadd.f32 %v103, %v122
    %124 = vmatmul.f32.gmra.mxu0 %v22
    %v125 = vpop.f32.mrf.mxu0
    %v126 = vadd.f32 %v103, %v125
    %127 = vmatmul.f32.gmra.mxu0 %v23
    %v128 = vpop.f32.mrf.mxu0
    %v129 = vadd.f32 %v103, %v128
    %130 = vmatmul.f32.gmra.mxu0 %v24
    %v131 = vpop.f32.mrf.mxu0
    %v132 = vadd.f32 %v103, %v131
    %133 = vmatmul.f32.gmra.mxu0 %v25
    %v134 = vpop.f32.mrf.mxu0
    %v135 = vadd.f32 %v103, %v134
    %136 = vmatmul.f32.gmra.mxu0 %v26
    %v137 = vpop.f32.mrf.mxu0
    %v138 = vadd.f32 %v103, %v137
    %139 = vmatmul.f32.gmra.mxu0 %v27
    %v140 = vpop.f32.mrf.mxu0
    %v141 = vadd.f32 %v103, %v140
    %142 = vmatmul.f32.gmra.mxu0 %v28
    %v143 = vpop.f32.mrf.mxu0
    %v144 = vadd.f32 %v103, %v143
    %145 = vmatmul.f32.gmra.mxu0 %v29
    %v146 = vpop.f32.mrf.mxu0
    %v147 = vadd.f32 %v103, %v146
    %148 = vmatmul.f32.gmra.mxu0 %v30
    %v149 = vpop.f32.mrf.mxu0
    %v150 = vadd.f32 %v103, %v149
    %151 = vmatmul.f32.gmra.mxu0 %v31
    %v152 = vpop.f32.mrf.mxu0
    %v153 = vadd.f32 %v103, %v152
    %154 = vmatmul.f32.gmra.mxu0 %v32
    %v155 = vpop.f32.mrf.mxu0
    %v156 = vadd.f32 %v103, %v155
    %157 = vmatmul.f32.gmra.mxu0 %v33
    %v158 = vpop.f32.mrf.mxu0
    %v159 = vadd.f32 %v103, %v158
    %160 = vmatmul.f32.gmra.mxu0 %v34
    %v161 = vpop.f32.mrf.mxu0
    %v162 = vadd.f32 %v103, %v161
    %163 = vmatmul.f32.gmra.mxu0 %v35
    %v164 = vpop.f32.mrf.mxu0
    %v165 = vadd.f32 %v103, %v164
    %166 = vmatmul.f32.gmra.mxu0 %v36
    %v167 = vpop.f32.mrf.mxu0
    %v168 = vadd.f32 %v103, %v167
    %169 = vmatmul.f32.gmra.mxu0 %v37
    %v170 = vpop.f32.mrf.mxu0
    %v171 = vadd.f32 %v103, %v170
    %172 = vmatmul.f32.gmra.mxu0 %v38
    %v173 = vpop.f32.mrf.mxu0
    %v174 = vadd.f32 %v103, %v173
    %175 = vmatmul.f32.gmra.mxu0 %v39
    %v176 = vpop.f32.mrf.mxu0
    %v177 = vadd.f32 %v103, %v176
    %178 = vmatmul.f32.gmra.mxu0 %v40
    %v179 = vpop.f32.mrf.mxu0
    %v180 = vadd.f32 %v103, %v179
    %181 = vmatmul.f32.gmra.mxu0 %v41
    %v182 = vpop.f32.mrf.mxu0
    %v183 = vadd.f32 %v103, %v182
    %184 = vmatmul.f32.gmra.mxu0 %v42
    %v185 = vpop.f32.mrf.mxu0
    %v186 = vadd.f32 %v103, %v185
    %187 = vmatmul.f32.gmra.mxu0 %v43
    %v188 = vpop.f32.mrf.mxu0
    %v189 = vadd.f32 %v103, %v188
    %190 = vmatmul.f32.gmra.mxu0 %v44
    %v191 = vpop.f32.mrf.mxu0
    %v192 = vadd.f32 %v103, %v191
    %193 = vmatmul.f32.gmra.mxu0 %v45
    %v194 = vpop.f32.mrf.mxu0
    %v195 = vadd.f32 %v103, %v194
    %196 = vmatmul.f32.gmra.mxu0 %v46
    %v197 = vpop.f32.mrf.mxu0
    %v198 = vadd.f32 %v103, %v197
    %199 = vmatmul.f32.gmra.mxu0 %v47
    %v200 = vpop.f32.mrf.mxu0
    %v201 = vadd.f32 %v103, %v200
    %202 = vmatmul.f32.gmra.mxu0 %v48
    %v203 = vpop.f32.mrf.mxu0
    %v204 = vadd.f32 %v103, %v203
    %205 = vmatmul.f32.gmra.mxu0 %v49
    %v206 = vpop.f32.mrf.mxu0
    %v207 = vadd.f32 %v103, %v206
    %208 = vmatmul.f32.gmra.mxu0 %v50
    %v209 = vpop.f32.mrf.mxu0
    %v210 = vadd.f32 %v103, %v209
    %211 = vmatmul.f32.gmra.mxu0 %v51
    %v212 = vpop.f32.mrf.mxu0
    %v213 = vadd.f32 %v103, %v212
    %214 = vmatmul.f32.gmra.mxu0 %v52
    %v215 = vpop.f32.mrf.mxu0
    %v216 = vadd.f32 %v103, %v215
    %217 = vmatmul.f32.gmra.mxu0 %v53
    %v218 = vpop.f32.mrf.mxu0
    %v219 = vadd.f32 %v103, %v218
    %220 = vmatmul.f32.gmra.mxu0 %v54
    %v221 = vpop.f32.mrf.mxu0
    %v222 = vadd.f32 %v103, %v221
    %223 = vmatmul.f32.gmra.mxu0 %v55
    %v224 = vpop.f32.mrf.mxu0
    %v225 = vadd.f32 %v103, %v224
    %226 = vmatmul.f32.gmra.mxu0 %v56
    %v227 = vpop.f32.mrf.mxu0
    %v228 = vadd.f32 %v103, %v227
    %229 = vmatmul.f32.gmra.mxu0 %v57
    %v230 = vpop.f32.mrf.mxu0
    %v231 = vadd.f32 %v103, %v230
    %232 = vmatmul.f32.gmra.mxu0 %v58
    %v233 = vpop.f32.mrf.mxu0
    %v234 = vadd.f32 %v103, %v233
    %235 = vmatmul.f32.gmra.mxu0 %v59
    %v236 = vpop.f32.mrf.mxu0
    %v237 = vadd.f32 %v103, %v236
    %238 = vmatmul.f32.gmra.mxu0 %v60
    %v239 = vpop.f32.mrf.mxu0
    %v240 = vadd.f32 %v103, %v239
    %241 = vmatmul.f32.gmra.mxu0 %v61
    %v242 = vpop.f32.mrf.mxu0
    %v243 = vadd.f32 %v103, %v242
    %244 = vmatmul.f32.gmra.mxu0 %v62
    %v245 = vpop.f32.mrf.mxu0
    %v246 = vadd.f32 %v103, %v245
    %247 = vmatmul.f32.gmra.mxu0 %v63
    %v248 = vpop.f32.mrf.mxu0
    %v249 = vadd.f32 %v103, %v248
    %250 = vmatmul.f32.gmra.mxu0 %v64
    %v251 = vpop.f32.mrf.mxu0
    %v252 = vadd.f32 %v103, %v251
    %253 = vmatmul.f32.gmra.mxu0 %v65
    %v254 = vpop.f32.mrf.mxu0
    %v255 = vadd.f32 %v103, %v254
    %256 = vmatmul.f32.gmra.mxu0 %v66
    %v257 = vpop.f32.mrf.mxu0
    %v258 = vadd.f32 %v103, %v257
    %259 = vmatmul.f32.gmra.mxu0 %v67
    %v260 = vpop.f32.mrf.mxu0
    %v261 = vadd.f32 %v103, %v260
    %262 = vmatmul.f32.gmra.mxu0 %v68
    %v263 = vpop.f32.mrf.mxu0
    %v264 = vadd.f32 %v103, %v263
    %265 = vmatmul.f32.gmra.mxu0 %v69
    %v266 = vpop.f32.mrf.mxu0
    %v267 = vadd.f32 %v103, %v266
    %268 = vmatmul.f32.gmra.mxu0 %v70
    %v269 = vpop.f32.mrf.mxu0
    %v270 = vadd.f32 %v103, %v269
    %271 = vmatmul.f32.gmra.mxu0 %v71
    %v272 = vpop.f32.mrf.mxu0
    %v273 = vadd.f32 %v103, %v272
    %274 = vmatmul.f32.gmra.mxu0 %v72
    %v275 = vpop.f32.mrf.mxu0
    %v276 = vadd.f32 %v103, %v275
    %277 = vmatmul.f32.gmra.mxu0 %v73
    %v278 = vpop.f32.mrf.mxu0
    %v279 = vadd.f32 %v103, %v278
    %280 = vmatmul.f32.gmra.mxu0 %v74
    %v281 = vpop.f32.mrf.mxu0
    %v282 = vadd.f32 %v103, %v281
    %283 = vmatmul.f32.gmra.mxu0 %v75
    %v284 = vpop.f32.mrf.mxu0
    %v285 = vadd.f32 %v103, %v284
    %286 = vmatmul.f32.gmra.mxu0 %v76
    %v287 = vpop.f32.mrf.mxu0
    %v288 = vadd.f32 %v103, %v287
    %289 = vmatmul.f32.gmra.mxu0 %v77
    %v290 = vpop.f32.mrf.mxu0
    %v291 = vadd.f32 %v103, %v290
    %292 = vmatmul.f32.gmra.mxu0 %v78
    %v293 = vpop.f32.mrf.mxu0
    %v294 = vadd.f32 %v103, %v293
    %295 = vmatmul.f32.gmra.mxu0 %v79
    %v296 = vpop.f32.mrf.mxu0
    %v297 = vadd.f32 %v103, %v296
    %298 = vmatmul.f32.gmra.mxu0 %v80
    %v299 = vpop.f32.mrf.mxu0
    %v300 = vadd.f32 %v103, %v299
    %301 = vmatmul.f32.gmra.mxu0 %v81
    %v302 = vpop.f32.mrf.mxu0
    %v303 = vadd.f32 %v103, %v302
    %304 = vmatmul.f32.gmra.mxu0 %v82
    %v305 = vpop.f32.mrf.mxu0
    %v306 = vadd.f32 %v103, %v305
    %307 = vmatmul.f32.gmra.mxu0 %v83
    %v308 = vpop.f32.mrf.mxu0
    %v309 = vadd.f32 %v103, %v308
    %310 = vmatmul.f32.gmra.mxu0 %v84
    %v311 = vpop.f32.mrf.mxu0
    %v312 = vadd.f32 %v103, %v311
    %313 = vdwg.mxu0
    %v314 = vmax.f32 %v123, 0.0
    %v315 = vmax.f32 %v126, 0.0
    %v316 = vmax.f32 %v129, 0.0
    %v317 = vmax.f32 %v132, 0.0
    %v318 = vmax.f32 %v135, 0.0
    %v319 = vmax.f32 %v138, 0.0
    %v320 = vmax.f32 %v141, 0.0
    %v321 = vmax.f32 %v144, 0.0
    %v322 = vmax.f32 %v147, 0.0
    %v323 = vmax.f32 %v150, 0.0
    %v324 = vmax.f32 %v153, 0.0
    %v325 = vmax.f32 %v156, 0.0
    %v326 = vmax.f32 %v159, 0.0
    %v327 = vmax.f32 %v162, 0.0
    %v328 = vmax.f32 %v165, 0.0
    %v329 = vmax.f32 %v168, 0.0
    %v330 = vmax.f32 %v171, 0.0
    %v331 = vmax.f32 %v174, 0.0
    %v332 = vmax.f32 %v177, 0.0
    %v333 = vmax.f32 %v180, 0.0
    %v334 = vmax.f32 %v183, 0.0
    %v335 = vmax.f32 %v186, 0.0
    %v336 = vmax.f32 %v189, 0.0
    %v337 = vmax.f32 %v192, 0.0
    %v338 = vmax.f32 %v195, 0.0
    %v339 = vmax.f32 %v198, 0.0
    %v340 = vmax.f32 %v201, 0.0
    %v341 = vmax.f32 %v204, 0.0
    %v342 = vmax.f32 %v207, 0.0
    %v343 = vmax.f32 %v210, 0.0
    %v344 = vmax.f32 %v213, 0.0
    %v345 = vmax.f32 %v216, 0.0
    %v346 = vmax.f32 %v219, 0.0
    %v347 = vmax.f32 %v222, 0.0
    %v348 = vmax.f32 %v225, 0.0
    %v349 = vmax.f32 %v228, 0.0
    %v350 = vmax.f32 %v231, 0.0
    %v351 = vmax.f32 %v234, 0.0
    %v352 = vmax.f32 %v237, 0.0
    %v353 = vmax.f32 %v240, 0.0
    %v354 = vmax.f32 %v243, 0.0
    %v355 = vmax.f32 %v246, 0.0
    %v356 = vmax.f32 %v249, 0.0
    %v357 = vmax.f32 %v252, 0.0
    %v358 = vmax.f32 %v255, 0.0
    %v359 = vmax.f32 %v258, 0.0
    %v360 = vmax.f32 %v261, 0.0
    %v361 = vmax.f32 %v264, 0.0
    %v362 = vmax.f32 %v267, 0.0
    %v363 = vmax.f32 %v270, 0.0
    %v364 = vmax.f32 %v273, 0.0
    %v365 = vmax.f32 %v276, 0.0
    %v366 = vmax.f32 %v279, 0.0
    %v367 = vmax.f32 %v282, 0.0
    %v368 = vmax.f32 %v285, 0.0
    %v369 = vmax.f32 %v288, 0.0
    %v370 = vmax.f32 %v291, 0.0
    %v371 = vmax.f32 %v294, 0.0
    %v372 = vmax.f32 %v297, 0.0
    %v373 = vmax.f32 %v300, 0.0
    %v374 = vmax.f32 %v303, 0.0
    %v375 = vmax.f32 %v306, 0.0
    %v376 = vmax.f32 %v309, 0.0
    %v377 = vmax.f32 %v312, 0.0
    %v378 = vld [vmem:[%s3] sm:$0xff]
    %v379 = vld [vmem:[%s3 + $0x8] sm:$0xff]
    %v380 = vld [vmem:[%s3 + $0x10] sm:$0xff]
    %v381 = vld [vmem:[%s3 + $0x18] sm:$0xff]
    %v382 = vld [vmem:[%s3 + $0x20] sm:$0xff]
    %v383 = vld [vmem:[%s3 + $0x28] sm:$0xff]
    %v384 = vld [vmem:[%s3 + $0x30] sm:$0xff]
    %v385 = vld [vmem:[%s3 + $0x38] sm:$0xff]
    %v386 = vld [vmem:[%s3 + $0x40] sm:$0xff]
    %v387 = vld [vmem:[%s3 + $0x48] sm:$0xff]
    %v388 = vld [vmem:[%s3 + $0x50] sm:$0xff]
    %v389 = vld [vmem:[%s3 + $0x58] sm:$0xff]
    %v390 = vld [vmem:[%s3 + $0x60] sm:$0xff]
    %v391 = vld [vmem:[%s3 + $0x68] sm:$0xff]
    %v392 = vld [vmem:[%s3 + $0x70] sm:$0xff]
    %v393 = vld [vmem:[%s3 + $0x78] sm:$0xff]
    %v394 = vld [vmem:[%s4] sm:$0x1]
    %v396 = vperm.slane %v394, 0
    %398 = vmatpush.msra.mxu0 %v393
    %399 = vmatpush.msra.mxu0 %v392
    %400 = vmatpush.msra.mxu0 %v391
    %401 = vmatpush.msra.mxu0 %v390
    %402 = vmatpush.msra.mxu0 %v389
    %403 = vmatpush.msra.mxu0 %v388
    %404 = vmatpush.msra.mxu0 %v387
    %405 = vmatpush.msra.mxu0 %v386
    %406 = vmatpush.msra.mxu0 %v385
    %407 = vmatpush.msra.mxu0 %v384
    %408 = vmatpush.msra.mxu0 %v383
    %409 = vmatpush.msra.mxu0 %v382
    %410 = vmatpush.msra.mxu0 %v381
    %411 = vmatpush.msra.mxu0 %v380
    %412 = vmatpush.msra.mxu0 %v379
    %413 = vmatpush.msra.mxu0 %v378
    %414 = vmatmul.f32.gmra.mxu0 %v314
    %v415 = vpop.f32.mrf.mxu0
    %v416 = vadd.f32 %v396, %v415
    %417 = vmatmul.f32.gmra.mxu0 %v315
    %v418 = vpop.f32.mrf.mxu0
    %v419 = vadd.f32 %v396, %v418
    %420 = vmatmul.f32.gmra.mxu0 %v316
    %v421 = vpop.f32.mrf.mxu0
    %v422 = vadd.f32 %v396, %v421
    %423 = vmatmul.f32.gmra.mxu0 %v317
    %v424 = vpop.f32.mrf.mxu0
    %v425 = vadd.f32 %v396, %v424
    %426 = vmatmul.f32.gmra.mxu0 %v318
    %v427 = vpop.f32.mrf.mxu0
    %v428 = vadd.f32 %v396, %v427
    %429 = vmatmul.f32.gmra.mxu0 %v319
    %v430 = vpop.f32.mrf.mxu0
    %v431 = vadd.f32 %v396, %v430
    %432 = vmatmul.f32.gmra.mxu0 %v320
    %v433 = vpop.f32.mrf.mxu0
    %v434 = vadd.f32 %v396, %v433
    %435 = vmatmul.f32.gmra.mxu0 %v321
    %v436 = vpop.f32.mrf.mxu0
    %v437 = vadd.f32 %v396, %v436
    %438 = vmatmul.f32.gmra.mxu0 %v322
    %v439 = vpop.f32.mrf.mxu0
    %v440 = vadd.f32 %v396, %v439
    %441 = vmatmul.f32.gmra.mxu0 %v323
    %v442 = vpop.f32.mrf.mxu0
    %v443 = vadd.f32 %v396, %v442
    %444 = vmatmul.f32.gmra.mxu0 %v324
    %v445 = vpop.f32.mrf.mxu0
    %v446 = vadd.f32 %v396, %v445
    %447 = vmatmul.f32.gmra.mxu0 %v325
    %v448 = vpop.f32.mrf.mxu0
    %v449 = vadd.f32 %v396, %v448
    %450 = vmatmul.f32.gmra.mxu0 %v326
    %v451 = vpop.f32.mrf.mxu0
    %v452 = vadd.f32 %v396, %v451
    %453 = vmatmul.f32.gmra.mxu0 %v327
    %v454 = vpop.f32.mrf.mxu0
    %v455 = vadd.f32 %v396, %v454
    %456 = vmatmul.f32.gmra.mxu0 %v328
    %v457 = vpop.f32.mrf.mxu0
    %v458 = vadd.f32 %v396, %v457
    %459 = vmatmul.f32.gmra.mxu0 %v329
    %v460 = vpop.f32.mrf.mxu0
    %v461 = vadd.f32 %v396, %v460
    %462 = vmatmul.f32.gmra.mxu0 %v330
    %v463 = vpop.f32.mrf.mxu0
    %v464 = vadd.f32 %v396, %v463
    %465 = vmatmul.f32.gmra.mxu0 %v331
    %v466 = vpop.f32.mrf.mxu0
    %v467 = vadd.f32 %v396, %v466
    %468 = vmatmul.f32.gmra.mxu0 %v332
    %v469 = vpop.f32.mrf.mxu0
    %v470 = vadd.f32 %v396, %v469
    %471 = vmatmul.f32.gmra.mxu0 %v333
    %v472 = vpop.f32.mrf.mxu0
    %v473 = vadd.f32 %v396, %v472
    %474 = vmatmul.f32.gmra.mxu0 %v334
    %v475 = vpop.f32.mrf.mxu0
    %v476 = vadd.f32 %v396, %v475
    %477 = vmatmul.f32.gmra.mxu0 %v335
    %v478 = vpop.f32.mrf.mxu0
    %v479 = vadd.f32 %v396, %v478
    %480 = vmatmul.f32.gmra.mxu0 %v336
    %v481 = vpop.f32.mrf.mxu0
    %v482 = vadd.f32 %v396, %v481
    %483 = vmatmul.f32.gmra.mxu0 %v337
    %v484 = vpop.f32.mrf.mxu0
    %v485 = vadd.f32 %v396, %v484
    %486 = vmatmul.f32.gmra.mxu0 %v338
    %v487 = vpop.f32.mrf.mxu0
    %v488 = vadd.f32 %v396, %v487
    %489 = vmatmul.f32.gmra.mxu0 %v339
    %v490 = vpop.f32.mrf.mxu0
    %v491 = vadd.f32 %v396, %v490
    %492 = vmatmul.f32.gmra.mxu0 %v340
    %v493 = vpop.f32.mrf.mxu0
    %v494 = vadd.f32 %v396, %v493
    %495 = vmatmul.f32.gmra.mxu0 %v341
    %v496 = vpop.f32.mrf.mxu0
    %v497 = vadd.f32 %v396, %v496
    %498 = vmatmul.f32.gmra.mxu0 %v342
    %v499 = vpop.f32.mrf.mxu0
    %v500 = vadd.f32 %v396, %v499
    %501 = vmatmul.f32.gmra.mxu0 %v343
    %v502 = vpop.f32.mrf.mxu0
    %v503 = vadd.f32 %v396, %v502
    %504 = vmatmul.f32.gmra.mxu0 %v344
    %v505 = vpop.f32.mrf.mxu0
    %v506 = vadd.f32 %v396, %v505
    %507 = vmatmul.f32.gmra.mxu0 %v345
    %v508 = vpop.f32.mrf.mxu0
    %v509 = vadd.f32 %v396, %v508
    %510 = vmatmul.f32.gmra.mxu0 %v346
    %v511 = vpop.f32.mrf.mxu0
    %v512 = vadd.f32 %v396, %v511
    %513 = vmatmul.f32.gmra.mxu0 %v347
    %v514 = vpop.f32.mrf.mxu0
    %v515 = vadd.f32 %v396, %v514
    %516 = vmatmul.f32.gmra.mxu0 %v348
    %v517 = vpop.f32.mrf.mxu0
    %v518 = vadd.f32 %v396, %v517
    %519 = vmatmul.f32.gmra.mxu0 %v349
    %v520 = vpop.f32.mrf.mxu0
    %v521 = vadd.f32 %v396, %v520
    %522 = vmatmul.f32.gmra.mxu0 %v350
    %v523 = vpop.f32.mrf.mxu0
    %v524 = vadd.f32 %v396, %v523
    %525 = vmatmul.f32.gmra.mxu0 %v351
    %v526 = vpop.f32.mrf.mxu0
    %v527 = vadd.f32 %v396, %v526
    %528 = vmatmul.f32.gmra.mxu0 %v352
    %v529 = vpop.f32.mrf.mxu0
    %v530 = vadd.f32 %v396, %v529
    %531 = vmatmul.f32.gmra.mxu0 %v353
    %v532 = vpop.f32.mrf.mxu0
    %v533 = vadd.f32 %v396, %v532
    %534 = vmatmul.f32.gmra.mxu0 %v354
    %v535 = vpop.f32.mrf.mxu0
    %v536 = vadd.f32 %v396, %v535
    %537 = vmatmul.f32.gmra.mxu0 %v355
    %v538 = vpop.f32.mrf.mxu0
    %v539 = vadd.f32 %v396, %v538
    %540 = vmatmul.f32.gmra.mxu0 %v356
    %v541 = vpop.f32.mrf.mxu0
    %v542 = vadd.f32 %v396, %v541
    %543 = vmatmul.f32.gmra.mxu0 %v357
    %v544 = vpop.f32.mrf.mxu0
    %v545 = vadd.f32 %v396, %v544
    %546 = vmatmul.f32.gmra.mxu0 %v358
    %v547 = vpop.f32.mrf.mxu0
    %v548 = vadd.f32 %v396, %v547
    %549 = vmatmul.f32.gmra.mxu0 %v359
    %v550 = vpop.f32.mrf.mxu0
    %v551 = vadd.f32 %v396, %v550
    %552 = vmatmul.f32.gmra.mxu0 %v360
    %v553 = vpop.f32.mrf.mxu0
    %v554 = vadd.f32 %v396, %v553
    %555 = vmatmul.f32.gmra.mxu0 %v361
    %v556 = vpop.f32.mrf.mxu0
    %v557 = vadd.f32 %v396, %v556
    %558 = vmatmul.f32.gmra.mxu0 %v362
    %v559 = vpop.f32.mrf.mxu0
    %v560 = vadd.f32 %v396, %v559
    %561 = vmatmul.f32.gmra.mxu0 %v363
    %v562 = vpop.f32.mrf.mxu0
    %v563 = vadd.f32 %v396, %v562
    %564 = vmatmul.f32.gmra.mxu0 %v364
    %v565 = vpop.f32.mrf.mxu0
    %v566 = vadd.f32 %v396, %v565
    %567 = vmatmul.f32.gmra.mxu0 %v365
    %v568 = vpop.f32.mrf.mxu0
    %v569 = vadd.f32 %v396, %v568
    %570 = vmatmul.f32.gmra.mxu0 %v366
    %v571 = vpop.f32.mrf.mxu0
    %v572 = vadd.f32 %v396, %v571
    %573 = vmatmul.f32.gmra.mxu0 %v367
    %v574 = vpop.f32.mrf.mxu0
    %v575 = vadd.f32 %v396, %v574
    %576 = vmatmul.f32.gmra.mxu0 %v368
    %v577 = vpop.f32.mrf.mxu0
    %v578 = vadd.f32 %v396, %v577
    %579 = vmatmul.f32.gmra.mxu0 %v369
    %v580 = vpop.f32.mrf.mxu0
    %v581 = vadd.f32 %v396, %v580
    %582 = vmatmul.f32.gmra.mxu0 %v370
    %v583 = vpop.f32.mrf.mxu0
    %v584 = vadd.f32 %v396, %v583
    %585 = vmatmul.f32.gmra.mxu0 %v371
    %v586 = vpop.f32.mrf.mxu0
    %v587 = vadd.f32 %v396, %v586
    %588 = vmatmul.f32.gmra.mxu0 %v372
    %v589 = vpop.f32.mrf.mxu0
    %v590 = vadd.f32 %v396, %v589
    %591 = vmatmul.f32.gmra.mxu0 %v373
    %v592 = vpop.f32.mrf.mxu0
    %v593 = vadd.f32 %v396, %v592
    %594 = vmatmul.f32.gmra.mxu0 %v374
    %v595 = vpop.f32.mrf.mxu0
    %v596 = vadd.f32 %v396, %v595
    %597 = vmatmul.f32.gmra.mxu0 %v375
    %v598 = vpop.f32.mrf.mxu0
    %v599 = vadd.f32 %v396, %v598
    %600 = vmatmul.f32.gmra.mxu0 %v376
    %v601 = vpop.f32.mrf.mxu0
    %v602 = vadd.f32 %v396, %v601
    %603 = vmatmul.f32.gmra.mxu0 %v377
    %v604 = vpop.f32.mrf.mxu0
    %v605 = vadd.f32 %v396, %v604
    %606 = vdwg.mxu0
    %607 = vst [vmem:[#allocation2] sm:$0xff] %v416
    %608 = vst [vmem:[#allocation2 + $0x8] sm:$0xff] %v419
    %609 = vst [vmem:[#allocation2 + $0x10] sm:$0xff] %v422
    %610 = vst [vmem:[#allocation2 + $0x18] sm:$0xff] %v425
    %611 = vst [vmem:[#allocation2 + $0x20] sm:$0xff] %v428
    %612 = vst [vmem:[#allocation2 + $0x28] sm:$0xff] %v431
    %613 = vst [vmem:[#allocation2 + $0x30] sm:$0xff] %v434
    %614 = vst [vmem:[#allocation2 + $0x38] sm:$0xff] %v437
    %615 = vst [vmem:[#allocation2 + $0x40] sm:$0xff] %v440
    %616 = vst [vmem:[#allocation2 + $0x48] sm:$0xff] %v443
    %617 = vst [vmem:[#allocation2 + $0x50] sm:$0xff] %v446
    %618 = vst [vmem:[#allocation2 + $0x58] sm:$0xff] %v449
    %619 = vst [vmem:[#allocation2 + $0x60] sm:$0xff] %v452
    %620 = vst [vmem:[#allocation2 + $0x68] sm:$0xff] %v455
    %621 = vst [vmem:[#allocation2 + $0x70] sm:$0xff] %v458
    %622 = vst [vmem:[#allocation2 + $0x78] sm:$0xff] %v461
    %623 = vst [vmem:[#allocation2 + $0x80] sm:$0xff] %v464
    %624 = vst [vmem:[#allocation2 + $0x88] sm:$0xff] %v467
    %625 = vst [vmem:[#allocation2 + $0x90] sm:$0xff] %v470
    %626 = vst [vmem:[#allocation2 + $0x98] sm:$0xff] %v473
    %627 = vst [vmem:[#allocation2 + $0xa0] sm:$0xff] %v476
    %628 = vst [vmem:[#allocation2 + $0xa8] sm:$0xff] %v479
    %629 = vst [vmem:[#allocation2 + $0xb0] sm:$0xff] %v482
    %630 = vst [vmem:[#allocation2 + $0xb8] sm:$0xff] %v485
    %631 = vst [vmem:[#allocation2 + $0xc0] sm:$0xff] %v488
    %632 = vst [vmem:[#allocation2 + $0xc8] sm:$0xff] %v491
    %633 = vst [vmem:[#allocation2 + $0xd0] sm:$0xff] %v494
    %634 = vst [vmem:[#allocation2 + $0xd8] sm:$0xff] %v497
    %635 = vst [vmem:[#allocation2 + $0xe0] sm:$0xff] %v500
    %636 = vst [vmem:[#allocation2 + $0xe8] sm:$0xff] %v503
    %637 = vst [vmem:[#allocation2 + $0xf0] sm:$0xff] %v506
    %638 = vst [vmem:[#allocation2 + $0xf8] sm:$0xff] %v509
    %639 = vst [vmem:[#allocation2 + $0x100] sm:$0xff] %v512
    %640 = vst [vmem:[#allocation2 + $0x108] sm:$0xff] %v515
    %641 = vst [vmem:[#allocation2 + $0x110] sm:$0xff] %v518
    %642 = vst [vmem:[#allocation2 + $0x118] sm:$0xff] %v521
    %643 = vst [vmem:[#allocation2 + $0x120] sm:$0xff] %v524
    %644 = vst [vmem:[#allocation2 + $0x128] sm:$0xff] %v527
    %645 = vst [vmem:[#allocation2 + $0x130] sm:$0xff] %v530
    %646 = vst [vmem:[#allocation2 + $0x138] sm:$0xff] %v533
    %647 = vst [vmem:[#allocation2 + $0x140] sm:$0xff] %v536
    %648 = vst [vmem:[#allocation2 + $0x148] sm:$0xff] %v539
    %649 = vst [vmem:[#allocation2 + $0x150] sm:$0xff] %v542
    %650 = vst [vmem:[#allocation2 + $0x158] sm:$0xff] %v545
    %651 = vst [vmem:[#allocation2 + $0x160] sm:$0xff] %v548
    %652 = vst [vmem:[#allocation2 + $0x168] sm:$0xff] %v551
    %653 = vst [vmem:[#allocation2 + $0x170] sm:$0xff] %v554
    %654 = vst [vmem:[#allocation2 + $0x178] sm:$0xff] %v557
    %655 = vst [vmem:[#allocation2 + $0x180] sm:$0xff] %v560
    %656 = vst [vmem:[#allocation2 + $0x188] sm:$0xff] %v563
    %657 = vst [vmem:[#allocation2 + $0x190] sm:$0xff] %v566
    %658 = vst [vmem:[#allocation2 + $0x198] sm:$0xff] %v569
    %659 = vst [vmem:[#allocation2 + $0x1a0] sm:$0xff] %v572
    %660 = vst [vmem:[#allocation2 + $0x1a8] sm:$0xff] %v575
    %661 = vst [vmem:[#allocation2 + $0x1b0] sm:$0xff] %v578
    %662 = vst [vmem:[#allocation2 + $0x1b8] sm:$0xff] %v581
    %663 = vst [vmem:[#allocation2 + $0x1c0] sm:$0xff] %v584
    %664 = vst [vmem:[#allocation2 + $0x1c8] sm:$0xff] %v587
    %665 = vst [vmem:[#allocation2 + $0x1d0] sm:$0xff] %v590
    %666 = vst [vmem:[#allocation2 + $0x1d8] sm:$0xff] %v593
    %667 = vst [vmem:[#allocation2 + $0x1e0] sm:$0xff] %v596
    %668 = vst [vmem:[#allocation2 + $0x1e8] sm:$0xff] %v599
    %669 = vst [vmem:[#allocation2 + $0x1f0] sm:$0xff] %v602
    %670 = vst [vmem:[#allocation2 + $0x1f8] sm:$0xff] %v605
    // Predicated region
    $region22: #{graph_encoder_forward.9} parent=1 // pred_check
      _
    $region23: #{graph_encoder_forward.9} parent=1 // pred_check_branch
      %672 = sbr.rel (0) target = $region25
    $region24: #{graph_encoder_forward.9} parent=1 // pred_region
      %674 = vsyncadd [#allocation3], 0
      %s675 = sshll.u32 [#allocation2], 4
      %s676 = int_to_ptr.vmem [resolvable:$true] %s675
      %s677 = sshll.u32 %s5, 4
      %s678 = int_to_ptr.hbm [resolvable:$true] %s677
      %683 = dma.vmem_to_hbm [thread:$0]  %s676, 8192, %s678, [#allocation3], 128, 128, 8
    $region25: #{graph_encoder_forward.9} parent=1 // pred_fallthru
      _
    // Predicated region
    $region26: #{graph_encoder_forward.9} parent=1 // pred_check
      _
    $region27: #{graph_encoder_forward.9} parent=1 // pred_check_branch
      %685 = sbr.rel (0) target = $region29
    $region28: #{graph_encoder_forward.9} parent=1 // pred_region
      %687 = dma.done [#allocation3], 8192
    $region29: #{graph_encoder_forward.9} parent=1 // pred_fallthru
      _
    %688 = vsyncpa [#allocation3], 1

</llo_original>
